<compile_context>
chip_gen: v7x
topology: tpu7x:2x2x1
jax: 0.10.0
libtpu: 0.0.40
codegen_flags: <defaults>
</compile_context>

<pallas_src>
import functools
import numpy as np

import jax
import jax.numpy as jnp
from jax.experimental import pallas as pl
from jax.experimental.pallas import tpu as pltpu

LN_EPS = 1e-5            # PyTorch nn.LayerNorm default
NEG_INF = -1e30          # additive bias for masked / cross-batch keys
_INV_SQRT2 = 1.0 / np.sqrt(2.0)


# ---------------------------------------------------------------------------
# In-kernel helpers (f32 elementwise math)
# ---------------------------------------------------------------------------
def _layernorm(y, g, b):
    mean = jnp.mean(y, axis=-1, keepdims=True)
    c = y - mean
    var = jnp.mean(c * c, axis=-1, keepdims=True)
    return c * jax.lax.rsqrt(var + LN_EPS) * g + b


def _gelu_exact(y):
    # matches torch F.gelu(approximate='none'); if EUP-bound on v5e, switch
    # to the tanh approximation.
    return 0.5 * y * (1.0 + jax.lax.erf(y * _INV_SQRT2))


# ---------------------------------------------------------------------------
# Fused whole-model kernel: one grid step == `block_batch` batch elements
# ---------------------------------------------------------------------------
def _encoder_kernel(
    # per-step inputs
    feats_ref, keyb_ref,
    # embedding / positional / mask constants
    emb_w_ref, pe_ref, bid_row_ref, bid_col_ref,
    # stacked per-layer transformer weights (leading dim = layer)
    qkv_w_ref, qkv_b_ref, out_w_ref, out_b_ref,
    lin1_w_ref, lin1_b_ref, lin2_w_ref, lin2_b_ref,
    ln1_g_ref, ln1_b_ref, ln2_g_ref, ln2_b_ref,
    # output
    mu_ref,
    *, num_layers, nhead):
    f32, bf16 = jnp.float32, jnp.bfloat16
    M, D = pe_ref.shape
    Dh = D // nhead
    n_mu = mu_ref.shape[1]            # == block_batch; mu rows sit first in the slab

    # Additive attention bias: key must belong to the same batch element
    # (block-diagonal) AND not be a padded token.  Built once per grid step,
    # reused by every layer and head.
    kb = jnp.broadcast_to(keyb_ref[0], (M, M))                       # (M, M) f32
    bias = jnp.where(bid_row_ref[...] == bid_col_ref[...], kb, NEG_INF)

    # Fused [bbox | cat | muQuery | sigmaQuery | bias] embedding + positional
    # encoding: a single matmul builds the whole residual stream.
    h = (jnp.dot(feats_ref[0], emb_w_ref[...], preferred_element_type=f32)
         + pe_ref[...])                                              # (M, D) f32

    for l in range(num_layers):
        last = l == num_layers - 1
        nq = n_mu if last else M      # last layer: only the mu rows are emitted

        hb = h.astype(bf16)
        # k/v are needed for every row even in the last layer, so the QKV
        # projection always runs on the full slab.  The 1/sqrt(Dh) scale is
        # already folded into W_q / b_q host-side.
        qkv = (jnp.dot(hb, qkv_w_ref[l], preferred_element_type=f32)
               + qkv_b_ref[l])                                       # (M, 3D)
        q = qkv[:nq, 0:D]
        k = qkv[:, D:2 * D]
        v = qkv[:, 2 * D:3 * D]
        bias_q = bias[:nq, :]

        attn = jnp.zeros((nq, D), f32)
        for hh in range(nhead):
            sl = slice(hh * Dh, (hh + 1) * Dh)
            qh = q[:, sl].astype(bf16)
            kh = k[:, sl].astype(bf16)
            vh = v[:, sl].astype(bf16)
            s = jax.lax.dot_general(qh, kh, (((1,), (1,)), ((), ())),
                                    preferred_element_type=f32)      # (nq, M)
            s = s + bias_q
            m = jnp.max(s, axis=-1, keepdims=True)
            p = jnp.exp(s - m)
            p = p * pl.reciprocal(jnp.sum(p, axis=-1, keepdims=True), approx=True)
            o = jnp.dot(p.astype(bf16), vh, preferred_element_type=f32)   # (nq, Dh)
            # per-head slab of the output projection -> no head concat
            attn = attn + jnp.dot(o.astype(bf16), out_w_ref[l, hh],
                                  preferred_element_type=f32)        # (nq, D)
        attn = attn + out_b_ref[l]

        hq = h[:nq, :]
        hq = _layernorm(hq + attn, ln1_g_ref[l], ln1_b_ref[l])

        ff = (jnp.dot(hq.astype(bf16), lin1_w_ref[l], preferred_element_type=f32)
              + lin1_b_ref[l])
        ff = _gelu_exact(ff)
        ff = (jnp.dot(ff.astype(bf16), lin2_w_ref[l], preferred_element_type=f32)
              + lin2_b_ref[l])
        h = _layernorm(hq + ff, ln2_g_ref[l], ln2_b_ref[l])

    mu_ref[0] = h.astype(mu_ref.dtype)                               # (block_batch, D)


# ---------------------------------------------------------------------------
# BlockSpec helpers
# ---------------------------------------------------------------------------
def _const_spec(shape):
    """Whole array resident in VMEM; same block every grid step."""
    nd = len(shape)
    return pl.BlockSpec(tuple(shape), lambda g, nd=nd: (0,) * nd)


def _step_spec(block_shape):
    """Leading dim indexed by the grid step."""
    nd = len(block_shape)
    return pl.BlockSpec(tuple(block_shape), lambda g, nd=nd: (g,) + (0,) * (nd - 1))


def _pick_block_batch(batch, rows_per_item, target_rows=256):
    """Batch elements per grid step so each matmul sees ~target_rows rows."""
    bb = max(1, min(batch, target_rows // max(rows_per_item, 1)))
    if batch > 1:
        bb = min(bb, -(-batch // 2))       # >= 2 grid steps (both v7x TCs busy)
    for cand in range(bb, 0, -1):          # prefer an 8-sublane-aligned slab
        if (cand * rows_per_item) % 8 == 0:
            return cand
    return bb


# ---------------------------------------------------------------------------
# Parameters / positional encoding (deterministic, in-script)
# ---------------------------------------------------------------------------
def init_params(key, bbox_dim, d_model, dim_ff, num_layers):
    ki = iter(jax.random.split(key, 16))

    def nrm(shape, s=0.02):
        return jax.random.normal(next(ki), shape, jnp.float32) * s

    return {
        "muQuery": jax.random.normal(next(ki), (1, d_model), jnp.float32),
        "sigmaQuery": jax.random.normal(next(ki), (1, d_model), jnp.float32),
        "bbox_w": nrm((bbox_dim, d_model)), "bbox_b": nrm((d_model,)),
        "cats_w": nrm((d_model, d_model)), "cats_b": nrm((d_model,)),
        # stacked per-layer weights (leading dim = layer), (in, out) orientation
        "qkv_w": nrm((num_layers, d_model, 3 * d_model)),
        "qkv_b": nrm((num_layers, 3 * d_model)),
        "out_w": nrm((num_layers, d_model, d_model)),
        "out_b": nrm((num_layers, d_model)),
        "lin1_w": nrm((num_layers, d_model, dim_ff)),
        "lin1_b": nrm((num_layers, dim_ff)),
        "lin2_w": nrm((num_layers, dim_ff, d_model)),
        "lin2_b": nrm((num_layers, d_model)),
        "ln1_g": jnp.ones((num_layers, d_model), jnp.float32),
        "ln1_b": jnp.zeros((num_layers, d_model), jnp.float32),
        "ln2_g": jnp.ones((num_layers, d_model), jnp.float32),
        "ln2_b": jnp.zeros((num_layers, d_model), jnp.float32),
    }


def positional_encoding(t, d_model):
    position = np.arange(t, dtype=np.float32)[:, None]
    div_term = np.exp(np.arange(0, d_model, 2, dtype=np.float32)
                      * (-np.log(10000.0) / d_model))
    pe = np.zeros((t, d_model), np.float32)
    pe[:, 0::2] = np.sin(position * div_term)
    pe[:, 1::2] = np.cos(position * div_term)
    return jnp.asarray(pe)


# ---------------------------------------------------------------------------
# Forward pass (single fused pallas_call)
# ---------------------------------------------------------------------------
def encoder_transformer_forward(params, bbox_feats, cat_feats, masks, *,
                                nhead, block_batch=None):
    # bbox_feats: (B, S, bbox_dim); cat_feats: (B, S, D); masks: (B, S) bool (True = keep)
    B, S, bbox_dim = bbox_feats.shape
    D = params["muQuery"].shape[1]
    L = params["qkv_w"].shape[0]
    FF = params["lin1_w"].shape[2]
    T = S + 2
    Dh = D // nhead
    f32, bf16 = jnp.float32, jnp.bfloat16

    if block_batch is None:
        block_batch = _pick_block_batch(B, T)
    nblk = -(-B // block_batch)
    Bp = nblk * block_batch
    M = block_batch * T                     # rows per grid step

    # ---- pad batch to a multiple of block_batch (padded rows fully masked) --
    if Bp != B:
        pad = Bp - B
        bbox_feats = jnp.concatenate(
            [bbox_feats, jnp.zeros((pad, S, bbox_dim), bbox_feats.dtype)], 0)
        cat_feats = jnp.concatenate(
            [cat_feats, jnp.zeros((pad, S, D), cat_feats.dtype)], 0)
        masks = jnp.concatenate([masks, jnp.zeros((pad, S), bool)], 0)

    # ---- fused embedding input rows: [bbox | cat | is_mu | is_sigma | is_token]
    Cext = bbox_dim + D + 3
    feats = jnp.zeros((Bp, T, Cext), f32)
    feats = feats.at[:, 2:, :bbox_dim].set(bbox_feats.astype(f32))
    feats = feats.at[:, 2:, bbox_dim:bbox_dim + D].set(cat_feats.astype(f32))
    feats = feats.at[:, 0, bbox_dim + D].set(1.0)        # mu query row
    feats = feats.at[:, 1, bbox_dim + D + 1].set(1.0)    # sigma query row
    feats = feats.at[:, 2:, bbox_dim + D + 2].set(1.0)   # token rows get the linear bias
    # Rows inside a grid block are ordered (t, b): all mu rows first, then all
    # sigma rows, then tokens -> last-layer mu specialization is a plain slice.
    feats = (feats.reshape(nblk, block_batch, T, Cext)
                  .transpose(0, 2, 1, 3)
                  .reshape(nblk, M, Cext)).astype(bf16)

    # matching stacked embedding weight: one matmul builds xseq
    emb_w = jnp.concatenate([
        params["bbox_w"], params["cats_w"],
        params["muQuery"], params["sigmaQuery"],
        (params["bbox_b"] + params["cats_b"]).reshape(1, D),
    ], axis=0).astype(bf16)                               # (Cext, D)

    pe = positional_encoding(T, D)                        # (T, D)
    pe_rep = jnp.repeat(pe, block_batch, axis=0)          # (M, D): row t*bb+b -> pe[t]

    # key-padding bias per grid block, flattened in the same (t, b) row order
    maskseq = jnp.concatenate([jnp.ones((Bp, 2), bool), masks], axis=1)   # (Bp, T)
    keyb = jnp.where(maskseq, 0.0, NEG_INF).astype(f32)
    keyb = (keyb.reshape(nblk, block_batch, T)
                .transpose(0, 2, 1)
                .reshape(nblk, 1, M))

    # batch-element id of every row in a slab (for the block-diagonal mask)
    bid = jnp.asarray(np.tile(np.arange(block_batch, dtype=np.float32), T))
    bid_row = bid.reshape(M, 1)
    bid_col = bid.reshape(1, M)

    # ---- weights: bf16 MXU operands, q-scale folded, out_proj split per head
    scale = 1.0 / np.sqrt(Dh)
    qkv_w = params["qkv_w"].astype(f32).at[:, :, :D].multiply(scale).astype(bf16)
    qkv_b = params["qkv_b"].astype(f32).at[:, :D].multiply(scale)
    out_w = params["out_w"].reshape(L, nhead, Dh, D).astype(bf16)
    lin1_w = params["lin1_w"].astype(bf16)
    lin2_w = params["lin2_w"].astype(bf16)

    def r3(p):   # (L, d) -> (L, 1, d) f32
        return p.reshape(L, 1, -1).astype(f32)

    inputs = [
        feats, keyb,
        emb_w, pe_rep, bid_row, bid_col,
        qkv_w, r3(qkv_b), out_w, r3(params["out_b"]),
        lin1_w, r3(params["lin1_b"]), lin2_w, r3(params["lin2_b"]),
        r3(params["ln1_g"]), r3(params["ln1_b"]),
        r3(params["ln2_g"]), r3(params["ln2_b"]),
    ]
    in_specs = [
        _step_spec((1, M, Cext)), _step_spec((1, 1, M)),
        _const_spec((Cext, D)), _const_spec((M, D)),
        _const_spec((M, 1)), _const_spec((1, M)),
        _const_spec((L, D, 3 * D)), _const_spec((L, 1, 3 * D)),
        _const_spec((L, nhead, Dh, D)), _const_spec((L, 1, D)),
        _const_spec((L, D, FF)), _const_spec((L, 1, FF)),
        _const_spec((L, FF, D)), _const_spec((L, 1, D)),
        _const_spec((L, 1, D)), _const_spec((L, 1, D)),
        _const_spec((L, 1, D)), _const_spec((L, 1, D)),
    ]

    mu_blocks = pl.pallas_call(
        functools.partial(_encoder_kernel, num_layers=L, nhead=nhead),
        out_shape=jax.ShapeDtypeStruct((nblk, block_batch, D), f32),
        grid=(nblk,),
        in_specs=in_specs,
        out_specs=_step_spec((1, block_batch, D)),
        compiler_params=pltpu.CompilerParams(
            dimension_semantics=("parallel",),
            vmem_limit_bytes=32 * 1024 * 1024),
    )(*inputs)

    return {"mu": mu_blocks.reshape(Bp, D)[:B]}


# ---------------------------------------------------------------------------
# Pure-JAX f32 reference (mirrors the PyTorch module) for a tolerance check
# ---------------------------------------------------------------------------
def encoder_transformer_reference(params, bbox_feats, cat_feats, masks, *, nhead):
    B, S, _ = bbox_feats.shape
    D = params["muQuery"].shape[1]
    L = params["qkv_w"].shape[0]
    T = S + 2
    Dh = D // nhead
    pe = positional_encoding(T, D)

    x = (bbox_feats @ params["bbox_w"] + params["bbox_b"]
         + cat_feats @ params["cats_w"] + params["cats_b"])           # (B, S, D)
    h = jnp.concatenate([jnp.broadcast_to(params["muQuery"], (B, 1, D)),
                         jnp.broadcast_to(params["sigmaQuery"], (B, 1, D)),
                         x], axis=1) + pe[None]                       # (B, T, D)
    maskseq = jnp.concatenate([jnp.ones((B, 2), bool), masks], axis=1)
    bias = jnp.where(maskseq, 0.0, NEG_INF)[:, None, None, :]         # (B,1,1,T)
    scale = 1.0 / np.sqrt(Dh)

    for l in range(L):
        qkv = h @ params["qkv_w"][l] + params["qkv_b"][l]
        q, k, v = qkv[..., :D], qkv[..., D:2 * D], qkv[..., 2 * D:]

        def split(z):
            return z.reshape(B, T, nhead, Dh).transpose(0, 2, 1, 3)

        q, k, v = split(q) * scale, split(k), split(v)
        s = jnp.einsum("bhqd,bhkd->bhqk", q, k) + bias
        p = jax.nn.softmax(s, axis=-1)
        o = jnp.einsum("bhqk,bhkd->bhqd", p, v).transpose(0, 2, 1, 3).reshape(B, T, D)
        attn = o @ params["out_w"][l] + params["out_b"][l]
        h = _layernorm(h + attn, params["ln1_g"][l], params["ln1_b"][l])
        ff = _gelu_exact(h @ params["lin1_w"][l] + params["lin1_b"][l])
        ff = ff @ params["lin2_w"][l] + params["lin2_b"][l]
        h = _layernorm(h + ff, params["ln2_g"][l], params["ln2_b"][l])
    return h[:, 0, :]


# ---------------------------------------------------------------------------
if __name__ == "__main__":
    # small-but-consistent shapes: batch=8, seq=8, bbox_dim=4, latent_dim=128,
    # nhead=4 (head_dim=32), dim_feedforward=256, num_layers=2
    B, S = 8, 8
    BBOX_DIM, D, NHEAD, DIM_FF, NUM_LAYERS = 4, 128, 4, 256, 2

    key = jax.random.PRNGKey(0)
    k_params, k_bbox, k_cat = jax.random.split(key, 3)

    params = init_params(k_params, BBOX_DIM, D, DIM_FF, NUM_LAYERS)
    bbox_feats = jax.random.normal(k_bbox, (B, S, BBOX_DIM), jnp.float32)
    cat_feats = jax.random.normal(k_cat, (B, S, D), jnp.float32)
    masks = jnp.ones((B, S), bool).at[1, 6:].set(False).at[5, 3:].set(False)

    fwd = jax.jit(functools.partial(encoder_transformer_forward, nhead=NHEAD))
    out = fwd(params, bbox_feats, cat_feats, masks)
    mu = jax.block_until_ready(out["mu"])
    assert mu.shape == (B, D)
    assert bool(jnp.all(jnp.isfinite(mu)))

    # tolerance check vs. the pure-JAX f32 reference (bf16 MXU operands +
    # approx reciprocal give ~1e-2-level deviation; 0.2 is a generous bound)
    mu_ref = encoder_transformer_reference(params, bbox_feats, cat_feats, masks,
                                           nhead=NHEAD)
    err = float(jnp.max(jnp.abs(mu - mu_ref)))
    assert err < 0.2, f"kernel deviates from reference: max|diff|={err}"
    print("KERNEL_OK")
</pallas_src>

<mosaic_0001>
module attributes {stable_mosaic.version = 11 : i64} {
  func.func @_encoder_kernel(%arg0: i32, %arg1: memref<1x40x135xbf16, #tpu.memory_space<vmem>>, %arg2: memref<1x1x40xf32, #tpu.memory_space<vmem>>, %arg3: memref<135x128xbf16, #tpu.memory_space<vmem>>, %arg4: memref<40x128xf32, #tpu.memory_space<vmem>>, %arg5: memref<40x1xf32, #tpu.memory_space<vmem>>, %arg6: memref<1x40xf32, #tpu.memory_space<vmem>>, %arg7: memref<2x128x384xbf16, #tpu.memory_space<vmem>>, %arg8: memref<2x1x384xf32, #tpu.memory_space<vmem>>, %arg9: memref<2x4x32x128xbf16, #tpu.memory_space<vmem>>, %arg10: memref<2x1x128xf32, #tpu.memory_space<vmem>>, %arg11: memref<2x128x256xbf16, #tpu.memory_space<vmem>>, %arg12: memref<2x1x256xf32, #tpu.memory_space<vmem>>, %arg13: memref<2x256x128xbf16, #tpu.memory_space<vmem>>, %arg14: memref<2x1x128xf32, #tpu.memory_space<vmem>>, %arg15: memref<2x1x128xf32, #tpu.memory_space<vmem>>, %arg16: memref<2x1x128xf32, #tpu.memory_space<vmem>>, %arg17: memref<2x1x128xf32, #tpu.memory_space<vmem>>, %arg18: memref<2x1x128xf32, #tpu.memory_space<vmem>>, %arg19: memref<1x4x128xf32, #tpu.memory_space<vmem>>) attributes {dimension_semantics = [#tpu.dimension_semantics<parallel>], iteration_bounds = array<i64: 2>, scalar_prefetch = 0 : i64, scratch_operands = 0 : i64, tpu.core_type = #tpu.core_type<tc>, window_params = [{transform_indices = @transform_0, window_bounds = array<i64: 1, 40, 135>}, {transform_indices = @transform_1, window_bounds = array<i64: 1, 1, 40>}, {pipeline_mode = #tpu.pipeline_mode<synchronous>, transform_indices = @transform_2, window_bounds = array<i64: 135, 128>}, {pipeline_mode = #tpu.pipeline_mode<synchronous>, transform_indices = @transform_3, window_bounds = array<i64: 40, 128>}, {pipeline_mode = #tpu.pipeline_mode<synchronous>, transform_indices = @transform_4, window_bounds = array<i64: 40, 1>}, {pipeline_mode = #tpu.pipeline_mode<synchronous>, transform_indices = @transform_5, window_bounds = array<i64: 1, 40>}, {pipeline_mode = #tpu.pipeline_mode<synchronous>, transform_indices = @transform_6, window_bounds = array<i64: 2, 128, 384>}, {pipeline_mode = #tpu.pipeline_mode<synchronous>, transform_indices = @transform_7, window_bounds = array<i64: 2, 1, 384>}, {pipeline_mode = #tpu.pipeline_mode<synchronous>, transform_indices = @transform_8, window_bounds = array<i64: 2, 4, 32, 128>}, {pipeline_mode = #tpu.pipeline_mode<synchronous>, transform_indices = @transform_9, window_bounds = array<i64: 2, 1, 128>}, {pipeline_mode = #tpu.pipeline_mode<synchronous>, transform_indices = @transform_10, window_bounds = array<i64: 2, 128, 256>}, {pipeline_mode = #tpu.pipeline_mode<synchronous>, transform_indices = @transform_11, window_bounds = array<i64: 2, 1, 256>}, {pipeline_mode = #tpu.pipeline_mode<synchronous>, transform_indices = @transform_12, window_bounds = array<i64: 2, 256, 128>}, {pipeline_mode = #tpu.pipeline_mode<synchronous>, transform_indices = @transform_13, window_bounds = array<i64: 2, 1, 128>}, {pipeline_mode = #tpu.pipeline_mode<synchronous>, transform_indices = @transform_14, window_bounds = array<i64: 2, 1, 128>}, {pipeline_mode = #tpu.pipeline_mode<synchronous>, transform_indices = @transform_15, window_bounds = array<i64: 2, 1, 128>}, {pipeline_mode = #tpu.pipeline_mode<synchronous>, transform_indices = @transform_16, window_bounds = array<i64: 2, 1, 128>}, {pipeline_mode = #tpu.pipeline_mode<synchronous>, transform_indices = @transform_17, window_bounds = array<i64: 2, 1, 128>}, {transform_indices = @transform_18, window_bounds = array<i64: 1, 4, 128>}]} {
    %c0 = arith.constant 0 : index
    %c0_0 = arith.constant 0 : index
    %c0_1 = arith.constant 0 : index
    %0 = vector.load %arg2[%c0, %c0_0, %c0_1] : memref<1x1x40xf32, #tpu.memory_space<vmem>>, vector<1x1x40xf32>
    %1 = vector.shape_cast %0 : vector<1x1x40xf32> to vector<1x40xf32>
    %2 = vector.shape_cast %1 : vector<1x40xf32> to vector<1x40xf32>
    %3 = vector.broadcast %2 : vector<1x40xf32> to vector<40x40xf32>
    %c0_2 = arith.constant 0 : index
    %c0_3 = arith.constant 0 : index
    %4 = vector.load %arg5[%c0_2, %c0_3] : memref<40x1xf32, #tpu.memory_space<vmem>>, vector<40x1xf32>
    %c0_4 = arith.constant 0 : index
    %c0_5 = arith.constant 0 : index
    %5 = vector.load %arg6[%c0_4, %c0_5] : memref<1x40xf32, #tpu.memory_space<vmem>>, vector<1x40xf32>
    %6 = vector.broadcast %4 : vector<40x1xf32> to vector<40x40xf32>
    %7 = vector.broadcast %5 : vector<1x40xf32> to vector<40x40xf32>
    %8 = arith.cmpf oeq, %6, %7 : vector<40x40xf32>
    %cst = arith.constant -1.000000e+30 : f32
    %9 = vector.broadcast %cst : f32 to vector<40x40xf32>
    %10 = arith.select %8, %3, %9 : vector<40x40xi1>, vector<40x40xf32>
    %c0_6 = arith.constant 0 : index
    %c0_7 = arith.constant 0 : index
    %c0_8 = arith.constant 0 : index
    %11 = vector.load %arg1[%c0_6, %c0_7, %c0_8] : memref<1x40x135xbf16, #tpu.memory_space<vmem>>, vector<1x40x135xbf16>
    %12 = vector.shape_cast %11 : vector<1x40x135xbf16> to vector<40x135xbf16>
    %c0_9 = arith.constant 0 : index
    %c0_10 = arith.constant 0 : index
    %13 = vector.load %arg3[%c0_9, %c0_10] : memref<135x128xbf16, #tpu.memory_space<vmem>>, vector<135x128xbf16>
    %cst_11 = arith.constant dense<0.000000e+00> : vector<40x128xf32>
    %14 = tpu.matmul %12, %13, %cst_11 {dimension_numbers = #tpu.dot_dimension_numbers<[1], [0], [0], [1], [0, 0, 1, 1], [], []>} : vector<40x135xbf16>, vector<135x128xbf16>, vector<40x128xf32> -> vector<40x128xf32>
    %c0_12 = arith.constant 0 : index
    %c0_13 = arith.constant 0 : index
    %15 = vector.load %arg4[%c0_12, %c0_13] : memref<40x128xf32, #tpu.memory_space<vmem>>, vector<40x128xf32>
    %16 = arith.addf %14, %15 : vector<40x128xf32>
    %17 = arith.truncf %16 : vector<40x128xf32> to vector<40x128xbf16>
    %c0_14 = arith.constant 0 : index
    %c0_15 = arith.constant 0 : index
    %c0_16 = arith.constant 0 : index
    %18 = vector.load %arg7[%c0_14, %c0_15, %c0_16] : memref<2x128x384xbf16, #tpu.memory_space<vmem>>, vector<1x128x384xbf16>
    %19 = vector.shape_cast %18 : vector<1x128x384xbf16> to vector<128x384xbf16>
    %cst_17 = arith.constant dense<0.000000e+00> : vector<40x384xf32>
    %20 = tpu.matmul %17, %19, %cst_17 {dimension_numbers = #tpu.dot_dimension_numbers<[1], [0], [0], [1], [0, 0, 1, 1], [], []>} : vector<40x128xbf16>, vector<128x384xbf16>, vector<40x384xf32> -> vector<40x384xf32>
    %c0_18 = arith.constant 0 : index
    %c0_19 = arith.constant 0 : index
    %c0_20 = arith.constant 0 : index
    %21 = vector.load %arg8[%c0_18, %c0_19, %c0_20] : memref<2x1x384xf32, #tpu.memory_space<vmem>>, vector<1x1x384xf32>
    %22 = vector.shape_cast %21 : vector<1x1x384xf32> to vector<1x384xf32>
    %23 = vector.broadcast %22 : vector<1x384xf32> to vector<40x384xf32>
    %24 = arith.addf %20, %23 : vector<40x384xf32>
    %25 = vector.extract_strided_slice %24 {offsets = [0, 0], sizes = [40, 128], strides = [1, 1]} : vector<40x384xf32> to vector<40x128xf32>
    %26 = vector.extract_strided_slice %24 {offsets = [0, 128], sizes = [40, 128], strides = [1, 1]} : vector<40x384xf32> to vector<40x128xf32>
    %27 = vector.extract_strided_slice %24 {offsets = [0, 256], sizes = [40, 128], strides = [1, 1]} : vector<40x384xf32> to vector<40x128xf32>
    %cst_21 = arith.constant 0.000000e+00 : f32
    %28 = vector.broadcast %cst_21 : f32 to vector<40x128xf32>
    %29 = vector.extract_strided_slice %25 {offsets = [0, 0], sizes = [40, 32], strides = [1, 1]} : vector<40x128xf32> to vector<40x32xf32>
    %30 = arith.truncf %29 : vector<40x32xf32> to vector<40x32xbf16>
    %31 = vector.extract_strided_slice %26 {offsets = [0, 0], sizes = [40, 32], strides = [1, 1]} : vector<40x128xf32> to vector<40x32xf32>
    %32 = arith.truncf %31 : vector<40x32xf32> to vector<40x32xbf16>
    %33 = vector.extract_strided_slice %27 {offsets = [0, 0], sizes = [40, 32], strides = [1, 1]} : vector<40x128xf32> to vector<40x32xf32>
    %34 = arith.truncf %33 : vector<40x32xf32> to vector<40x32xbf16>
    %cst_22 = arith.constant dense<0.000000e+00> : vector<40x40xf32>
    %35 = tpu.matmul %30, %32, %cst_22 {dimension_numbers = #tpu.dot_dimension_numbers<[1], [1], [0], [0], [0, 0, 1, 0], [], []>} : vector<40x32xbf16>, vector<40x32xbf16>, vector<40x40xf32> -> vector<40x40xf32>
    %36 = arith.addf %35, %10 : vector<40x40xf32>
    %cst_23 = arith.constant dense<0xFF800000> : vector<40xf32>
    %37 = vector.multi_reduction <maximumf>, %36, %cst_23 [1] : vector<40x40xf32> to vector<40xf32>
    %38 = vector.shape_cast %37 : vector<40xf32> to vector<40x1xf32>
    %39 = vector.broadcast %38 : vector<40x1xf32> to vector<40x40xf32>
    %40 = arith.subf %36, %39 : vector<40x40xf32>
    %41 = math.exp %40 : vector<40x40xf32>
    %cst_24 = arith.constant dense<0.000000e+00> : vector<40xf32>
    %42 = vector.multi_reduction <add>, %41, %cst_24 [1] : vector<40x40xf32> to vector<40xf32>
    %43 = vector.shape_cast %42 : vector<40xf32> to vector<40x1xf32>
    %44 = tpu.reciprocal %43 {approx = true} : vector<40x1xf32> -> vector<40x1xf32>
    %45 = vector.broadcast %44 : vector<40x1xf32> to vector<40x40xf32>
    %46 = arith.mulf %41, %45 : vector<40x40xf32>
    %47 = arith.truncf %46 : vector<40x40xf32> to vector<40x40xbf16>
    %cst_25 = arith.constant dense<0.000000e+00> : vector<40x32xf32>
    %48 = tpu.matmul %47, %34, %cst_25 {dimension_numbers = #tpu.dot_dimension_numbers<[1], [0], [0], [1], [0, 0, 1, 1], [], []>} : vector<40x40xbf16>, vector<40x32xbf16>, vector<40x32xf32> -> vector<40x32xf32>
    %49 = arith.truncf %48 : vector<40x32xf32> to vector<40x32xbf16>
    %c0_26 = arith.constant 0 : index
    %c0_27 = arith.constant 0 : index
    %c0_28 = arith.constant 0 : index
    %c0_29 = arith.constant 0 : index
    %50 = vector.load %arg9[%c0_26, %c0_27, %c0_28, %c0_29] : memref<2x4x32x128xbf16, #tpu.memory_space<vmem>>, vector<1x1x32x128xbf16>
    %51 = vector.shape_cast %50 : vector<1x1x32x128xbf16> to vector<32x128xbf16>
    %cst_30 = arith.constant dense<0.000000e+00> : vector<40x128xf32>
    %52 = tpu.matmul %49, %51, %cst_30 {dimension_numbers = #tpu.dot_dimension_numbers<[1], [0], [0], [1], [0, 0, 1, 1], [], []>} : vector<40x32xbf16>, vector<32x128xbf16>, vector<40x128xf32> -> vector<40x128xf32>
    %53 = arith.addf %28, %52 : vector<40x128xf32>
    %54 = vector.extract_strided_slice %25 {offsets = [0, 32], sizes = [40, 32], strides = [1, 1]} : vector<40x128xf32> to vector<40x32xf32>
    %55 = arith.truncf %54 : vector<40x32xf32> to vector<40x32xbf16>
    %56 = vector.extract_strided_slice %26 {offsets = [0, 32], sizes = [40, 32], strides = [1, 1]} : vector<40x128xf32> to vector<40x32xf32>
    %57 = arith.truncf %56 : vector<40x32xf32> to vector<40x32xbf16>
    %58 = vector.extract_strided_slice %27 {offsets = [0, 32], sizes = [40, 32], strides = [1, 1]} : vector<40x128xf32> to vector<40x32xf32>
    %59 = arith.truncf %58 : vector<40x32xf32> to vector<40x32xbf16>
    %cst_31 = arith.constant dense<0.000000e+00> : vector<40x40xf32>
    %60 = tpu.matmul %55, %57, %cst_31 {dimension_numbers = #tpu.dot_dimension_numbers<[1], [1], [0], [0], [0, 0, 1, 0], [], []>} : vector<40x32xbf16>, vector<40x32xbf16>, vector<40x40xf32> -> vector<40x40xf32>
    %61 = arith.addf %60, %10 : vector<40x40xf32>
    %cst_32 = arith.constant dense<0xFF800000> : vector<40xf32>
    %62 = vector.multi_reduction <maximumf>, %61, %cst_32 [1] : vector<40x40xf32> to vector<40xf32>
    %63 = vector.shape_cast %62 : vector<40xf32> to vector<40x1xf32>
    %64 = vector.broadcast %63 : vector<40x1xf32> to vector<40x40xf32>
    %65 = arith.subf %61, %64 : vector<40x40xf32>
    %66 = math.exp %65 : vector<40x40xf32>
    %cst_33 = arith.constant dense<0.000000e+00> : vector<40xf32>
    %67 = vector.multi_reduction <add>, %66, %cst_33 [1] : vector<40x40xf32> to vector<40xf32>
    %68 = vector.shape_cast %67 : vector<40xf32> to vector<40x1xf32>
    %69 = tpu.reciprocal %68 {approx = true} : vector<40x1xf32> -> vector<40x1xf32>
    %70 = vector.broadcast %69 : vector<40x1xf32> to vector<40x40xf32>
    %71 = arith.mulf %66, %70 : vector<40x40xf32>
    %72 = arith.truncf %71 : vector<40x40xf32> to vector<40x40xbf16>
    %cst_34 = arith.constant dense<0.000000e+00> : vector<40x32xf32>
    %73 = tpu.matmul %72, %59, %cst_34 {dimension_numbers = #tpu.dot_dimension_numbers<[1], [0], [0], [1], [0, 0, 1, 1], [], []>} : vector<40x40xbf16>, vector<40x32xbf16>, vector<40x32xf32> -> vector<40x32xf32>
    %74 = arith.truncf %73 : vector<40x32xf32> to vector<40x32xbf16>
    %c0_35 = arith.constant 0 : index
    %c1 = arith.constant 1 : index
    %c0_36 = arith.constant 0 : index
    %c0_37 = arith.constant 0 : index
    %75 = vector.load %arg9[%c0_35, %c1, %c0_36, %c0_37] : memref<2x4x32x128xbf16, #tpu.memory_space<vmem>>, vector<1x1x32x128xbf16>
    %76 = vector.shape_cast %75 : vector<1x1x32x128xbf16> to vector<32x128xbf16>
    %cst_38 = arith.constant dense<0.000000e+00> : vector<40x128xf32>
    %77 = tpu.matmul %74, %76, %cst_38 {dimension_numbers = #tpu.dot_dimension_numbers<[1], [0], [0], [1], [0, 0, 1, 1], [], []>} : vector<40x32xbf16>, vector<32x128xbf16>, vector<40x128xf32> -> vector<40x128xf32>
    %78 = arith.addf %53, %77 : vector<40x128xf32>
    %79 = vector.extract_strided_slice %25 {offsets = [0, 64], sizes = [40, 32], strides = [1, 1]} : vector<40x128xf32> to vector<40x32xf32>
    %80 = arith.truncf %79 : vector<40x32xf32> to vector<40x32xbf16>
    %81 = vector.extract_strided_slice %26 {offsets = [0, 64], sizes = [40, 32], strides = [1, 1]} : vector<40x128xf32> to vector<40x32xf32>
    %82 = arith.truncf %81 : vector<40x32xf32> to vector<40x32xbf16>
    %83 = vector.extract_strided_slice %27 {offsets = [0, 64], sizes = [40, 32], strides = [1, 1]} : vector<40x128xf32> to vector<40x32xf32>
    %84 = arith.truncf %83 : vector<40x32xf32> to vector<40x32xbf16>
    %cst_39 = arith.constant dense<0.000000e+00> : vector<40x40xf32>
    %85 = tpu.matmul %80, %82, %cst_39 {dimension_numbers = #tpu.dot_dimension_numbers<[1], [1], [0], [0], [0, 0, 1, 0], [], []>} : vector<40x32xbf16>, vector<40x32xbf16>, vector<40x40xf32> -> vector<40x40xf32>
    %86 = arith.addf %85, %10 : vector<40x40xf32>
    %cst_40 = arith.constant dense<0xFF800000> : vector<40xf32>
    %87 = vector.multi_reduction <maximumf>, %86, %cst_40 [1] : vector<40x40xf32> to vector<40xf32>
    %88 = vector.shape_cast %87 : vector<40xf32> to vector<40x1xf32>
    %89 = vector.broadcast %88 : vector<40x1xf32> to vector<40x40xf32>
    %90 = arith.subf %86, %89 : vector<40x40xf32>
    %91 = math.exp %90 : vector<40x40xf32>
    %cst_41 = arith.constant dense<0.000000e+00> : vector<40xf32>
    %92 = vector.multi_reduction <add>, %91, %cst_41 [1] : vector<40x40xf32> to vector<40xf32>
    %93 = vector.shape_cast %92 : vector<40xf32> to vector<40x1xf32>
    %94 = tpu.reciprocal %93 {approx = true} : vector<40x1xf32> -> vector<40x1xf32>
    %95 = vector.broadcast %94 : vector<40x1xf32> to vector<40x40xf32>
    %96 = arith.mulf %91, %95 : vector<40x40xf32>
    %97 = arith.truncf %96 : vector<40x40xf32> to vector<40x40xbf16>
    %cst_42 = arith.constant dense<0.000000e+00> : vector<40x32xf32>
    %98 = tpu.matmul %97, %84, %cst_42 {dimension_numbers = #tpu.dot_dimension_numbers<[1], [0], [0], [1], [0, 0, 1, 1], [], []>} : vector<40x40xbf16>, vector<40x32xbf16>, vector<40x32xf32> -> vector<40x32xf32>
    %99 = arith.truncf %98 : vector<40x32xf32> to vector<40x32xbf16>
    %c0_43 = arith.constant 0 : index
    %c2 = arith.constant 2 : index
    %c0_44 = arith.constant 0 : index
    %c0_45 = arith.constant 0 : index
    %100 = vector.load %arg9[%c0_43, %c2, %c0_44, %c0_45] : memref<2x4x32x128xbf16, #tpu.memory_space<vmem>>, vector<1x1x32x128xbf16>
    %101 = vector.shape_cast %100 : vector<1x1x32x128xbf16> to vector<32x128xbf16>
    %cst_46 = arith.constant dense<0.000000e+00> : vector<40x128xf32>
    %102 = tpu.matmul %99, %101, %cst_46 {dimension_numbers = #tpu.dot_dimension_numbers<[1], [0], [0], [1], [0, 0, 1, 1], [], []>} : vector<40x32xbf16>, vector<32x128xbf16>, vector<40x128xf32> -> vector<40x128xf32>
    %103 = arith.addf %78, %102 : vector<40x128xf32>
    %104 = vector.extract_strided_slice %25 {offsets = [0, 96], sizes = [40, 32], strides = [1, 1]} : vector<40x128xf32> to vector<40x32xf32>
    %105 = arith.truncf %104 : vector<40x32xf32> to vector<40x32xbf16>
    %106 = vector.extract_strided_slice %26 {offsets = [0, 96], sizes = [40, 32], strides = [1, 1]} : vector<40x128xf32> to vector<40x32xf32>
    %107 = arith.truncf %106 : vector<40x32xf32> to vector<40x32xbf16>
    %108 = vector.extract_strided_slice %27 {offsets = [0, 96], sizes = [40, 32], strides = [1, 1]} : vector<40x128xf32> to vector<40x32xf32>
    %109 = arith.truncf %108 : vector<40x32xf32> to vector<40x32xbf16>
    %cst_47 = arith.constant dense<0.000000e+00> : vector<40x40xf32>
    %110 = tpu.matmul %105, %107, %cst_47 {dimension_numbers = #tpu.dot_dimension_numbers<[1], [1], [0], [0], [0, 0, 1, 0], [], []>} : vector<40x32xbf16>, vector<40x32xbf16>, vector<40x40xf32> -> vector<40x40xf32>
    %111 = arith.addf %110, %10 : vector<40x40xf32>
    %cst_48 = arith.constant dense<0xFF800000> : vector<40xf32>
    %112 = vector.multi_reduction <maximumf>, %111, %cst_48 [1] : vector<40x40xf32> to vector<40xf32>
    %113 = vector.shape_cast %112 : vector<40xf32> to vector<40x1xf32>
    %114 = vector.broadcast %113 : vector<40x1xf32> to vector<40x40xf32>
    %115 = arith.subf %111, %114 : vector<40x40xf32>
    %116 = math.exp %115 : vector<40x40xf32>
    %cst_49 = arith.constant dense<0.000000e+00> : vector<40xf32>
    %117 = vector.multi_reduction <add>, %116, %cst_49 [1] : vector<40x40xf32> to vector<40xf32>
    %118 = vector.shape_cast %117 : vector<40xf32> to vector<40x1xf32>
    %119 = tpu.reciprocal %118 {approx = true} : vector<40x1xf32> -> vector<40x1xf32>
    %120 = vector.broadcast %119 : vector<40x1xf32> to vector<40x40xf32>
    %121 = arith.mulf %116, %120 : vector<40x40xf32>
    %122 = arith.truncf %121 : vector<40x40xf32> to vector<40x40xbf16>
    %cst_50 = arith.constant dense<0.000000e+00> : vector<40x32xf32>
    %123 = tpu.matmul %122, %109, %cst_50 {dimension_numbers = #tpu.dot_dimension_numbers<[1], [0], [0], [1], [0, 0, 1, 1], [], []>} : vector<40x40xbf16>, vector<40x32xbf16>, vector<40x32xf32> -> vector<40x32xf32>
    %124 = arith.truncf %123 : vector<40x32xf32> to vector<40x32xbf16>
    %c0_51 = arith.constant 0 : index
    %c3 = arith.constant 3 : index
    %c0_52 = arith.constant 0 : index
    %c0_53 = arith.constant 0 : index
    %125 = vector.load %arg9[%c0_51, %c3, %c0_52, %c0_53] : memref<2x4x32x128xbf16, #tpu.memory_space<vmem>>, vector<1x1x32x128xbf16>
    %126 = vector.shape_cast %125 : vector<1x1x32x128xbf16> to vector<32x128xbf16>
    %cst_54 = arith.constant dense<0.000000e+00> : vector<40x128xf32>
    %127 = tpu.matmul %124, %126, %cst_54 {dimension_numbers = #tpu.dot_dimension_numbers<[1], [0], [0], [1], [0, 0, 1, 1], [], []>} : vector<40x32xbf16>, vector<32x128xbf16>, vector<40x128xf32> -> vector<40x128xf32>
    %128 = arith.addf %103, %127 : vector<40x128xf32>
    %c0_55 = arith.constant 0 : index
    %c0_56 = arith.constant 0 : index
    %c0_57 = arith.constant 0 : index
    %129 = vector.load %arg10[%c0_55, %c0_56, %c0_57] : memref<2x1x128xf32, #tpu.memory_space<vmem>>, vector<1x1x128xf32>
    %130 = vector.shape_cast %129 : vector<1x1x128xf32> to vector<1x128xf32>
    %131 = vector.broadcast %130 : vector<1x128xf32> to vector<40x128xf32>
    %132 = arith.addf %128, %131 : vector<40x128xf32>
    %133 = arith.addf %16, %132 : vector<40x128xf32>
    %c0_58 = arith.constant 0 : index
    %c0_59 = arith.constant 0 : index
    %c0_60 = arith.constant 0 : index
    %134 = vector.load %arg15[%c0_58, %c0_59, %c0_60] : memref<2x1x128xf32, #tpu.memory_space<vmem>>, vector<1x1x128xf32>
    %135 = vector.shape_cast %134 : vector<1x1x128xf32> to vector<1x128xf32>
    %c0_61 = arith.constant 0 : index
    %c0_62 = arith.constant 0 : index
    %c0_63 = arith.constant 0 : index
    %136 = vector.load %arg16[%c0_61, %c0_62, %c0_63] : memref<2x1x128xf32, #tpu.memory_space<vmem>>, vector<1x1x128xf32>
    %137 = vector.shape_cast %136 : vector<1x1x128xf32> to vector<1x128xf32>
    %cst_64 = arith.constant dense<0.000000e+00> : vector<40xf32>
    %138 = vector.multi_reduction <add>, %133, %cst_64 [1] : vector<40x128xf32> to vector<40xf32>
    %139 = vector.shape_cast %138 : vector<40xf32> to vector<40x1xf32>
    %cst_65 = arith.constant 1.280000e+02 : f32
    %140 = vector.broadcast %cst_65 : f32 to vector<40x1xf32>
    %141 = arith.divf %139, %140 : vector<40x1xf32>
    %142 = vector.broadcast %141 : vector<40x1xf32> to vector<40x128xf32>
    %143 = arith.subf %133, %142 : vector<40x128xf32>
    %144 = arith.mulf %143, %143 : vector<40x128xf32>
    %cst_66 = arith.constant dense<0.000000e+00> : vector<40xf32>
    %145 = vector.multi_reduction <add>, %144, %cst_66 [1] : vector<40x128xf32> to vector<40xf32>
    %146 = vector.shape_cast %145 : vector<40xf32> to vector<40x1xf32>
    %cst_67 = arith.constant 1.280000e+02 : f32
    %147 = vector.broadcast %cst_67 : f32 to vector<40x1xf32>
    %148 = arith.divf %146, %147 : vector<40x1xf32>
    %cst_68 = arith.constant 9.99999974E-6 : f32
    %149 = vector.broadcast %cst_68 : f32 to vector<40x1xf32>
    %150 = arith.addf %148, %149 : vector<40x1xf32>
    %151 = math.rsqrt %150 : vector<40x1xf32>
    %152 = vector.broadcast %151 : vector<40x1xf32> to vector<40x128xf32>
    %153 = arith.mulf %143, %152 : vector<40x128xf32>
    %154 = vector.broadcast %135 : vector<1x128xf32> to vector<40x128xf32>
    %155 = arith.mulf %153, %154 : vector<40x128xf32>
    %156 = vector.broadcast %137 : vector<1x128xf32> to vector<40x128xf32>
    %157 = arith.addf %155, %156 : vector<40x128xf32>
    %158 = arith.truncf %157 : vector<40x128xf32> to vector<40x128xbf16>
    %c0_69 = arith.constant 0 : index
    %c0_70 = arith.constant 0 : index
    %c0_71 = arith.constant 0 : index
    %159 = vector.load %arg11[%c0_69, %c0_70, %c0_71] : memref<2x128x256xbf16, #tpu.memory_space<vmem>>, vector<1x128x256xbf16>
    %160 = vector.shape_cast %159 : vector<1x128x256xbf16> to vector<128x256xbf16>
    %cst_72 = arith.constant dense<0.000000e+00> : vector<40x256xf32>
    %161 = tpu.matmul %158, %160, %cst_72 {dimension_numbers = #tpu.dot_dimension_numbers<[1], [0], [0], [1], [0, 0, 1, 1], [], []>} : vector<40x128xbf16>, vector<128x256xbf16>, vector<40x256xf32> -> vector<40x256xf32>
    %c0_73 = arith.constant 0 : index
    %c0_74 = arith.constant 0 : index
    %c0_75 = arith.constant 0 : index
    %162 = vector.load %arg12[%c0_73, %c0_74, %c0_75] : memref<2x1x256xf32, #tpu.memory_space<vmem>>, vector<1x1x256xf32>
    %163 = vector.shape_cast %162 : vector<1x1x256xf32> to vector<1x256xf32>
    %164 = vector.broadcast %163 : vector<1x256xf32> to vector<40x256xf32>
    %165 = arith.addf %161, %164 : vector<40x256xf32>
    %cst_76 = arith.constant 5.000000e-01 : f32
    %166 = vector.broadcast %cst_76 : f32 to vector<40x256xf32>
    %167 = arith.mulf %166, %165 : vector<40x256xf32>
    %cst_77 = arith.constant 0.707106769 : f32
    %168 = vector.broadcast %cst_77 : f32 to vector<40x256xf32>
    %169 = arith.mulf %165, %168 : vector<40x256xf32>
    %170 = math.erf %169 : vector<40x256xf32>
    %cst_78 = arith.constant 1.000000e+00 : f32
    %171 = vector.broadcast %cst_78 : f32 to vector<40x256xf32>
    %172 = arith.addf %171, %170 : vector<40x256xf32>
    %173 = arith.mulf %167, %172 : vector<40x256xf32>
    %174 = arith.truncf %173 : vector<40x256xf32> to vector<40x256xbf16>
    %c0_79 = arith.constant 0 : index
    %c0_80 = arith.constant 0 : index
    %c0_81 = arith.constant 0 : index
    %175 = vector.load %arg13[%c0_79, %c0_80, %c0_81] : memref<2x256x128xbf16, #tpu.memory_space<vmem>>, vector<1x256x128xbf16>
    %176 = vector.shape_cast %175 : vector<1x256x128xbf16> to vector<256x128xbf16>
    %cst_82 = arith.constant dense<0.000000e+00> : vector<40x128xf32>
    %177 = tpu.matmul %174, %176, %cst_82 {dimension_numbers = #tpu.dot_dimension_numbers<[1], [0], [0], [1], [0, 0, 1, 1], [], []>} : vector<40x256xbf16>, vector<256x128xbf16>, vector<40x128xf32> -> vector<40x128xf32>
    %c0_83 = arith.constant 0 : index
    %c0_84 = arith.constant 0 : index
    %c0_85 = arith.constant 0 : index
    %178 = vector.load %arg14[%c0_83, %c0_84, %c0_85] : memref<2x1x128xf32, #tpu.memory_space<vmem>>, vector<1x1x128xf32>
    %179 = vector.shape_cast %178 : vector<1x1x128xf32> to vector<1x128xf32>
    %180 = vector.broadcast %179 : vector<1x128xf32> to vector<40x128xf32>
    %181 = arith.addf %177, %180 : vector<40x128xf32>
    %182 = arith.addf %157, %181 : vector<40x128xf32>
    %c0_86 = arith.constant 0 : index
    %c0_87 = arith.constant 0 : index
    %c0_88 = arith.constant 0 : index
    %183 = vector.load %arg17[%c0_86, %c0_87, %c0_88] : memref<2x1x128xf32, #tpu.memory_space<vmem>>, vector<1x1x128xf32>
    %184 = vector.shape_cast %183 : vector<1x1x128xf32> to vector<1x128xf32>
    %c0_89 = arith.constant 0 : index
    %c0_90 = arith.constant 0 : index
    %c0_91 = arith.constant 0 : index
    %185 = vector.load %arg18[%c0_89, %c0_90, %c0_91] : memref<2x1x128xf32, #tpu.memory_space<vmem>>, vector<1x1x128xf32>
    %186 = vector.shape_cast %185 : vector<1x1x128xf32> to vector<1x128xf32>
    %cst_92 = arith.constant dense<0.000000e+00> : vector<40xf32>
    %187 = vector.multi_reduction <add>, %182, %cst_92 [1] : vector<40x128xf32> to vector<40xf32>
    %188 = vector.shape_cast %187 : vector<40xf32> to vector<40x1xf32>
    %cst_93 = arith.constant 1.280000e+02 : f32
    %189 = vector.broadcast %cst_93 : f32 to vector<40x1xf32>
    %190 = arith.divf %188, %189 : vector<40x1xf32>
    %191 = vector.broadcast %190 : vector<40x1xf32> to vector<40x128xf32>
    %192 = arith.subf %182, %191 : vector<40x128xf32>
    %193 = arith.mulf %192, %192 : vector<40x128xf32>
    %cst_94 = arith.constant dense<0.000000e+00> : vector<40xf32>
    %194 = vector.multi_reduction <add>, %193, %cst_94 [1] : vector<40x128xf32> to vector<40xf32>
    %195 = vector.shape_cast %194 : vector<40xf32> to vector<40x1xf32>
    %cst_95 = arith.constant 1.280000e+02 : f32
    %196 = vector.broadcast %cst_95 : f32 to vector<40x1xf32>
    %197 = arith.divf %195, %196 : vector<40x1xf32>
    %cst_96 = arith.constant 9.99999974E-6 : f32
    %198 = vector.broadcast %cst_96 : f32 to vector<40x1xf32>
    %199 = arith.addf %197, %198 : vector<40x1xf32>
    %200 = math.rsqrt %199 : vector<40x1xf32>
    %201 = vector.broadcast %200 : vector<40x1xf32> to vector<40x128xf32>
    %202 = arith.mulf %192, %201 : vector<40x128xf32>
    %203 = vector.broadcast %184 : vector<1x128xf32> to vector<40x128xf32>
    %204 = arith.mulf %202, %203 : vector<40x128xf32>
    %205 = vector.broadcast %186 : vector<1x128xf32> to vector<40x128xf32>
    %206 = arith.addf %204, %205 : vector<40x128xf32>
    %207 = arith.truncf %206 : vector<40x128xf32> to vector<40x128xbf16>
    %c1_97 = arith.constant 1 : index
    %c0_98 = arith.constant 0 : index
    %c0_99 = arith.constant 0 : index
    %208 = vector.load %arg7[%c1_97, %c0_98, %c0_99] : memref<2x128x384xbf16, #tpu.memory_space<vmem>>, vector<1x128x384xbf16>
    %209 = vector.shape_cast %208 : vector<1x128x384xbf16> to vector<128x384xbf16>
    %cst_100 = arith.constant dense<0.000000e+00> : vector<40x384xf32>
    %210 = tpu.matmul %207, %209, %cst_100 {dimension_numbers = #tpu.dot_dimension_numbers<[1], [0], [0], [1], [0, 0, 1, 1], [], []>} : vector<40x128xbf16>, vector<128x384xbf16>, vector<40x384xf32> -> vector<40x384xf32>
    %c1_101 = arith.constant 1 : index
    %c0_102 = arith.constant 0 : index
    %c0_103 = arith.constant 0 : index
    %211 = vector.load %arg8[%c1_101, %c0_102, %c0_103] : memref<2x1x384xf32, #tpu.memory_space<vmem>>, vector<1x1x384xf32>
    %212 = vector.shape_cast %211 : vector<1x1x384xf32> to vector<1x384xf32>
    %213 = vector.broadcast %212 : vector<1x384xf32> to vector<40x384xf32>
    %214 = arith.addf %210, %213 : vector<40x384xf32>
    %215 = vector.extract_strided_slice %214 {offsets = [0, 0], sizes = [4, 128], strides = [1, 1]} : vector<40x384xf32> to vector<4x128xf32>
    %216 = vector.extract_strided_slice %214 {offsets = [0, 128], sizes = [40, 128], strides = [1, 1]} : vector<40x384xf32> to vector<40x128xf32>
    %217 = vector.extract_strided_slice %214 {offsets = [0, 256], sizes = [40, 128], strides = [1, 1]} : vector<40x384xf32> to vector<40x128xf32>
    %218 = vector.extract_strided_slice %10 {offsets = [0, 0], sizes = [4, 40], strides = [1, 1]} : vector<40x40xf32> to vector<4x40xf32>
    %cst_104 = arith.constant 0.000000e+00 : f32
    %219 = vector.broadcast %cst_104 : f32 to vector<4x128xf32>
    %220 = vector.extract_strided_slice %215 {offsets = [0, 0], sizes = [4, 32], strides = [1, 1]} : vector<4x128xf32> to vector<4x32xf32>
    %221 = arith.truncf %220 : vector<4x32xf32> to vector<4x32xbf16>
    %222 = vector.extract_strided_slice %216 {offsets = [0, 0], sizes = [40, 32], strides = [1, 1]} : vector<40x128xf32> to vector<40x32xf32>
    %223 = arith.truncf %222 : vector<40x32xf32> to vector<40x32xbf16>
    %224 = vector.extract_strided_slice %217 {offsets = [0, 0], sizes = [40, 32], strides = [1, 1]} : vector<40x128xf32> to vector<40x32xf32>
    %225 = arith.truncf %224 : vector<40x32xf32> to vector<40x32xbf16>
    %cst_105 = arith.constant dense<0.000000e+00> : vector<4x40xf32>
    %226 = tpu.matmul %221, %223, %cst_105 {dimension_numbers = #tpu.dot_dimension_numbers<[1], [1], [0], [0], [0, 0, 1, 0], [], []>} : vector<4x32xbf16>, vector<40x32xbf16>, vector<4x40xf32> -> vector<4x40xf32>
    %227 = arith.addf %226, %218 : vector<4x40xf32>
    %cst_106 = arith.constant dense<0xFF800000> : vector<4xf32>
    %228 = vector.multi_reduction <maximumf>, %227, %cst_106 [1] : vector<4x40xf32> to vector<4xf32>
    %229 = vector.shape_cast %228 : vector<4xf32> to vector<4x1xf32>
    %230 = vector.broadcast %229 : vector<4x1xf32> to vector<4x40xf32>
    %231 = arith.subf %227, %230 : vector<4x40xf32>
    %232 = math.exp %231 : vector<4x40xf32>
    %cst_107 = arith.constant dense<0.000000e+00> : vector<4xf32>
    %233 = vector.multi_reduction <add>, %232, %cst_107 [1] : vector<4x40xf32> to vector<4xf32>
    %234 = vector.shape_cast %233 : vector<4xf32> to vector<4x1xf32>
    %235 = tpu.reciprocal %234 {approx = true} : vector<4x1xf32> -> vector<4x1xf32>
    %236 = vector.broadcast %235 : vector<4x1xf32> to vector<4x40xf32>
    %237 = arith.mulf %232, %236 : vector<4x40xf32>
    %238 = arith.truncf %237 : vector<4x40xf32> to vector<4x40xbf16>
    %cst_108 = arith.constant dense<0.000000e+00> : vector<4x32xf32>
    %239 = tpu.matmul %238, %225, %cst_108 {dimension_numbers = #tpu.dot_dimension_numbers<[1], [0], [0], [1], [0, 0, 1, 1], [], []>} : vector<4x40xbf16>, vector<40x32xbf16>, vector<4x32xf32> -> vector<4x32xf32>
    %240 = arith.truncf %239 : vector<4x32xf32> to vector<4x32xbf16>
    %c1_109 = arith.constant 1 : index
    %c0_110 = arith.constant 0 : index
    %c0_111 = arith.constant 0 : index
    %c0_112 = arith.constant 0 : index
    %241 = vector.load %arg9[%c1_109, %c0_110, %c0_111, %c0_112] : memref<2x4x32x128xbf16, #tpu.memory_space<vmem>>, vector<1x1x32x128xbf16>
    %242 = vector.shape_cast %241 : vector<1x1x32x128xbf16> to vector<32x128xbf16>
    %cst_113 = arith.constant dense<0.000000e+00> : vector<4x128xf32>
    %243 = tpu.matmul %240, %242, %cst_113 {dimension_numbers = #tpu.dot_dimension_numbers<[1], [0], [0], [1], [0, 0, 1, 1], [], []>} : vector<4x32xbf16>, vector<32x128xbf16>, vector<4x128xf32> -> vector<4x128xf32>
    %244 = arith.addf %219, %243 : vector<4x128xf32>
    %245 = vector.extract_strided_slice %215 {offsets = [0, 32], sizes = [4, 32], strides = [1, 1]} : vector<4x128xf32> to vector<4x32xf32>
    %246 = arith.truncf %245 : vector<4x32xf32> to vector<4x32xbf16>
    %247 = vector.extract_strided_slice %216 {offsets = [0, 32], sizes = [40, 32], strides = [1, 1]} : vector<40x128xf32> to vector<40x32xf32>
    %248 = arith.truncf %247 : vector<40x32xf32> to vector<40x32xbf16>
    %249 = vector.extract_strided_slice %217 {offsets = [0, 32], sizes = [40, 32], strides = [1, 1]} : vector<40x128xf32> to vector<40x32xf32>
    %250 = arith.truncf %249 : vector<40x32xf32> to vector<40x32xbf16>
    %cst_114 = arith.constant dense<0.000000e+00> : vector<4x40xf32>
    %251 = tpu.matmul %246, %248, %cst_114 {dimension_numbers = #tpu.dot_dimension_numbers<[1], [1], [0], [0], [0, 0, 1, 0], [], []>} : vector<4x32xbf16>, vector<40x32xbf16>, vector<4x40xf32> -> vector<4x40xf32>
    %252 = arith.addf %251, %218 : vector<4x40xf32>
    %cst_115 = arith.constant dense<0xFF800000> : vector<4xf32>
    %253 = vector.multi_reduction <maximumf>, %252, %cst_115 [1] : vector<4x40xf32> to vector<4xf32>
    %254 = vector.shape_cast %253 : vector<4xf32> to vector<4x1xf32>
    %255 = vector.broadcast %254 : vector<4x1xf32> to vector<4x40xf32>
    %256 = arith.subf %252, %255 : vector<4x40xf32>
    %257 = math.exp %256 : vector<4x40xf32>
    %cst_116 = arith.constant dense<0.000000e+00> : vector<4xf32>
    %258 = vector.multi_reduction <add>, %257, %cst_116 [1] : vector<4x40xf32> to vector<4xf32>
    %259 = vector.shape_cast %258 : vector<4xf32> to vector<4x1xf32>
    %260 = tpu.reciprocal %259 {approx = true} : vector<4x1xf32> -> vector<4x1xf32>
    %261 = vector.broadcast %260 : vector<4x1xf32> to vector<4x40xf32>
    %262 = arith.mulf %257, %261 : vector<4x40xf32>
    %263 = arith.truncf %262 : vector<4x40xf32> to vector<4x40xbf16>
    %cst_117 = arith.constant dense<0.000000e+00> : vector<4x32xf32>
    %264 = tpu.matmul %263, %250, %cst_117 {dimension_numbers = #tpu.dot_dimension_numbers<[1], [0], [0], [1], [0, 0, 1, 1], [], []>} : vector<4x40xbf16>, vector<40x32xbf16>, vector<4x32xf32> -> vector<4x32xf32>
    %265 = arith.truncf %264 : vector<4x32xf32> to vector<4x32xbf16>
    %c1_118 = arith.constant 1 : index
    %c1_119 = arith.constant 1 : index
    %c0_120 = arith.constant 0 : index
    %c0_121 = arith.constant 0 : index
    %266 = vector.load %arg9[%c1_118, %c1_119, %c0_120, %c0_121] : memref<2x4x32x128xbf16, #tpu.memory_space<vmem>>, vector<1x1x32x128xbf16>
    %267 = vector.shape_cast %266 : vector<1x1x32x128xbf16> to vector<32x128xbf16>
    %cst_122 = arith.constant dense<0.000000e+00> : vector<4x128xf32>
    %268 = tpu.matmul %265, %267, %cst_122 {dimension_numbers = #tpu.dot_dimension_numbers<[1], [0], [0], [1], [0, 0, 1, 1], [], []>} : vector<4x32xbf16>, vector<32x128xbf16>, vector<4x128xf32> -> vector<4x128xf32>
    %269 = arith.addf %244, %268 : vector<4x128xf32>
    %270 = vector.extract_strided_slice %215 {offsets = [0, 64], sizes = [4, 32], strides = [1, 1]} : vector<4x128xf32> to vector<4x32xf32>
    %271 = arith.truncf %270 : vector<4x32xf32> to vector<4x32xbf16>
    %272 = vector.extract_strided_slice %216 {offsets = [0, 64], sizes = [40, 32], strides = [1, 1]} : vector<40x128xf32> to vector<40x32xf32>
    %273 = arith.truncf %272 : vector<40x32xf32> to vector<40x32xbf16>
    %274 = vector.extract_strided_slice %217 {offsets = [0, 64], sizes = [40, 32], strides = [1, 1]} : vector<40x128xf32> to vector<40x32xf32>
    %275 = arith.truncf %274 : vector<40x32xf32> to vector<40x32xbf16>
    %cst_123 = arith.constant dense<0.000000e+00> : vector<4x40xf32>
    %276 = tpu.matmul %271, %273, %cst_123 {dimension_numbers = #tpu.dot_dimension_numbers<[1], [1], [0], [0], [0, 0, 1, 0], [], []>} : vector<4x32xbf16>, vector<40x32xbf16>, vector<4x40xf32> -> vector<4x40xf32>
    %277 = arith.addf %276, %218 : vector<4x40xf32>
    %cst_124 = arith.constant dense<0xFF800000> : vector<4xf32>
    %278 = vector.multi_reduction <maximumf>, %277, %cst_124 [1] : vector<4x40xf32> to vector<4xf32>
    %279 = vector.shape_cast %278 : vector<4xf32> to vector<4x1xf32>
    %280 = vector.broadcast %279 : vector<4x1xf32> to vector<4x40xf32>
    %281 = arith.subf %277, %280 : vector<4x40xf32>
    %282 = math.exp %281 : vector<4x40xf32>
    %cst_125 = arith.constant dense<0.000000e+00> : vector<4xf32>
    %283 = vector.multi_reduction <add>, %282, %cst_125 [1] : vector<4x40xf32> to vector<4xf32>
    %284 = vector.shape_cast %283 : vector<4xf32> to vector<4x1xf32>
    %285 = tpu.reciprocal %284 {approx = true} : vector<4x1xf32> -> vector<4x1xf32>
    %286 = vector.broadcast %285 : vector<4x1xf32> to vector<4x40xf32>
    %287 = arith.mulf %282, %286 : vector<4x40xf32>
    %288 = arith.truncf %287 : vector<4x40xf32> to vector<4x40xbf16>
    %cst_126 = arith.constant dense<0.000000e+00> : vector<4x32xf32>
    %289 = tpu.matmul %288, %275, %cst_126 {dimension_numbers = #tpu.dot_dimension_numbers<[1], [0], [0], [1], [0, 0, 1, 1], [], []>} : vector<4x40xbf16>, vector<40x32xbf16>, vector<4x32xf32> -> vector<4x32xf32>
    %290 = arith.truncf %289 : vector<4x32xf32> to vector<4x32xbf16>
    %c1_127 = arith.constant 1 : index
    %c2_128 = arith.constant 2 : index
    %c0_129 = arith.constant 0 : index
    %c0_130 = arith.constant 0 : index
    %291 = vector.load %arg9[%c1_127, %c2_128, %c0_129, %c0_130] : memref<2x4x32x128xbf16, #tpu.memory_space<vmem>>, vector<1x1x32x128xbf16>
    %292 = vector.shape_cast %291 : vector<1x1x32x128xbf16> to vector<32x128xbf16>
    %cst_131 = arith.constant dense<0.000000e+00> : vector<4x128xf32>
    %293 = tpu.matmul %290, %292, %cst_131 {dimension_numbers = #tpu.dot_dimension_numbers<[1], [0], [0], [1], [0, 0, 1, 1], [], []>} : vector<4x32xbf16>, vector<32x128xbf16>, vector<4x128xf32> -> vector<4x128xf32>
    %294 = arith.addf %269, %293 : vector<4x128xf32>
    %295 = vector.extract_strided_slice %215 {offsets = [0, 96], sizes = [4, 32], strides = [1, 1]} : vector<4x128xf32> to vector<4x32xf32>
    %296 = arith.truncf %295 : vector<4x32xf32> to vector<4x32xbf16>
    %297 = vector.extract_strided_slice %216 {offsets = [0, 96], sizes = [40, 32], strides = [1, 1]} : vector<40x128xf32> to vector<40x32xf32>
    %298 = arith.truncf %297 : vector<40x32xf32> to vector<40x32xbf16>
    %299 = vector.extract_strided_slice %217 {offsets = [0, 96], sizes = [40, 32], strides = [1, 1]} : vector<40x128xf32> to vector<40x32xf32>
    %300 = arith.truncf %299 : vector<40x32xf32> to vector<40x32xbf16>
    %cst_132 = arith.constant dense<0.000000e+00> : vector<4x40xf32>
    %301 = tpu.matmul %296, %298, %cst_132 {dimension_numbers = #tpu.dot_dimension_numbers<[1], [1], [0], [0], [0, 0, 1, 0], [], []>} : vector<4x32xbf16>, vector<40x32xbf16>, vector<4x40xf32> -> vector<4x40xf32>
    %302 = arith.addf %301, %218 : vector<4x40xf32>
    %cst_133 = arith.constant dense<0xFF800000> : vector<4xf32>
    %303 = vector.multi_reduction <maximumf>, %302, %cst_133 [1] : vector<4x40xf32> to vector<4xf32>
    %304 = vector.shape_cast %303 : vector<4xf32> to vector<4x1xf32>
    %305 = vector.broadcast %304 : vector<4x1xf32> to vector<4x40xf32>
    %306 = arith.subf %302, %305 : vector<4x40xf32>
    %307 = math.exp %306 : vector<4x40xf32>
    %cst_134 = arith.constant dense<0.000000e+00> : vector<4xf32>
    %308 = vector.multi_reduction <add>, %307, %cst_134 [1] : vector<4x40xf32> to vector<4xf32>
    %309 = vector.shape_cast %308 : vector<4xf32> to vector<4x1xf32>
    %310 = tpu.reciprocal %309 {approx = true} : vector<4x1xf32> -> vector<4x1xf32>
    %311 = vector.broadcast %310 : vector<4x1xf32> to vector<4x40xf32>
    %312 = arith.mulf %307, %311 : vector<4x40xf32>
    %313 = arith.truncf %312 : vector<4x40xf32> to vector<4x40xbf16>
    %cst_135 = arith.constant dense<0.000000e+00> : vector<4x32xf32>
    %314 = tpu.matmul %313, %300, %cst_135 {dimension_numbers = #tpu.dot_dimension_numbers<[1], [0], [0], [1], [0, 0, 1, 1], [], []>} : vector<4x40xbf16>, vector<40x32xbf16>, vector<4x32xf32> -> vector<4x32xf32>
    %315 = arith.truncf %314 : vector<4x32xf32> to vector<4x32xbf16>
    %c1_136 = arith.constant 1 : index
    %c3_137 = arith.constant 3 : index
    %c0_138 = arith.constant 0 : index
    %c0_139 = arith.constant 0 : index
    %316 = vector.load %arg9[%c1_136, %c3_137, %c0_138, %c0_139] : memref<2x4x32x128xbf16, #tpu.memory_space<vmem>>, vector<1x1x32x128xbf16>
    %317 = vector.shape_cast %316 : vector<1x1x32x128xbf16> to vector<32x128xbf16>
    %cst_140 = arith.constant dense<0.000000e+00> : vector<4x128xf32>
    %318 = tpu.matmul %315, %317, %cst_140 {dimension_numbers = #tpu.dot_dimension_numbers<[1], [0], [0], [1], [0, 0, 1, 1], [], []>} : vector<4x32xbf16>, vector<32x128xbf16>, vector<4x128xf32> -> vector<4x128xf32>
    %319 = arith.addf %294, %318 : vector<4x128xf32>
    %c1_141 = arith.constant 1 : index
    %c0_142 = arith.constant 0 : index
    %c0_143 = arith.constant 0 : index
    %320 = vector.load %arg10[%c1_141, %c0_142, %c0_143] : memref<2x1x128xf32, #tpu.memory_space<vmem>>, vector<1x1x128xf32>
    %321 = vector.shape_cast %320 : vector<1x1x128xf32> to vector<1x128xf32>
    %322 = vector.broadcast %321 : vector<1x128xf32> to vector<4x128xf32>
    %323 = arith.addf %319, %322 : vector<4x128xf32>
    %324 = vector.extract_strided_slice %206 {offsets = [0, 0], sizes = [4, 128], strides = [1, 1]} : vector<40x128xf32> to vector<4x128xf32>
    %325 = arith.addf %324, %323 : vector<4x128xf32>
    %c1_144 = arith.constant 1 : index
    %c0_145 = arith.constant 0 : index
    %c0_146 = arith.constant 0 : index
    %326 = vector.load %arg15[%c1_144, %c0_145, %c0_146] : memref<2x1x128xf32, #tpu.memory_space<vmem>>, vector<1x1x128xf32>
    %327 = vector.shape_cast %326 : vector<1x1x128xf32> to vector<1x128xf32>
    %c1_147 = arith.constant 1 : index
    %c0_148 = arith.constant 0 : index
    %c0_149 = arith.constant 0 : index
    %328 = vector.load %arg16[%c1_147, %c0_148, %c0_149] : memref<2x1x128xf32, #tpu.memory_space<vmem>>, vector<1x1x128xf32>
    %329 = vector.shape_cast %328 : vector<1x1x128xf32> to vector<1x128xf32>
    %cst_150 = arith.constant dense<0.000000e+00> : vector<4xf32>
    %330 = vector.multi_reduction <add>, %325, %cst_150 [1] : vector<4x128xf32> to vector<4xf32>
    %331 = vector.shape_cast %330 : vector<4xf32> to vector<4x1xf32>
    %cst_151 = arith.constant 1.280000e+02 : f32
    %332 = vector.broadcast %cst_151 : f32 to vector<4x1xf32>
    %333 = arith.divf %331, %332 : vector<4x1xf32>
    %334 = vector.broadcast %333 : vector<4x1xf32> to vector<4x128xf32>
    %335 = arith.subf %325, %334 : vector<4x128xf32>
    %336 = arith.mulf %335, %335 : vector<4x128xf32>
    %cst_152 = arith.constant dense<0.000000e+00> : vector<4xf32>
    %337 = vector.multi_reduction <add>, %336, %cst_152 [1] : vector<4x128xf32> to vector<4xf32>
    %338 = vector.shape_cast %337 : vector<4xf32> to vector<4x1xf32>
    %cst_153 = arith.constant 1.280000e+02 : f32
    %339 = vector.broadcast %cst_153 : f32 to vector<4x1xf32>
    %340 = arith.divf %338, %339 : vector<4x1xf32>
    %cst_154 = arith.constant 9.99999974E-6 : f32
    %341 = vector.broadcast %cst_154 : f32 to vector<4x1xf32>
    %342 = arith.addf %340, %341 : vector<4x1xf32>
    %343 = math.rsqrt %342 : vector<4x1xf32>
    %344 = vector.broadcast %343 : vector<4x1xf32> to vector<4x128xf32>
    %345 = arith.mulf %335, %344 : vector<4x128xf32>
    %346 = vector.broadcast %327 : vector<1x128xf32> to vector<4x128xf32>
    %347 = arith.mulf %345, %346 : vector<4x128xf32>
    %348 = vector.broadcast %329 : vector<1x128xf32> to vector<4x128xf32>
    %349 = arith.addf %347, %348 : vector<4x128xf32>
    %350 = arith.truncf %349 : vector<4x128xf32> to vector<4x128xbf16>
    %c1_155 = arith.constant 1 : index
    %c0_156 = arith.constant 0 : index
    %c0_157 = arith.constant 0 : index
    %351 = vector.load %arg11[%c1_155, %c0_156, %c0_157] : memref<2x128x256xbf16, #tpu.memory_space<vmem>>, vector<1x128x256xbf16>
    %352 = vector.shape_cast %351 : vector<1x128x256xbf16> to vector<128x256xbf16>
    %cst_158 = arith.constant dense<0.000000e+00> : vector<4x256xf32>
    %353 = tpu.matmul %350, %352, %cst_158 {dimension_numbers = #tpu.dot_dimension_numbers<[1], [0], [0], [1], [0, 0, 1, 1], [], []>} : vector<4x128xbf16>, vector<128x256xbf16>, vector<4x256xf32> -> vector<4x256xf32>
    %c1_159 = arith.constant 1 : index
    %c0_160 = arith.constant 0 : index
    %c0_161 = arith.constant 0 : index
    %354 = vector.load %arg12[%c1_159, %c0_160, %c0_161] : memref<2x1x256xf32, #tpu.memory_space<vmem>>, vector<1x1x256xf32>
    %355 = vector.shape_cast %354 : vector<1x1x256xf32> to vector<1x256xf32>
    %356 = vector.broadcast %355 : vector<1x256xf32> to vector<4x256xf32>
    %357 = arith.addf %353, %356 : vector<4x256xf32>
    %cst_162 = arith.constant 5.000000e-01 : f32
    %358 = vector.broadcast %cst_162 : f32 to vector<4x256xf32>
    %359 = arith.mulf %358, %357 : vector<4x256xf32>
    %cst_163 = arith.constant 0.707106769 : f32
    %360 = vector.broadcast %cst_163 : f32 to vector<4x256xf32>
    %361 = arith.mulf %357, %360 : vector<4x256xf32>
    %362 = math.erf %361 : vector<4x256xf32>
    %cst_164 = arith.constant 1.000000e+00 : f32
    %363 = vector.broadcast %cst_164 : f32 to vector<4x256xf32>
    %364 = arith.addf %363, %362 : vector<4x256xf32>
    %365 = arith.mulf %359, %364 : vector<4x256xf32>
    %366 = arith.truncf %365 : vector<4x256xf32> to vector<4x256xbf16>
    %c1_165 = arith.constant 1 : index
    %c0_166 = arith.constant 0 : index
    %c0_167 = arith.constant 0 : index
    %367 = vector.load %arg13[%c1_165, %c0_166, %c0_167] : memref<2x256x128xbf16, #tpu.memory_space<vmem>>, vector<1x256x128xbf16>
    %368 = vector.shape_cast %367 : vector<1x256x128xbf16> to vector<256x128xbf16>
    %cst_168 = arith.constant dense<0.000000e+00> : vector<4x128xf32>
    %369 = tpu.matmul %366, %368, %cst_168 {dimension_numbers = #tpu.dot_dimension_numbers<[1], [0], [0], [1], [0, 0, 1, 1], [], []>} : vector<4x256xbf16>, vector<256x128xbf16>, vector<4x128xf32> -> vector<4x128xf32>
    %c1_169 = arith.constant 1 : index
    %c0_170 = arith.constant 0 : index
    %c0_171 = arith.constant 0 : index
    %370 = vector.load %arg14[%c1_169, %c0_170, %c0_171] : memref<2x1x128xf32, #tpu.memory_space<vmem>>, vector<1x1x128xf32>
    %371 = vector.shape_cast %370 : vector<1x1x128xf32> to vector<1x128xf32>
    %372 = vector.broadcast %371 : vector<1x128xf32> to vector<4x128xf32>
    %373 = arith.addf %369, %372 : vector<4x128xf32>
    %374 = arith.addf %349, %373 : vector<4x128xf32>
    %c1_172 = arith.constant 1 : index
    %c0_173 = arith.constant 0 : index
    %c0_174 = arith.constant 0 : index
    %375 = vector.load %arg17[%c1_172, %c0_173, %c0_174] : memref<2x1x128xf32, #tpu.memory_space<vmem>>, vector<1x1x128xf32>
    %376 = vector.shape_cast %375 : vector<1x1x128xf32> to vector<1x128xf32>
    %c1_175 = arith.constant 1 : index
    %c0_176 = arith.constant 0 : index
    %c0_177 = arith.constant 0 : index
    %377 = vector.load %arg18[%c1_175, %c0_176, %c0_177] : memref<2x1x128xf32, #tpu.memory_space<vmem>>, vector<1x1x128xf32>
    %378 = vector.shape_cast %377 : vector<1x1x128xf32> to vector<1x128xf32>
    %cst_178 = arith.constant dense<0.000000e+00> : vector<4xf32>
    %379 = vector.multi_reduction <add>, %374, %cst_178 [1] : vector<4x128xf32> to vector<4xf32>
    %380 = vector.shape_cast %379 : vector<4xf32> to vector<4x1xf32>
    %cst_179 = arith.constant 1.280000e+02 : f32
    %381 = vector.broadcast %cst_179 : f32 to vector<4x1xf32>
    %382 = arith.divf %380, %381 : vector<4x1xf32>
    %383 = vector.broadcast %382 : vector<4x1xf32> to vector<4x128xf32>
    %384 = arith.subf %374, %383 : vector<4x128xf32>
    %385 = arith.mulf %384, %384 : vector<4x128xf32>
    %cst_180 = arith.constant dense<0.000000e+00> : vector<4xf32>
    %386 = vector.multi_reduction <add>, %385, %cst_180 [1] : vector<4x128xf32> to vector<4xf32>
    %387 = vector.shape_cast %386 : vector<4xf32> to vector<4x1xf32>
    %cst_181 = arith.constant 1.280000e+02 : f32
    %388 = vector.broadcast %cst_181 : f32 to vector<4x1xf32>
    %389 = arith.divf %387, %388 : vector<4x1xf32>
    %cst_182 = arith.constant 9.99999974E-6 : f32
    %390 = vector.broadcast %cst_182 : f32 to vector<4x1xf32>
    %391 = arith.addf %389, %390 : vector<4x1xf32>
    %392 = math.rsqrt %391 : vector<4x1xf32>
    %393 = vector.broadcast %392 : vector<4x1xf32> to vector<4x128xf32>
    %394 = arith.mulf %384, %393 : vector<4x128xf32>
    %395 = vector.broadcast %376 : vector<1x128xf32> to vector<4x128xf32>
    %396 = arith.mulf %394, %395 : vector<4x128xf32>
    %397 = vector.broadcast %378 : vector<1x128xf32> to vector<4x128xf32>
    %398 = arith.addf %396, %397 : vector<4x128xf32>
    %c0_183 = arith.constant 0 : index
    %c0_184 = arith.constant 0 : index
    %c0_185 = arith.constant 0 : index
    %399 = vector.load %arg19[%c0_183, %c0_184, %c0_185] : memref<1x4x128xf32, #tpu.memory_space<vmem>>, vector<1x4x128xf32>
    %400 = vector.shape_cast %399 : vector<1x4x128xf32> to vector<4x128xf32>
    %401 = vector.shape_cast %398 : vector<4x128xf32> to vector<1x4x128xf32>
    tpu.vector_store %arg19[%c0_183, %c0_184, %c0_185], %401 {strides = array<i32>} : memref<1x4x128xf32, #tpu.memory_space<vmem>>, vector<1x4x128xf32>,
    return
  }
  func.func @transform_0(%arg0: i32) -> (i32, i32, i32) {
    %c0_i32 = arith.constant 0 : i32
    %c0_i32_0 = arith.constant 0 : i32
    %c0_i32_1 = arith.constant 0 : i32
    return %arg0, %c0_i32, %c0_i32_0 : i32, i32, i32
  }
  func.func @transform_1(%arg0: i32) -> (i32, i32, i32) {
    %c0_i32 = arith.constant 0 : i32
    %c0_i32_0 = arith.constant 0 : i32
    %c0_i32_1 = arith.constant 0 : i32
    return %arg0, %c0_i32, %c0_i32_0 : i32, i32, i32
  }
  func.func @transform_2(%arg0: i32) -> (i32, i32) {
    %c0_i32 = arith.constant 0 : i32
    %c0_i32_0 = arith.constant 0 : i32
    %c0_i32_1 = arith.constant 0 : i32
    return %c0_i32, %c0_i32_0 : i32, i32
  }
  func.func @transform_3(%arg0: i32) -> (i32, i32) {
    %c0_i32 = arith.constant 0 : i32
    %c0_i32_0 = arith.constant 0 : i32
    %c0_i32_1 = arith.constant 0 : i32
    return %c0_i32, %c0_i32_0 : i32, i32
  }
  func.func @transform_4(%arg0: i32) -> (i32, i32) {
    %c0_i32 = arith.constant 0 : i32
    %c0_i32_0 = arith.constant 0 : i32
    %c0_i32_1 = arith.constant 0 : i32
    return %c0_i32, %c0_i32_0 : i32, i32
  }
  func.func @transform_5(%arg0: i32) -> (i32, i32) {
    %c0_i32 = arith.constant 0 : i32
    %c0_i32_0 = arith.constant 0 : i32
    %c0_i32_1 = arith.constant 0 : i32
    return %c0_i32, %c0_i32_0 : i32, i32
  }
  func.func @transform_6(%arg0: i32) -> (i32, i32, i32) {
    %c0_i32 = arith.constant 0 : i32
    %c0_i32_0 = arith.constant 0 : i32
    %c0_i32_1 = arith.constant 0 : i32
    %c0_i32_2 = arith.constant 0 : i32
    return %c0_i32, %c0_i32_0, %c0_i32_1 : i32, i32, i32
  }
  func.func @transform_7(%arg0: i32) -> (i32, i32, i32) {
    %c0_i32 = arith.constant 0 : i32
    %c0_i32_0 = arith.constant 0 : i32
    %c0_i32_1 = arith.constant 0 : i32
    %c0_i32_2 = arith.constant 0 : i32
    return %c0_i32, %c0_i32_0, %c0_i32_1 : i32, i32, i32
  }
  func.func @transform_8(%arg0: i32) -> (i32, i32, i32, i32) {
    %c0_i32 = arith.constant 0 : i32
    %c0_i32_0 = arith.constant 0 : i32
    %c0_i32_1 = arith.constant 0 : i32
    %c0_i32_2 = arith.constant 0 : i32
    %c0_i32_3 = arith.constant 0 : i32
    return %c0_i32, %c0_i32_0, %c0_i32_1, %c0_i32_2 : i32, i32, i32, i32
  }
  func.func @transform_9(%arg0: i32) -> (i32, i32, i32) {
    %c0_i32 = arith.constant 0 : i32
    %c0_i32_0 = arith.constant 0 : i32
    %c0_i32_1 = arith.constant 0 : i32
    %c0_i32_2 = arith.constant 0 : i32
    return %c0_i32, %c0_i32_0, %c0_i32_1 : i32, i32, i32
  }
  func.func @transform_10(%arg0: i32) -> (i32, i32, i32) {
    %c0_i32 = arith.constant 0 : i32
    %c0_i32_0 = arith.constant 0 : i32
    %c0_i32_1 = arith.constant 0 : i32
    %c0_i32_2 = arith.constant 0 : i32
    return %c0_i32, %c0_i32_0, %c0_i32_1 : i32, i32, i32
  }
  func.func @transform_11(%arg0: i32) -> (i32, i32, i32) {
    %c0_i32 = arith.constant 0 : i32
    %c0_i32_0 = arith.constant 0 : i32
    %c0_i32_1 = arith.constant 0 : i32
    %c0_i32_2 = arith.constant 0 : i32
    return %c0_i32, %c0_i32_0, %c0_i32_1 : i32, i32, i32
  }
  func.func @transform_12(%arg0: i32) -> (i32, i32, i32) {
    %c0_i32 = arith.constant 0 : i32
    %c0_i32_0 = arith.constant 0 : i32
    %c0_i32_1 = arith.constant 0 : i32
    %c0_i32_2 = arith.constant 0 : i32
    return %c0_i32, %c0_i32_0, %c0_i32_1 : i32, i32, i32
  }
  func.func @transform_13(%arg0: i32) -> (i32, i32, i32) {
    %c0_i32 = arith.constant 0 : i32
    %c0_i32_0 = arith.constant 0 : i32
    %c0_i32_1 = arith.constant 0 : i32
    %c0_i32_2 = arith.constant 0 : i32
    return %c0_i32, %c0_i32_0, %c0_i32_1 : i32, i32, i32
  }
  func.func @transform_14(%arg0: i32) -> (i32, i32, i32) {
    %c0_i32 = arith.constant 0 : i32
    %c0_i32_0 = arith.constant 0 : i32
    %c0_i32_1 = arith.constant 0 : i32
    %c0_i32_2 = arith.constant 0 : i32
    return %c0_i32, %c0_i32_0, %c0_i32_1 : i32, i32, i32
  }
  func.func @transform_15(%arg0: i32) -> (i32, i32, i32) {
    %c0_i32 = arith.constant 0 : i32
    %c0_i32_0 = arith.constant 0 : i32
    %c0_i32_1 = arith.constant 0 : i32
    %c0_i32_2 = arith.constant 0 : i32
    return %c0_i32, %c0_i32_0, %c0_i32_1 : i32, i32, i32
  }
  func.func @transform_16(%arg0: i32) -> (i32, i32, i32) {
    %c0_i32 = arith.constant 0 : i32
    %c0_i32_0 = arith.constant 0 : i32
    %c0_i32_1 = arith.constant 0 : i32
    %c0_i32_2 = arith.constant 0 : i32
    return %c0_i32, %c0_i32_0, %c0_i32_1 : i32, i32, i32
  }
  func.func @transform_17(%arg0: i32) -> (i32, i32, i32) {
    %c0_i32 = arith.constant 0 : i32
    %c0_i32_0 = arith.constant 0 : i32
    %c0_i32_1 = arith.constant 0 : i32
    %c0_i32_2 = arith.constant 0 : i32
    return %c0_i32, %c0_i32_0, %c0_i32_1 : i32, i32, i32
  }
  func.func @transform_18(%arg0: i32) -> (i32, i32, i32) {
    %c0_i32 = arith.constant 0 : i32
    %c0_i32_0 = arith.constant 0 : i32
    %c0_i32_1 = arith.constant 0 : i32
    return %arg0, %c0_i32, %c0_i32_0 : i32, i32, i32
  }
}

</mosaic_0001>

<llo_original>
// kernel: encoder_transformer_forward.1
$region0: #{encoder_transformer_forward.1}
  #allocation0 [shape = 'u32[]', space=smem, size = 0x4, offset = 0x4, fixed_abs, tag = 'smem constant byte address 0x4 - core index']
  #allocation1 [shape = 'u32[144,128]{1,0:T(1,128)}', space=vmem, size = 0x12000, scoped, tag = 'internal scratch']
  %s0 = inlined_call_operand.vmem [shape: bf16[2,40,135], index: 0, kind: input, shape index: {}]
  %s1 = inlined_call_operand.vmem [shape: f32[2,1,40], index: 1, kind: input, shape index: {}]
  %s2 = inlined_call_operand.vmem [shape: bf16[135,128], index: 2, kind: input, shape index: {}]
  %s3 = inlined_call_operand.vmem [shape: f32[40,128], index: 3, kind: input, shape index: {}]
  %s4 = inlined_call_operand.vmem [shape: f32[40,1], index: 4, kind: input, shape index: {}]
  %s5 = inlined_call_operand.vmem [shape: f32[1,40], index: 5, kind: input, shape index: {}]
  %s6 = inlined_call_operand.vmem [shape: bf16[2,128,384], index: 6, kind: input, shape index: {}]
  %s7 = inlined_call_operand.vmem [shape: f32[2,1,384], index: 7, kind: input, shape index: {}]
  %s8 = inlined_call_operand.vmem [shape: bf16[2,4,32,128], index: 8, kind: input, shape index: {}]
  %s9 = inlined_call_operand.vmem [shape: f32[2,1,128], index: 9, kind: input, shape index: {}]
  %s10 = inlined_call_operand.vmem [shape: bf16[2,128,256], index: 10, kind: input, shape index: {}]
  %s11 = inlined_call_operand.vmem [shape: f32[2,1,256], index: 11, kind: input, shape index: {}]
  %s12 = inlined_call_operand.vmem [shape: bf16[2,256,128], index: 12, kind: input, shape index: {}]
  %s13 = inlined_call_operand.vmem [shape: f32[2,1,128], index: 13, kind: input, shape index: {}]
  %s14 = inlined_call_operand.vmem [shape: f32[2,1,128], index: 14, kind: input, shape index: {}]
  %s15 = inlined_call_operand.vmem [shape: f32[2,1,128], index: 15, kind: input, shape index: {}]
  %s16 = inlined_call_operand.vmem [shape: f32[2,1,128], index: 16, kind: input, shape index: {}]
  %s17 = inlined_call_operand.vmem [shape: f32[2,1,128], index: 17, kind: input, shape index: {}]
  %s18 = inlined_call_operand.hbm [shape: f32[2,4,128], index: 18, kind: output, shape index: {}]
  %s19 = sld [smem:[#allocation0]]
  $region105: #{encoder_transformer_forward.1} parent=0
    _
  %s21 = ssub.s32 1, %s19
  %s22 = scalar_select 0, %s21, %s19
  $region1: #{encoder_transformer_forward.1} parent=0
    #allocation2 [shape = 'u8[4096]{0}', space=vmem, size = 0x1000, scoped, tag = 'output window, operand 0']
    #allocation3 [shape = 's32[2]{0}', space=sflag, size = 0x8, scoped, tag = 'scoped memory for encoder_transformer_forward.1']
    %23 = vsyncpa [#allocation3], 0
    %s24 = scalar_lea.sflag [#allocation3], 1
    %25 = vsyncpa %s24, 0
    loop: start=0, step=1, limit=4
    $region2: #{encoder_transformer_forward.1} parent=1 // loop_pre_header
      _
    $region3: #{encoder_transformer_forward.1} parent=1 // loop_header
      %s27 = sphi 0, %s31
      %p28 = scmp.ge.s32.totalorder %s27, 4
      %s37 = sphi 0, %s39
      %s40 = sphi 0, %s37
      %s41 = sphi 0, %s40
      %s57 = sphi 0, %s41
      %s63 = sphi 0, %s65
      %s66 = sphi 0, %s63
      %s67 = sphi 0, %s66
      %s83 = sphi 0, %s67
      %s87 = sphi 0, %s87
      %s89 = sphi 0, %s87
      %s90 = sphi 0, %s89
      %s104 = sphi 0, %s90
      %s108 = sphi 0, %s108
      %s110 = sphi 0, %s108
      %s111 = sphi 0, %s110
      %s125 = sphi 0, %s111
      %s129 = sphi 0, %s129
      %s131 = sphi 0, %s129
      %s132 = sphi 0, %s131
      %s146 = sphi 0, %s132
      %s150 = sphi 0, %s150
      %s152 = sphi 0, %s150
      %s153 = sphi 0, %s152
      %s167 = sphi 0, %s153
      %s171 = sphi 0, %s171
      %s173 = sphi 0, %s171
      %s174 = sphi 0, %s173
      %s188 = sphi 0, %s174
      %s192 = sphi 0, %s192
      %s194 = sphi 0, %s192
      %s195 = sphi 0, %s194
      %s209 = sphi 0, %s195
      %s213 = sphi 0, %s213
      %s215 = sphi 0, %s213
      %s216 = sphi 0, %s215
      %s230 = sphi 0, %s216
      %s234 = sphi 0, %s234
      %s236 = sphi 0, %s234
      %s237 = sphi 0, %s236
      %s251 = sphi 0, %s237
      %s255 = sphi 0, %s255
      %s257 = sphi 0, %s255
      %s258 = sphi 0, %s257
      %s272 = sphi 0, %s258
      %s276 = sphi 0, %s276
      %s278 = sphi 0, %s276
      %s279 = sphi 0, %s278
      %s293 = sphi 0, %s279
      %s297 = sphi 0, %s297
      %s299 = sphi 0, %s297
      %s300 = sphi 0, %s299
      %s314 = sphi 0, %s300
      %s318 = sphi 0, %s318
      %s320 = sphi 0, %s318
      %s321 = sphi 0, %s320
      %s335 = sphi 0, %s321
      %s339 = sphi 0, %s339
      %s341 = sphi 0, %s339
      %s342 = sphi 0, %s341
      %s356 = sphi 0, %s342
      %s360 = sphi 0, %s360
      %s362 = sphi 0, %s360
      %s363 = sphi 0, %s362
      %s377 = sphi 0, %s363
      %s381 = sphi 0, %s381
      %s383 = sphi 0, %s381
      %s384 = sphi 0, %s383
      %s398 = sphi 0, %s384
      %s402 = sphi 0, %s402
      %s404 = sphi 0, %s402
      %s405 = sphi 0, %s404
      %s419 = sphi 0, %s405
      %s425 = sphi 0, %s427
      %s428 = sphi 0, %s425
      %s429 = sphi 0, %s428
      %s445 = sphi 0, %s429
    $region4: #{encoder_transformer_forward.1} parent=1 // loop_header_branch
      %30 = sbr.rel (%p28) target = $region8
    $region5: #{encoder_transformer_forward.1} parent=1 // loop_body
      %s32 = ssub.s32 %s27, 1
      %s33 = ssub.s32 %s27, 2
      %s34 = sadd.s32 %s27, 1
      %s35 = ssub.s32 %s27, %s34
      %p36 = scmp.eq.s32.totalorder %s35, 0
      %s38 = sadd.s32 %s37, 1
      %s39 = scalar_select %p36, %s37, %s38
      %p42 = pneg %p36
      %p43 = scmp.eq.s32.totalorder %s27, 1
      %p44 = por %p42, %p43
      %p45 = scmp.ne.s32.totalorder %s37, %s40
      %p46 = scmp.eq.s32.totalorder %s27, 0
      %p47 = por %p45, %p46
      %p48 = scmp.ne.s32.totalorder %s37, %s40
      %p49 = scmp.eq.s32.totalorder %s32, 1
      %p50 = por %p48, %p49
      %p51 = scmp.ne.s32.totalorder %s40, %s41
      %p52 = scmp.eq.s32.totalorder %s32, 0
      %p53 = por %p51, %p52
      %p54 = scmp.ne.s32.totalorder %s40, %s41
      %p55 = scmp.eq.s32.totalorder %s33, 1
      %p56 = por %p54, %p55
      %p58 = scmp.ne.s32.totalorder %s41, %s57
      %p59 = scmp.eq.s32.totalorder %s33, 0
      %p60 = por %p58, %p59
      %s61 = ssub.s32 %s27, %s34
      %p62 = scmp.eq.s32.totalorder %s61, 0
      %s64 = sadd.s32 %s63, 1
      %s65 = scalar_select %p62, %s63, %s64
      %p68 = pneg %p62
      %p69 = scmp.eq.s32.totalorder %s27, 1
      %p70 = por %p68, %p69
      %p71 = scmp.ne.s32.totalorder %s63, %s66
      %p72 = scmp.eq.s32.totalorder %s27, 0
      %p73 = por %p71, %p72
      %p74 = scmp.ne.s32.totalorder %s63, %s66
      %p75 = scmp.eq.s32.totalorder %s32, 1
      %p76 = por %p74, %p75
      %p77 = scmp.ne.s32.totalorder %s66, %s67
      %p78 = scmp.eq.s32.totalorder %s32, 0
      %p79 = por %p77, %p78
      %p80 = scmp.ne.s32.totalorder %s66, %s67
      %p81 = scmp.eq.s32.totalorder %s33, 1
      %p82 = por %p80, %p81
      %p84 = scmp.ne.s32.totalorder %s67, %s83
      %p85 = scmp.eq.s32.totalorder %s33, 0
      %p86 = por %p84, %p85
      %s88 = sadd.s32 %s87, 1
      %p91 = scmp.eq.s32.totalorder %s27, 1
      %p92 = scmp.ne.s32.totalorder %s87, %s89
      %p93 = scmp.eq.s32.totalorder %s27, 0
      %p94 = por %p92, %p93
      %p95 = scmp.ne.s32.totalorder %s87, %s89
      %p96 = scmp.eq.s32.totalorder %s32, 1
      %p97 = por %p95, %p96
      %p98 = scmp.ne.s32.totalorder %s89, %s90
      %p99 = scmp.eq.s32.totalorder %s32, 0
      %p100 = por %p98, %p99
      %p101 = scmp.ne.s32.totalorder %s89, %s90
      %p102 = scmp.eq.s32.totalorder %s33, 1
      %p103 = por %p101, %p102
      %p105 = scmp.ne.s32.totalorder %s90, %s104
      %p106 = scmp.eq.s32.totalorder %s33, 0
      %p107 = por %p105, %p106
      %s109 = sadd.s32 %s108, 1
      %p112 = scmp.eq.s32.totalorder %s27, 1
      %p113 = scmp.ne.s32.totalorder %s108, %s110
      %p114 = scmp.eq.s32.totalorder %s27, 0
      %p115 = por %p113, %p114
      %p116 = scmp.ne.s32.totalorder %s108, %s110
      %p117 = scmp.eq.s32.totalorder %s32, 1
      %p118 = por %p116, %p117
      %p119 = scmp.ne.s32.totalorder %s110, %s111
      %p120 = scmp.eq.s32.totalorder %s32, 0
      %p121 = por %p119, %p120
      %p122 = scmp.ne.s32.totalorder %s110, %s111
      %p123 = scmp.eq.s32.totalorder %s33, 1
      %p124 = por %p122, %p123
      %p126 = scmp.ne.s32.totalorder %s111, %s125
      %p127 = scmp.eq.s32.totalorder %s33, 0
      %p128 = por %p126, %p127
      %s130 = sadd.s32 %s129, 1
      %p133 = scmp.eq.s32.totalorder %s27, 1
      %p134 = scmp.ne.s32.totalorder %s129, %s131
      %p135 = scmp.eq.s32.totalorder %s27, 0
      %p136 = por %p134, %p135
      %p137 = scmp.ne.s32.totalorder %s129, %s131
      %p138 = scmp.eq.s32.totalorder %s32, 1
      %p139 = por %p137, %p138
      %p140 = scmp.ne.s32.totalorder %s131, %s132
      %p141 = scmp.eq.s32.totalorder %s32, 0
      %p142 = por %p140, %p141
      %p143 = scmp.ne.s32.totalorder %s131, %s132
      %p144 = scmp.eq.s32.totalorder %s33, 1
      %p145 = por %p143, %p144
      %p147 = scmp.ne.s32.totalorder %s132, %s146
      %p148 = scmp.eq.s32.totalorder %s33, 0
      %p149 = por %p147, %p148
      %s151 = sadd.s32 %s150, 1
      %p154 = scmp.eq.s32.totalorder %s27, 1
      %p155 = scmp.ne.s32.totalorder %s150, %s152
      %p156 = scmp.eq.s32.totalorder %s27, 0
      %p157 = por %p155, %p156
      %p158 = scmp.ne.s32.totalorder %s150, %s152
      %p159 = scmp.eq.s32.totalorder %s32, 1
      %p160 = por %p158, %p159
      %p161 = scmp.ne.s32.totalorder %s152, %s153
      %p162 = scmp.eq.s32.totalorder %s32, 0
      %p163 = por %p161, %p162
      %p164 = scmp.ne.s32.totalorder %s152, %s153
      %p165 = scmp.eq.s32.totalorder %s33, 1
      %p166 = por %p164, %p165
      %p168 = scmp.ne.s32.totalorder %s153, %s167
      %p169 = scmp.eq.s32.totalorder %s33, 0
      %p170 = por %p168, %p169
      %s172 = sadd.s32 %s171, 1
      %p175 = scmp.eq.s32.totalorder %s27, 1
      %p176 = scmp.ne.s32.totalorder %s171, %s173
      %p177 = scmp.eq.s32.totalorder %s27, 0
      %p178 = por %p176, %p177
      %p179 = scmp.ne.s32.totalorder %s171, %s173
      %p180 = scmp.eq.s32.totalorder %s32, 1
      %p181 = por %p179, %p180
      %p182 = scmp.ne.s32.totalorder %s173, %s174
      %p183 = scmp.eq.s32.totalorder %s32, 0
      %p184 = por %p182, %p183
      %p185 = scmp.ne.s32.totalorder %s173, %s174
      %p186 = scmp.eq.s32.totalorder %s33, 1
      %p187 = por %p185, %p186
      %p189 = scmp.ne.s32.totalorder %s174, %s188
      %p190 = scmp.eq.s32.totalorder %s33, 0
      %p191 = por %p189, %p190
      %s193 = sadd.s32 %s192, 1
      %p196 = scmp.eq.s32.totalorder %s27, 1
      %p197 = scmp.ne.s32.totalorder %s192, %s194
      %p198 = scmp.eq.s32.totalorder %s27, 0
      %p199 = por %p197, %p198
      %p200 = scmp.ne.s32.totalorder %s192, %s194
      %p201 = scmp.eq.s32.totalorder %s32, 1
      %p202 = por %p200, %p201
      %p203 = scmp.ne.s32.totalorder %s194, %s195
      %p204 = scmp.eq.s32.totalorder %s32, 0
      %p205 = por %p203, %p204
      %p206 = scmp.ne.s32.totalorder %s194, %s195
      %p207 = scmp.eq.s32.totalorder %s33, 1
      %p208 = por %p206, %p207
      %p210 = scmp.ne.s32.totalorder %s195, %s209
      %p211 = scmp.eq.s32.totalorder %s33, 0
      %p212 = por %p210, %p211
      %s214 = sadd.s32 %s213, 1
      %p217 = scmp.eq.s32.totalorder %s27, 1
      %p218 = scmp.ne.s32.totalorder %s213, %s215
      %p219 = scmp.eq.s32.totalorder %s27, 0
      %p220 = por %p218, %p219
      %p221 = scmp.ne.s32.totalorder %s213, %s215
      %p222 = scmp.eq.s32.totalorder %s32, 1
      %p223 = por %p221, %p222
      %p224 = scmp.ne.s32.totalorder %s215, %s216
      %p225 = scmp.eq.s32.totalorder %s32, 0
      %p226 = por %p224, %p225
      %p227 = scmp.ne.s32.totalorder %s215, %s216
      %p228 = scmp.eq.s32.totalorder %s33, 1
      %p229 = por %p227, %p228
      %p231 = scmp.ne.s32.totalorder %s216, %s230
      %p232 = scmp.eq.s32.totalorder %s33, 0
      %p233 = por %p231, %p232
      %s235 = sadd.s32 %s234, 1
      %p238 = scmp.eq.s32.totalorder %s27, 1
      %p239 = scmp.ne.s32.totalorder %s234, %s236
      %p240 = scmp.eq.s32.totalorder %s27, 0
      %p241 = por %p239, %p240
      %p242 = scmp.ne.s32.totalorder %s234, %s236
      %p243 = scmp.eq.s32.totalorder %s32, 1
      %p244 = por %p242, %p243
      %p245 = scmp.ne.s32.totalorder %s236, %s237
      %p246 = scmp.eq.s32.totalorder %s32, 0
      %p247 = por %p245, %p246
      %p248 = scmp.ne.s32.totalorder %s236, %s237
      %p249 = scmp.eq.s32.totalorder %s33, 1
      %p250 = por %p248, %p249
      %p252 = scmp.ne.s32.totalorder %s237, %s251
      %p253 = scmp.eq.s32.totalorder %s33, 0
      %p254 = por %p252, %p253
      %s256 = sadd.s32 %s255, 1
      %p259 = scmp.eq.s32.totalorder %s27, 1
      %p260 = scmp.ne.s32.totalorder %s255, %s257
      %p261 = scmp.eq.s32.totalorder %s27, 0
      %p262 = por %p260, %p261
      %p263 = scmp.ne.s32.totalorder %s255, %s257
      %p264 = scmp.eq.s32.totalorder %s32, 1
      %p265 = por %p263, %p264
      %p266 = scmp.ne.s32.totalorder %s257, %s258
      %p267 = scmp.eq.s32.totalorder %s32, 0
      %p268 = por %p266, %p267
      %p269 = scmp.ne.s32.totalorder %s257, %s258
      %p270 = scmp.eq.s32.totalorder %s33, 1
      %p271 = por %p269, %p270
      %p273 = scmp.ne.s32.totalorder %s258, %s272
      %p274 = scmp.eq.s32.totalorder %s33, 0
      %p275 = por %p273, %p274
      %s277 = sadd.s32 %s276, 1
      %p280 = scmp.eq.s32.totalorder %s27, 1
      %p281 = scmp.ne.s32.totalorder %s276, %s278
      %p282 = scmp.eq.s32.totalorder %s27, 0
      %p283 = por %p281, %p282
      %p284 = scmp.ne.s32.totalorder %s276, %s278
      %p285 = scmp.eq.s32.totalorder %s32, 1
      %p286 = por %p284, %p285
      %p287 = scmp.ne.s32.totalorder %s278, %s279
      %p288 = scmp.eq.s32.totalorder %s32, 0
      %p289 = por %p287, %p288
      %p290 = scmp.ne.s32.totalorder %s278, %s279
      %p291 = scmp.eq.s32.totalorder %s33, 1
      %p292 = por %p290, %p291
      %p294 = scmp.ne.s32.totalorder %s279, %s293
      %p295 = scmp.eq.s32.totalorder %s33, 0
      %p296 = por %p294, %p295
      %s298 = sadd.s32 %s297, 1
      %p301 = scmp.eq.s32.totalorder %s27, 1
      %p302 = scmp.ne.s32.totalorder %s297, %s299
      %p303 = scmp.eq.s32.totalorder %s27, 0
      %p304 = por %p302, %p303
      %p305 = scmp.ne.s32.totalorder %s297, %s299
      %p306 = scmp.eq.s32.totalorder %s32, 1
      %p307 = por %p305, %p306
      %p308 = scmp.ne.s32.totalorder %s299, %s300
      %p309 = scmp.eq.s32.totalorder %s32, 0
      %p310 = por %p308, %p309
      %p311 = scmp.ne.s32.totalorder %s299, %s300
      %p312 = scmp.eq.s32.totalorder %s33, 1
      %p313 = por %p311, %p312
      %p315 = scmp.ne.s32.totalorder %s300, %s314
      %p316 = scmp.eq.s32.totalorder %s33, 0
      %p317 = por %p315, %p316
      %s319 = sadd.s32 %s318, 1
      %p322 = scmp.eq.s32.totalorder %s27, 1
      %p323 = scmp.ne.s32.totalorder %s318, %s320
      %p324 = scmp.eq.s32.totalorder %s27, 0
      %p325 = por %p323, %p324
      %p326 = scmp.ne.s32.totalorder %s318, %s320
      %p327 = scmp.eq.s32.totalorder %s32, 1
      %p328 = por %p326, %p327
      %p329 = scmp.ne.s32.totalorder %s320, %s321
      %p330 = scmp.eq.s32.totalorder %s32, 0
      %p331 = por %p329, %p330
      %p332 = scmp.ne.s32.totalorder %s320, %s321
      %p333 = scmp.eq.s32.totalorder %s33, 1
      %p334 = por %p332, %p333
      %p336 = scmp.ne.s32.totalorder %s321, %s335
      %p337 = scmp.eq.s32.totalorder %s33, 0
      %p338 = por %p336, %p337
      %s340 = sadd.s32 %s339, 1
      %p343 = scmp.eq.s32.totalorder %s27, 1
      %p344 = scmp.ne.s32.totalorder %s339, %s341
      %p345 = scmp.eq.s32.totalorder %s27, 0
      %p346 = por %p344, %p345
      %p347 = scmp.ne.s32.totalorder %s339, %s341
      %p348 = scmp.eq.s32.totalorder %s32, 1
      %p349 = por %p347, %p348
      %p350 = scmp.ne.s32.totalorder %s341, %s342
      %p351 = scmp.eq.s32.totalorder %s32, 0
      %p352 = por %p350, %p351
      %p353 = scmp.ne.s32.totalorder %s341, %s342
      %p354 = scmp.eq.s32.totalorder %s33, 1
      %p355 = por %p353, %p354
      %p357 = scmp.ne.s32.totalorder %s342, %s356
      %p358 = scmp.eq.s32.totalorder %s33, 0
      %p359 = por %p357, %p358
      %s361 = sadd.s32 %s360, 1
      %p364 = scmp.eq.s32.totalorder %s27, 1
      %p365 = scmp.ne.s32.totalorder %s360, %s362
      %p366 = scmp.eq.s32.totalorder %s27, 0
      %p367 = por %p365, %p366
      %p368 = scmp.ne.s32.totalorder %s360, %s362
      %p369 = scmp.eq.s32.totalorder %s32, 1
      %p370 = por %p368, %p369
      %p371 = scmp.ne.s32.totalorder %s362, %s363
      %p372 = scmp.eq.s32.totalorder %s32, 0
      %p373 = por %p371, %p372
      %p374 = scmp.ne.s32.totalorder %s362, %s363
      %p375 = scmp.eq.s32.totalorder %s33, 1
      %p376 = por %p374, %p375
      %p378 = scmp.ne.s32.totalorder %s363, %s377
      %p379 = scmp.eq.s32.totalorder %s33, 0
      %p380 = por %p378, %p379
      %s382 = sadd.s32 %s381, 1
      %p385 = scmp.eq.s32.totalorder %s27, 1
      %p386 = scmp.ne.s32.totalorder %s381, %s383
      %p387 = scmp.eq.s32.totalorder %s27, 0
      %p388 = por %p386, %p387
      %p389 = scmp.ne.s32.totalorder %s381, %s383
      %p390 = scmp.eq.s32.totalorder %s32, 1
      %p391 = por %p389, %p390
      %p392 = scmp.ne.s32.totalorder %s383, %s384
      %p393 = scmp.eq.s32.totalorder %s32, 0
      %p394 = por %p392, %p393
      %p395 = scmp.ne.s32.totalorder %s383, %s384
      %p396 = scmp.eq.s32.totalorder %s33, 1
      %p397 = por %p395, %p396
      %p399 = scmp.ne.s32.totalorder %s384, %s398
      %p400 = scmp.eq.s32.totalorder %s33, 0
      %p401 = por %p399, %p400
      %s403 = sadd.s32 %s402, 1
      %p406 = scmp.eq.s32.totalorder %s27, 1
      %p407 = scmp.ne.s32.totalorder %s402, %s404
      %p408 = scmp.eq.s32.totalorder %s27, 0
      %p409 = por %p407, %p408
      %p410 = scmp.ne.s32.totalorder %s402, %s404
      %p411 = scmp.eq.s32.totalorder %s32, 1
      %p412 = por %p410, %p411
      %p413 = scmp.ne.s32.totalorder %s404, %s405
      %p414 = scmp.eq.s32.totalorder %s32, 0
      %p415 = por %p413, %p414
      %p416 = scmp.ne.s32.totalorder %s404, %s405
      %p417 = scmp.eq.s32.totalorder %s33, 1
      %p418 = por %p416, %p417
      %p420 = scmp.ne.s32.totalorder %s405, %s419
      %p421 = scmp.eq.s32.totalorder %s33, 0
      %p422 = por %p420, %p421
      %s423 = ssub.s32 %s27, %s34
      %p424 = scmp.eq.s32.totalorder %s423, 0
      %s426 = sadd.s32 %s425, 1
      %s427 = scalar_select %p424, %s425, %s426
      %p430 = pneg %p424
      %p431 = scmp.eq.s32.totalorder %s27, 1
      %p432 = por %p430, %p431
      %p433 = scmp.ne.s32.totalorder %s425, %s428
      %p434 = scmp.eq.s32.totalorder %s27, 0
      %p435 = por %p433, %p434
      %p436 = scmp.ne.s32.totalorder %s425, %s428
      %p437 = scmp.eq.s32.totalorder %s32, 1
      %p438 = por %p436, %p437
      %p439 = scmp.ne.s32.totalorder %s428, %s429
      %p440 = scmp.eq.s32.totalorder %s32, 0
      %p441 = por %p439, %p440
      %p442 = scmp.ne.s32.totalorder %s428, %s429
      %p443 = scmp.eq.s32.totalorder %s33, 1
      %p444 = por %p442, %p443
      %p446 = scmp.ne.s32.totalorder %s429, %s445
      %p447 = scmp.eq.s32.totalorder %s33, 0
      %p448 = por %p446, %p447
      %p449 = scmp.le.s32.totalorder 1, %s27
      %p450 = scmp.lt.s32.totalorder %s27, 3
      %p451 = pnand %p449, %p450
      %p452 = pneg %p451
      // Predicated region
      $region9: #{encoder_transformer_forward.1} parent=5 // pred_check
        _
      $region10: #{encoder_transformer_forward.1} parent=5 // pred_check_branch
        %454 = sbr.rel (%p451) target = $region12
      $region11: #{encoder_transformer_forward.1} parent=5 // pred_region
        %s455 = ssub.s32 %s27, 1
        // Predicated region
        $region13: #{encoder_transformer_forward.1} parent=11 // pred_check
          %p456 = pneg %p100
        $region14: #{encoder_transformer_forward.1} parent=11 // pred_check_branch
          %458 = sbr.rel (%p456) target = $region16
        $region15: #{encoder_transformer_forward.1} parent=11 // pred_region
          _
        $region16: #{encoder_transformer_forward.1} parent=11 // pred_fallthru
          _
        // Predicated region
        $region17: #{encoder_transformer_forward.1} parent=11 // pred_check
          %p459 = pneg %p121
        $region18: #{encoder_transformer_forward.1} parent=11 // pred_check_branch
          %461 = sbr.rel (%p459) target = $region20
        $region19: #{encoder_transformer_forward.1} parent=11 // pred_region
          _
        $region20: #{encoder_transformer_forward.1} parent=11 // pred_fallthru
          _
        // Predicated region
        $region21: #{encoder_transformer_forward.1} parent=11 // pred_check
          %p462 = pneg %p142
        $region22: #{encoder_transformer_forward.1} parent=11 // pred_check_branch
          %464 = sbr.rel (%p462) target = $region24
        $region23: #{encoder_transformer_forward.1} parent=11 // pred_region
          _
        $region24: #{encoder_transformer_forward.1} parent=11 // pred_fallthru
          _
        // Predicated region
        $region25: #{encoder_transformer_forward.1} parent=11 // pred_check
          %p465 = pneg %p163
        $region26: #{encoder_transformer_forward.1} parent=11 // pred_check_branch
          %467 = sbr.rel (%p465) target = $region28
        $region27: #{encoder_transformer_forward.1} parent=11 // pred_region
          _
        $region28: #{encoder_transformer_forward.1} parent=11 // pred_fallthru
          _
        // Predicated region
        $region29: #{encoder_transformer_forward.1} parent=11 // pred_check
          %p468 = pneg %p184
        $region30: #{encoder_transformer_forward.1} parent=11 // pred_check_branch
          %470 = sbr.rel (%p468) target = $region32
        $region31: #{encoder_transformer_forward.1} parent=11 // pred_region
          _
        $region32: #{encoder_transformer_forward.1} parent=11 // pred_fallthru
          _
        // Predicated region
        $region33: #{encoder_transformer_forward.1} parent=11 // pred_check
          %p471 = pneg %p205
        $region34: #{encoder_transformer_forward.1} parent=11 // pred_check_branch
          %473 = sbr.rel (%p471) target = $region36
        $region35: #{encoder_transformer_forward.1} parent=11 // pred_region
          _
        $region36: #{encoder_transformer_forward.1} parent=11 // pred_fallthru
          _
        // Predicated region
        $region37: #{encoder_transformer_forward.1} parent=11 // pred_check
          %p474 = pneg %p226
        $region38: #{encoder_transformer_forward.1} parent=11 // pred_check_branch
          %476 = sbr.rel (%p474) target = $region40
        $region39: #{encoder_transformer_forward.1} parent=11 // pred_region
          _
        $region40: #{encoder_transformer_forward.1} parent=11 // pred_fallthru
          _
        // Predicated region
        $region41: #{encoder_transformer_forward.1} parent=11 // pred_check
          %p477 = pneg %p247
        $region42: #{encoder_transformer_forward.1} parent=11 // pred_check_branch
          %479 = sbr.rel (%p477) target = $region44
        $region43: #{encoder_transformer_forward.1} parent=11 // pred_region
          _
        $region44: #{encoder_transformer_forward.1} parent=11 // pred_fallthru
          _
        // Predicated region
        $region45: #{encoder_transformer_forward.1} parent=11 // pred_check
          %p480 = pneg %p268
        $region46: #{encoder_transformer_forward.1} parent=11 // pred_check_branch
          %482 = sbr.rel (%p480) target = $region48
        $region47: #{encoder_transformer_forward.1} parent=11 // pred_region
          _
        $region48: #{encoder_transformer_forward.1} parent=11 // pred_fallthru
          _
        // Predicated region
        $region49: #{encoder_transformer_forward.1} parent=11 // pred_check
          %p483 = pneg %p289
        $region50: #{encoder_transformer_forward.1} parent=11 // pred_check_branch
          %485 = sbr.rel (%p483) target = $region52
        $region51: #{encoder_transformer_forward.1} parent=11 // pred_region
          _
        $region52: #{encoder_transformer_forward.1} parent=11 // pred_fallthru
          _
        // Predicated region
        $region53: #{encoder_transformer_forward.1} parent=11 // pred_check
          %p486 = pneg %p310
        $region54: #{encoder_transformer_forward.1} parent=11 // pred_check_branch
          %488 = sbr.rel (%p486) target = $region56
        $region55: #{encoder_transformer_forward.1} parent=11 // pred_region
          _
        $region56: #{encoder_transformer_forward.1} parent=11 // pred_fallthru
          _
        // Predicated region
        $region57: #{encoder_transformer_forward.1} parent=11 // pred_check
          %p489 = pneg %p331
        $region58: #{encoder_transformer_forward.1} parent=11 // pred_check_branch
          %491 = sbr.rel (%p489) target = $region60
        $region59: #{encoder_transformer_forward.1} parent=11 // pred_region
          _
        $region60: #{encoder_transformer_forward.1} parent=11 // pred_fallthru
          _
        // Predicated region
        $region61: #{encoder_transformer_forward.1} parent=11 // pred_check
          %p492 = pneg %p352
        $region62: #{encoder_transformer_forward.1} parent=11 // pred_check_branch
          %494 = sbr.rel (%p492) target = $region64
        $region63: #{encoder_transformer_forward.1} parent=11 // pred_region
          _
        $region64: #{encoder_transformer_forward.1} parent=11 // pred_fallthru
          _
        // Predicated region
        $region65: #{encoder_transformer_forward.1} parent=11 // pred_check
          %p495 = pneg %p373
        $region66: #{encoder_transformer_forward.1} parent=11 // pred_check_branch
          %497 = sbr.rel (%p495) target = $region68
        $region67: #{encoder_transformer_forward.1} parent=11 // pred_region
          _
        $region68: #{encoder_transformer_forward.1} parent=11 // pred_fallthru
          _
        // Predicated region
        $region69: #{encoder_transformer_forward.1} parent=11 // pred_check
          %p498 = pneg %p394
        $region70: #{encoder_transformer_forward.1} parent=11 // pred_check_branch
          %500 = sbr.rel (%p498) target = $region72
        $region71: #{encoder_transformer_forward.1} parent=11 // pred_region
          _
        $region72: #{encoder_transformer_forward.1} parent=11 // pred_fallthru
          _
        // Predicated region
        $region73: #{encoder_transformer_forward.1} parent=11 // pred_check
          %p501 = pneg %p415
        $region74: #{encoder_transformer_forward.1} parent=11 // pred_check_branch
          %503 = sbr.rel (%p501) target = $region76
        $region75: #{encoder_transformer_forward.1} parent=11 // pred_region
          _
        $region76: #{encoder_transformer_forward.1} parent=11 // pred_fallthru
          _
      $region12: #{encoder_transformer_forward.1} parent=5 // pred_fallthru
        _
      %p504 = scmp.lt.s32.totalorder %s27, 2
      // Predicated region
      $region77: #{encoder_transformer_forward.1} parent=5 // pred_check
        %p505 = pneg %p504
      $region78: #{encoder_transformer_forward.1} parent=5 // pred_check_branch
        %507 = sbr.rel (%p505) target = $region80
      $region79: #{encoder_transformer_forward.1} parent=5 // pred_region
        // Predicated region
        $region81: #{encoder_transformer_forward.1} parent=79 // pred_check
          %p508 = pneg %p47
        $region82: #{encoder_transformer_forward.1} parent=79 // pred_check_branch
          %510 = sbr.rel (%p508) target = $region84
        $region83: #{encoder_transformer_forward.1} parent=79 // pred_region
          %p511 = scmp.lt.s32.totalorder %s27, 1
          %s512 = scalar_select %p511, %s27, 1
          %s513 = smul.addr %s512, 10
          %s514 = smul.addr %s513, 4
          %s515 = scalar_lea.vmem %s0, %s514
        $region84: #{encoder_transformer_forward.1} parent=79 // pred_fallthru
          _
        // Predicated region
        $region85: #{encoder_transformer_forward.1} parent=79 // pred_check
          %p516 = pneg %p73
        $region86: #{encoder_transformer_forward.1} parent=79 // pred_check_branch
          %518 = sbr.rel (%p516) target = $region88
        $region87: #{encoder_transformer_forward.1} parent=79 // pred_region
          %p519 = scmp.lt.s32.totalorder %s27, 1
          %s520 = scalar_select %p519, %s27, 1
          %s521 = scalar_lea.vmem %s1, %s520
        $region88: #{encoder_transformer_forward.1} parent=79 // pred_fallthru
          _
      $region80: #{encoder_transformer_forward.1} parent=5 // pred_fallthru
        _
      %p522 = scmp.le.s32.totalorder 1, %s27
      %p523 = scmp.lt.s32.totalorder %s27, 3
      %p524 = pnand %p522, %p523
      %p525 = pneg %p524
      // Predicated region
      $region89: #{encoder_transformer_forward.1} parent=5 // pred_check
        _
      $region90: #{encoder_transformer_forward.1} parent=5 // pred_check_branch
        %527 = sbr.rel (%p524) target = $region92
      $region91: #{encoder_transformer_forward.1} parent=5 // pred_region
        %s528 = ssub.s32 %s27, 1
        %p529 = scmp.lt.s32.totalorder %s32, 1
        %s530 = scalar_select %p529, %s32, 1
        %s531 = smul.addr %s530, 10
        %s532 = smul.addr %s531, 4
        %s533 = scalar_lea.vmem %s0, %s532
        %p534 = pneg %p53
        %p535 = pneg %p50
        %p536 = scmp.lt.s32.totalorder %s32, 1
        %s537 = scalar_select %p536, %s32, 1
        %s538 = scalar_lea.vmem %s1, %s537
        %p539 = pneg %p79
        %p540 = pneg %p76
        %p541 = pneg %p100
        %p542 = pneg %p97
        %p543 = pneg %p121
        %p544 = pneg %p118
        %p545 = pneg %p142
        %p546 = pneg %p139
        %p547 = pneg %p163
        %p548 = pneg %p160
        %p549 = pneg %p184
        %p550 = pneg %p181
        %p551 = pneg %p205
        %p552 = pneg %p202
        %p553 = pneg %p226
        %p554 = pneg %p223
        %p555 = pneg %p247
        %p556 = pneg %p244
        %p557 = pneg %p268
        %p558 = pneg %p265
        %p559 = pneg %p289
        %p560 = pneg %p286
        %p561 = pneg %p310
        %p562 = pneg %p307
        %p563 = pneg %p331
        %p564 = pneg %p328
        %p565 = pneg %p352
        %p566 = pneg %p349
        %p567 = pneg %p373
        %p568 = pneg %p370
        %p569 = pneg %p394
        %p570 = pneg %p391
        %p571 = pneg %p415
        %p572 = pneg %p412
        %p573 = pneg %p441
        %p574 = pneg %p438
        %s575 = sand.u32 %s428, 1
        %s576 = scalar_lea.sflag [#allocation3], %s575
        %s577 = sand.u32 %s428, 1
        %s578 = smul.addr %s577, 4
        %s579 = scalar_lea.vmem [#allocation2], %s578
        %p580 = scmp.lt.s32.totalorder %s32, 1
        %s581 = scalar_select %p580, %s32, 1
        %s582 = smul.addr %s581, 10
        %s583 = smul.addr %s582, 4
        %s584 = scalar_lea.vmem %s0, %s583
        %p585 = scmp.lt.s32.totalorder %s32, 1
        %s586 = scalar_select %p585, %s32, 1
        %s587 = scalar_lea.vmem %s1, %s586
        %v589 = vld [vmem:[%s587] sm:$0x1]
        %v591 = vlaneseq
        %v592 = vshrl.u32 %v591, 7
        %v593 = vsub.s32 0, %v592
        %v594 = vrot.slane %v589, %v593
        %v596 = vld [vmem:[%s4] sm:$0xff]
        %v597 = vld [vmem:[%s4 + $0x8] sm:$0xff]
        %v598 = vld [vmem:[%s4 + $0x10] sm:$0xff]
        %v599 = vld [vmem:[%s4 + $0x18] sm:$0xff]
        %v600 = vld [vmem:[%s4 + $0x20] sm:$0xff]
        %v601 = vld [vmem:[%s5] sm:$0x1]
        %603 = vset.pattern.permute.xlu0 0
        %604 = vperm.xlu0 %603, %v596
        %v605 = vpop.permute.xlu0 %604
        %608 = vset.pattern.permute.xlu0 0
        %609 = vperm.xlu0 %608, %v597
        %v610 = vpop.permute.xlu0 %609
        %613 = vset.pattern.permute.xlu0 0
        %614 = vperm.xlu0 %613, %v598
        %v615 = vpop.permute.xlu0 %614
        %618 = vset.pattern.permute.xlu0 0
        %619 = vperm.xlu0 %618, %v599
        %v620 = vpop.permute.xlu0 %619
        %623 = vset.pattern.permute.xlu0 0
        %624 = vperm.xlu0 %623, %v600
        %v625 = vpop.permute.xlu0 %624
        %v628 = vlaneseq
        %v629 = vshrl.u32 %v628, 7
        %v630 = vsub.s32 0, %v629
        %v631 = vrot.slane %v601, %v630
        %vm633 = vcmp.eq.f32.partialorder %v605, %v631
        %vm634 = vcmp.eq.f32.partialorder %v610, %v631
        %vm635 = vcmp.eq.f32.partialorder %v615, %v631
        %vm636 = vcmp.eq.f32.partialorder %v620, %v631
        %vm637 = vcmp.eq.f32.partialorder %v625, %v631
        %v638 = vsel %vm633, %v594, -1e+30
        %v639 = vsel %vm634, %v594, -1e+30
        %v640 = vsel %vm635, %v594, -1e+30
        %v641 = vsel %vm636, %v594, -1e+30
        %v642 = vsel %vm637, %v594, -1e+30
        %v643 = vld [vmem:[%s584] sm:$0xff]
        %v644 = vld [vmem:[%s584 + $0x8] sm:$0xff]
        %v645 = vld [vmem:[%s584 + $0x10] sm:$0xff]
        %v646 = vld [vmem:[%s584 + $0x18] sm:$0xff]
        %v647 = vld [vmem:[%s584 + $0x20] sm:$0xff]
        %v648 = vld [vmem:[%s2] sm:$0xf]
        %v649 = vld [vmem:[%s2 + $0x4] sm:$0xf]
        %v650 = vld [vmem:[%s2 + $0x8] sm:$0xf]
        %v651 = vld [vmem:[%s2 + $0xc] sm:$0xf]
        %v652 = vld [vmem:[%s2 + $0x10] sm:$0xf]
        %v653 = vld [vmem:[%s2 + $0x14] sm:$0xf]
        %v654 = vld [vmem:[%s2 + $0x18] sm:$0xf]
        %v655 = vld [vmem:[%s2 + $0x1c] sm:$0xf]
        %v656 = vld [vmem:[%s2 + $0x20] sm:$0xf]
        %v657 = vld [vmem:[%s2 + $0x24] sm:$0xf]
        %v658 = vld [vmem:[%s2 + $0x28] sm:$0xf]
        %v659 = vld [vmem:[%s2 + $0x2c] sm:$0xf]
        %v660 = vld [vmem:[%s2 + $0x30] sm:$0xf]
        %v661 = vld [vmem:[%s2 + $0x34] sm:$0xf]
        %v662 = vld [vmem:[%s2 + $0x38] sm:$0xf]
        %v663 = vld [vmem:[%s2 + $0x3c] sm:$0xf]
        %v664 = vld [vmem:[%s2 + $0x40] sm:$0xf]
        %v665 = vld [vmem:[%s3] sm:$0xff]
        %v666 = vld [vmem:[%s3 + $0x8] sm:$0xff]
        %v667 = vld [vmem:[%s3 + $0x10] sm:$0xff]
        %v668 = vld [vmem:[%s3 + $0x18] sm:$0xff]
        %v669 = vld [vmem:[%s3 + $0x20] sm:$0xff]
        %v675 = vunpack.c.l.b16 %v643
        %v676 = vunpack.c.h.b16 %v643
        %v677 = vunpack.c.l.b16 %v644
        %v678 = vunpack.c.h.b16 %v644
        %v679 = vunpack.c.l.b16 %v645
        %v680 = vunpack.c.h.b16 %v645
        %v681 = vunpack.c.l.b16 %v646
        %v682 = vunpack.c.h.b16 %v646
        %v683 = vunpack.c.l.b16 %v647
        %v684 = vunpack.c.h.b16 %v647
        %v685 = vpack.c.b16 %v677, %v675
        %v686 = vpack.c.b16 %v678, %v676
        %v687 = vpack.c.b16 %v681, %v679
        %v688 = vpack.c.b16 %v682, %v680
        %v689 = vpack.c.b16 %v683, %v683
        %v690 = vpack.c.b16 %v684, %v684
        %v711 = vunpack.c.l.b16 %v648
        %v712 = vunpack.c.l.b16 %v649
        %v713 = vunpack.c.l.b16 %v650
        %v714 = vunpack.c.l.b16 %v651
        %v715 = vunpack.c.l.b16 %v652
        %v716 = vunpack.c.l.b16 %v653
        %v717 = vunpack.c.l.b16 %v654
        %v718 = vunpack.c.l.b16 %v655
        %v719 = vunpack.c.l.b16 %v656
        %v720 = vunpack.c.l.b16 %v657
        %v721 = vunpack.c.l.b16 %v658
        %v722 = vunpack.c.l.b16 %v659
        %v723 = vunpack.c.l.b16 %v660
        %v724 = vunpack.c.l.b16 %v661
        %v725 = vunpack.c.l.b16 %v662
        %v726 = vunpack.c.l.b16 %v663
        %v727 = vunpack.c.l.b16 %v664
        %v728 = vpack.c.b16 %v712, %v711
        %v729 = vpack.c.b16 %v714, %v713
        %v730 = vpack.c.b16 %v716, %v715
        %v731 = vpack.c.b16 %v718, %v717
        %v732 = vpack.c.b16 %v720, %v719
        %v733 = vpack.c.b16 %v722, %v721
        %v734 = vpack.c.b16 %v724, %v723
        %v735 = vpack.c.b16 %v726, %v725
        %v736 = vpack.c.b16 %v727, %v727
        %vm745 = vcmask 56320
        %v747 = vsel %vm745, %v686, 0
        %v750 = vsel %vm745, %v688, 0
        %v753 = vsel %vm745, %v690, 0
        %vm755 = vcmask 1042432
        %vm756 = vcmask 1043456
        %v757 = vsel %vm755, 4294967295, 65535
        %v758 = vsel %vm756, %v757, 0
        %v760 = vand.u32 %v736, %v758
        %762 = vmatprep.subr.bf16.mxu0 0
        %763 = vmatpush1.bf16.msra.mxu0 %v728
        %764 = vmatprep.subr.bf16.mxu0 0
        %765 = vmatpush1.bf16.msra.mxu0 %v729
        %766 = vmatprep.subr.bf16.mxu0 0
        %767 = vmatpush1.bf16.msra.mxu0 %v730
        %768 = vmatprep.subr.bf16.mxu0 0
        %769 = vmatpush1.bf16.msra.mxu0 %v731
        %770 = vmatprep.subr.bf16.mxu0 0
        %771 = vmatpush1.bf16.msra.mxu0 %v732
        %772 = vmatprep.subr.bf16.mxu0 0
        %773 = vmatpush1.bf16.msra.mxu0 %v733
        %774 = vmatprep.subr.bf16.mxu0 0
        %775 = vmatpush1.bf16.msra.mxu0 %v734
        %776 = vmatprep.subr.bf16.mxu0 0
        %777 = vmatpush1.bf16.msra.mxu0 %v735
        %778 = vmatprep.subr.bf16.mxu0 0
        %779 = vmatpush1.bf16.msra.mxu0 %v760
        %780 = vmatprep.subr.bf16.mxu0 0
        %781 = vmatpush1.bf16.msra.mxu0 0
        %782 = vmatprep.subr.bf16.mxu0 0
        %783 = vmatpush1.bf16.msra.mxu0 0
        %784 = vmatprep.subr.bf16.mxu0 0
        %785 = vmatpush1.bf16.msra.mxu0 0
        %786 = vmatprep.subr.bf16.mxu0 0
        %787 = vmatpush1.bf16.msra.mxu0 0
        %788 = vmatprep.subr.bf16.mxu0 0
        %789 = vmatpush1.bf16.msra.mxu0 0
        %790 = vmatprep.subr.bf16.mxu0 0
        %791 = vmatpush1.bf16.msra.mxu0 0
        %792 = vmatprep.subr.bf16.mxu0 0
        %793 = vmatpush1.bf16.msra.mxu0 0
        %794 = vmatprep.mubr.bf16.mxu0 %v747
        %795 = vmatmul.mubr.bf16.gmra.mrb[0].mxu0 %v685
        %v796 = vpop.f32.mrb[0].mxu0
        %v797 = vadd.f32 %v665, %v796
        %v798 = vpop.f32.mrb[0].mxu0
        %v799 = vpop.f32.mrb[0].mxu0
        %v800 = vadd.f32 %v666, %v799
        %v801 = vpop.f32.mrb[0].mxu0
        %802 = vmatprep.mubr.bf16.mxu0 %v750
        %803 = vmatmul.mubr.bf16.gmra.mrb[0].mxu0 %v687
        %v804 = vpop.f32.mrb[0].mxu0
        %v805 = vadd.f32 %v667, %v804
        %v806 = vpop.f32.mrb[0].mxu0
        %v807 = vpop.f32.mrb[0].mxu0
        %v808 = vadd.f32 %v668, %v807
        %v809 = vpop.f32.mrb[0].mxu0
        %810 = vmatprep.mubr.bf16.mxu0 %v753
        %811 = vmatmul.mubr.bf16.gmra.mrb[0].mxu0 %v689
        %v812 = vpop.f32.mrb[0].mxu0
        %v813 = vadd.f32 %v669, %v812
        %v814 = vpop.f32.mrb[0].mxu0
        %v815 = vpop.f32.mrb[0].mxu0
        %v816 = vpop.f32.mrb[0].mxu0
        %817 = vdwg.mxu0
        %v818 = vpack.c.bf16 %v800, %v797
        %v819 = vpack.c.bf16 %v808, %v805
        %v820 = vpack.c.bf16 %v813, %v813
        %v821 = vld [vmem:[%s6] sm:$0xff]
        %v822 = vld [vmem:[%s6 + $0x8] sm:$0xf]
        %v823 = vld [vmem:[%s6 + $0xc] sm:$0xff]
        %v824 = vld [vmem:[%s6 + $0x14] sm:$0xf]
        %v825 = vld [vmem:[%s6 + $0x18] sm:$0xff]
        %v826 = vld [vmem:[%s6 + $0x20] sm:$0xf]
        %v827 = vld [vmem:[%s6 + $0x24] sm:$0xff]
        %v828 = vld [vmem:[%s6 + $0x2c] sm:$0xf]
        %v829 = vld [vmem:[%s6 + $0x30] sm:$0xff]
        %v830 = vld [vmem:[%s6 + $0x38] sm:$0xf]
        %v831 = vld [vmem:[%s6 + $0x3c] sm:$0xff]
        %v832 = vld [vmem:[%s6 + $0x44] sm:$0xf]
        %v833 = vld [vmem:[%s6 + $0x48] sm:$0xff]
        %v834 = vld [vmem:[%s6 + $0x50] sm:$0xf]
        %v835 = vld [vmem:[%s6 + $0x54] sm:$0xff]
        %v836 = vld [vmem:[%s6 + $0x5c] sm:$0xf]
        %v837 = vld [vmem:[%s6 + $0x60] sm:$0xff]
        %v838 = vld [vmem:[%s6 + $0x68] sm:$0xf]
        %v839 = vld [vmem:[%s6 + $0x6c] sm:$0xff]
        %v840 = vld [vmem:[%s6 + $0x74] sm:$0xf]
        %v841 = vld [vmem:[%s6 + $0x78] sm:$0xff]
        %v842 = vld [vmem:[%s6 + $0x80] sm:$0xf]
        %v843 = vld [vmem:[%s6 + $0x84] sm:$0xff]
        %v844 = vld [vmem:[%s6 + $0x8c] sm:$0xf]
        %v845 = vld [vmem:[%s6 + $0x90] sm:$0xff]
        %v846 = vld [vmem:[%s6 + $0x98] sm:$0xf]
        %v847 = vld [vmem:[%s6 + $0x9c] sm:$0xff]
        %v848 = vld [vmem:[%s6 + $0xa4] sm:$0xf]
        %v849 = vld [vmem:[%s6 + $0xa8] sm:$0xff]
        %v850 = vld [vmem:[%s6 + $0xb0] sm:$0xf]
        %v851 = vld [vmem:[%s6 + $0xb4] sm:$0xff]
        %v852 = vld [vmem:[%s6 + $0xbc] sm:$0xf]
        %v853 = vld [vmem:[%s7] sm:$0x7]
        %v855 = vlaneseq
        %v856 = vshrl.u32 %v855, 7
        %v857 = vsub.s32 0, %v856
        %v858 = vrot.slane %v853, %v857
        %v859 = vlaneseq
        %v860 = vshrl.u32 %v859, 7
        %v861 = vsub.s32 1, %v860
        %v862 = vrot.slane %v853, %v861
        %v863 = vlaneseq
        %v864 = vshrl.u32 %v863, 7
        %v865 = vsub.s32 2, %v864
        %v866 = vrot.slane %v853, %v865
        %v902 = vunpack.c.l.b16 %v821
        %v903 = vunpack.c.h.b16 %v821
        %v904 = vunpack.c.l.b16 %v822
        %v905 = vunpack.c.l.b16 %v823
        %v906 = vunpack.c.h.b16 %v823
        %v907 = vunpack.c.l.b16 %v824
        %v908 = vunpack.c.l.b16 %v825
        %v909 = vunpack.c.h.b16 %v825
        %v910 = vunpack.c.l.b16 %v826
        %v911 = vunpack.c.l.b16 %v827
        %v912 = vunpack.c.h.b16 %v827
        %v913 = vunpack.c.l.b16 %v828
        %v914 = vunpack.c.l.b16 %v829
        %v915 = vunpack.c.h.b16 %v829
        %v916 = vunpack.c.l.b16 %v830
        %v917 = vunpack.c.l.b16 %v831
        %v918 = vunpack.c.h.b16 %v831
        %v919 = vunpack.c.l.b16 %v832
        %v920 = vunpack.c.l.b16 %v833
        %v921 = vunpack.c.h.b16 %v833
        %v922 = vunpack.c.l.b16 %v834
        %v923 = vunpack.c.l.b16 %v835
        %v924 = vunpack.c.h.b16 %v835
        %v925 = vunpack.c.l.b16 %v836
        %v926 = vunpack.c.l.b16 %v837
        %v927 = vunpack.c.h.b16 %v837
        %v928 = vunpack.c.l.b16 %v838
        %v929 = vunpack.c.l.b16 %v839
        %v930 = vunpack.c.h.b16 %v839
        %v931 = vunpack.c.l.b16 %v840
        %v932 = vunpack.c.l.b16 %v841
        %v933 = vunpack.c.h.b16 %v841
        %v934 = vunpack.c.l.b16 %v842
        %v935 = vunpack.c.l.b16 %v843
        %v936 = vunpack.c.h.b16 %v843
        %v937 = vunpack.c.l.b16 %v844
        %v938 = vunpack.c.l.b16 %v845
        %v939 = vunpack.c.h.b16 %v845
        %v940 = vunpack.c.l.b16 %v846
        %v941 = vunpack.c.l.b16 %v847
        %v942 = vunpack.c.h.b16 %v847
        %v943 = vunpack.c.l.b16 %v848
        %v944 = vunpack.c.l.b16 %v849
        %v945 = vunpack.c.h.b16 %v849
        %v946 = vunpack.c.l.b16 %v850
        %v947 = vunpack.c.l.b16 %v851
        %v948 = vunpack.c.h.b16 %v851
        %v949 = vunpack.c.l.b16 %v852
        %v950 = vpack.c.b16 %v905, %v902
        %v951 = vpack.c.b16 %v906, %v903
        %v952 = vpack.c.b16 %v907, %v904
        %v953 = vpack.c.b16 %v911, %v908
        %v954 = vpack.c.b16 %v912, %v909
        %v955 = vpack.c.b16 %v913, %v910
        %v956 = vpack.c.b16 %v917, %v914
        %v957 = vpack.c.b16 %v918, %v915
        %v958 = vpack.c.b16 %v919, %v916
        %v959 = vpack.c.b16 %v923, %v920
        %v960 = vpack.c.b16 %v924, %v921
        %v961 = vpack.c.b16 %v925, %v922
        %v962 = vpack.c.b16 %v929, %v926
        %v963 = vpack.c.b16 %v930, %v927
        %v964 = vpack.c.b16 %v931, %v928
        %v965 = vpack.c.b16 %v935, %v932
        %v966 = vpack.c.b16 %v936, %v933
        %v967 = vpack.c.b16 %v937, %v934
        %v968 = vpack.c.b16 %v941, %v938
        %v969 = vpack.c.b16 %v942, %v939
        %v970 = vpack.c.b16 %v943, %v940
        %v971 = vpack.c.b16 %v947, %v944
        %v972 = vpack.c.b16 %v948, %v945
        %v973 = vpack.c.b16 %v949, %v946
        %998 = vmatprep.subr.bf16.mxu0 %v951
        %999 = vmatpush1.bf16.msra.mxu0 %v950
        %1000 = vmatprep.subr.bf16.mxu0 %v954
        %1001 = vmatpush1.bf16.msra.mxu0 %v953
        %1002 = vmatprep.subr.bf16.mxu0 %v957
        %1003 = vmatpush1.bf16.msra.mxu0 %v956
        %1004 = vmatprep.subr.bf16.mxu0 %v960
        %1005 = vmatpush1.bf16.msra.mxu0 %v959
        %1006 = vmatprep.subr.bf16.mxu0 %v963
        %1007 = vmatpush1.bf16.msra.mxu0 %v962
        %1008 = vmatprep.subr.bf16.mxu0 %v966
        %1009 = vmatpush1.bf16.msra.mxu0 %v965
        %1010 = vmatprep.subr.bf16.mxu0 %v969
        %1011 = vmatpush1.bf16.msra.mxu0 %v968
        %1012 = vmatprep.subr.bf16.mxu0 %v972
        %1013 = vmatpush1.bf16.msra.mxu0 %v971
        %1014 = vmatprep.subr.bf16.mxu0 0
        %1015 = vmatpush1.bf16.msra.mxu0 0
        %1016 = vmatprep.subr.bf16.mxu0 0
        %1017 = vmatpush1.bf16.msra.mxu0 0
        %1018 = vmatprep.subr.bf16.mxu0 0
        %1019 = vmatpush1.bf16.msra.mxu0 0
        %1020 = vmatprep.subr.bf16.mxu0 0
        %1021 = vmatpush1.bf16.msra.mxu0 0
        %1022 = vmatprep.subr.bf16.mxu0 0
        %1023 = vmatpush1.bf16.msra.mxu0 0
        %1024 = vmatprep.subr.bf16.mxu0 0
        %1025 = vmatpush1.bf16.msra.mxu0 0
        %1026 = vmatprep.subr.bf16.mxu0 0
        %1027 = vmatpush1.bf16.msra.mxu0 0
        %1028 = vmatprep.subr.bf16.mxu0 0
        %1029 = vmatpush1.bf16.msra.mxu0 0
        %1030 = vmatprep.mubr.bf16.mxu0 0
        %1031 = vmatmul.mubr.bf16.gmra.mrb[0].mxu0 %v818
        %v1032 = vpop.f32.mrb[0].mxu0
        %v1033 = vadd.f32 %v858, %v1032
        %v1034 = vpop.f32.mrb[0].mxu0
        %v1035 = vadd.f32 %v862, %v1034
        %v1036 = vpop.f32.mrb[0].mxu0
        %v1037 = vadd.f32 %v858, %v1036
        %v1038 = vpop.f32.mrb[0].mxu0
        %v1039 = vadd.f32 %v862, %v1038
        %1040 = vmatprep.mubr.bf16.mxu0 0
        %1041 = vmatmul.mubr.bf16.gmra.mrb[0].mxu0 %v819
        %v1042 = vpop.f32.mrb[0].mxu0
        %v1043 = vadd.f32 %v858, %v1042
        %v1044 = vpop.f32.mrb[0].mxu0
        %v1045 = vadd.f32 %v862, %v1044
        %v1046 = vpop.f32.mrb[0].mxu0
        %v1047 = vadd.f32 %v858, %v1046
        %v1048 = vpop.f32.mrb[0].mxu0
        %v1049 = vadd.f32 %v862, %v1048
        %1050 = vmatprep.mubr.bf16.mxu0 0
        %1051 = vmatmul.mubr.bf16.gmra.mrb[0].mxu0 %v820
        %v1052 = vpop.f32.mrb[0].mxu0
        %v1053 = vadd.f32 %v858, %v1052
        %v1054 = vpop.f32.mrb[0].mxu0
        %v1055 = vadd.f32 %v862, %v1054
        %v1056 = vpop.f32.mrb[0].mxu0
        %v1057 = vpop.f32.mrb[0].mxu0
        %1058 = vdwg.mxu0
        %1059 = vmatprep.subr.bf16.mxu0 0
        %1060 = vmatpush1.bf16.msra.mxu0 %v952
        %1061 = vmatprep.subr.bf16.mxu0 0
        %1062 = vmatpush1.bf16.msra.mxu0 %v955
        %1063 = vmatprep.subr.bf16.mxu0 0
        %1064 = vmatpush1.bf16.msra.mxu0 %v958
        %1065 = vmatprep.subr.bf16.mxu0 0
        %1066 = vmatpush1.bf16.msra.mxu0 %v961
        %1067 = vmatprep.subr.bf16.mxu0 0
        %1068 = vmatpush1.bf16.msra.mxu0 %v964
        %1069 = vmatprep.subr.bf16.mxu0 0
        %1070 = vmatpush1.bf16.msra.mxu0 %v967
        %1071 = vmatprep.subr.bf16.mxu0 0
        %1072 = vmatpush1.bf16.msra.mxu0 %v970
        %1073 = vmatprep.subr.bf16.mxu0 0
        %1074 = vmatpush1.bf16.msra.mxu0 %v973
        %1075 = vmatprep.subr.bf16.mxu0 0
        %1076 = vmatpush1.bf16.msra.mxu0 0
        %1077 = vmatprep.subr.bf16.mxu0 0
        %1078 = vmatpush1.bf16.msra.mxu0 0
        %1079 = vmatprep.subr.bf16.mxu0 0
        %1080 = vmatpush1.bf16.msra.mxu0 0
        %1081 = vmatprep.subr.bf16.mxu0 0
        %1082 = vmatpush1.bf16.msra.mxu0 0
        %1083 = vmatprep.subr.bf16.mxu0 0
        %1084 = vmatpush1.bf16.msra.mxu0 0
        %1085 = vmatprep.subr.bf16.mxu0 0
        %1086 = vmatpush1.bf16.msra.mxu0 0
        %1087 = vmatprep.subr.bf16.mxu0 0
        %1088 = vmatpush1.bf16.msra.mxu0 0
        %1089 = vmatprep.subr.bf16.mxu0 0
        %1090 = vmatpush1.bf16.msra.mxu0 0
        %1091 = vmatprep.mubr.bf16.mxu0 0
        %1092 = vmatmul.mubr.bf16.gmra.mrb[0].mxu0 %v818
        %v1093 = vpop.f32.mrb[0].mxu0
        %v1094 = vadd.f32 %v866, %v1093
        %v1095 = vpop.f32.mrb[0].mxu0
        %v1096 = vpop.f32.mrb[0].mxu0
        %v1097 = vadd.f32 %v866, %v1096
        %v1098 = vpop.f32.mrb[0].mxu0
        %1099 = vmatprep.mubr.bf16.mxu0 0
        %1100 = vmatmul.mubr.bf16.gmra.mrb[0].mxu0 %v819
        %v1101 = vpop.f32.mrb[0].mxu0
        %v1102 = vadd.f32 %v866, %v1101
        %v1103 = vpop.f32.mrb[0].mxu0
        %v1104 = vpop.f32.mrb[0].mxu0
        %v1105 = vadd.f32 %v866, %v1104
        %v1106 = vpop.f32.mrb[0].mxu0
        %1107 = vmatprep.mubr.bf16.mxu0 0
        %1108 = vmatmul.mubr.bf16.gmra.mrb[0].mxu0 %v820
        %v1109 = vpop.f32.mrb[0].mxu0
        %v1110 = vadd.f32 %v866, %v1109
        %v1111 = vpop.f32.mrb[0].mxu0
        %v1112 = vpop.f32.mrb[0].mxu0
        %v1113 = vpop.f32.mrb[0].mxu0
        %1114 = vdwg.mxu0
        %v1115 = vpack.c.bf16 %v1037, %v1033
        %v1116 = vpack.c.bf16 %v1047, %v1043
        %v1117 = vpack.c.bf16 %v1053, %v1053
        %v1118 = vpack.c.bf16 %v1039, %v1035
        %v1119 = vpack.c.bf16 %v1049, %v1045
        %v1120 = vpack.c.bf16 %v1055, %v1055
        %v1121 = vpack.c.bf16 %v1097, %v1094
        %v1122 = vpack.c.bf16 %v1105, %v1102
        %v1123 = vpack.c.bf16 %v1110, %v1110
        %vm1124 = vcmask 261120
        %v1126 = vsel %vm1124, %v1115, 0
        %v1129 = vsel %vm1124, %v1116, 0
        %v1132 = vsel %vm1124, %v1117, 0
        %v1135 = vsel %vm1124, %v1118, 0
        %v1138 = vsel %vm1124, %v1119, 0
        %v1141 = vsel %vm1124, %v1120, 0
        %1143 = vmatprep.subr.bf16.mxu0 0
        %1144 = vmatpush1.bf16.xpose.msra.mxu0 %v1135
        %1145 = vmatprep.subr.bf16.mxu0 0
        %1146 = vmatpush1.bf16.xpose.msra.mxu0 %v1138
        %1147 = vmatprep.subr.bf16.mxu0 0
        %1148 = vmatpush1.bf16.xpose.msra.mxu0 %v1141
        %1149 = vmatprep.subr.bf16.mxu0 0
        %1150 = vmatpush1.bf16.xpose.msra.mxu0 0
        %1151 = vmatprep.subr.bf16.mxu0 0
        %1152 = vmatpush1.bf16.xpose.msra.mxu0 0
        %1153 = vmatprep.subr.bf16.mxu0 0
        %1154 = vmatpush1.bf16.xpose.msra.mxu0 0
        %1155 = vmatprep.subr.bf16.mxu0 0
        %1156 = vmatpush1.bf16.xpose.msra.mxu0 0
        %1157 = vmatprep.subr.bf16.mxu0 0
        %1158 = vmatpush1.bf16.xpose.msra.mxu0 0
        %1159 = vmatprep.subr.bf16.mxu0 0
        %1160 = vmatpush1.bf16.xpose.msra.mxu0 0
        %1161 = vmatprep.subr.bf16.mxu0 0
        %1162 = vmatpush1.bf16.xpose.msra.mxu0 0
        %1163 = vmatprep.subr.bf16.mxu0 0
        %1164 = vmatpush1.bf16.xpose.msra.mxu0 0
        %1165 = vmatprep.subr.bf16.mxu0 0
        %1166 = vmatpush1.bf16.xpose.msra.mxu0 0
        %1167 = vmatprep.subr.bf16.mxu0 0
        %1168 = vmatpush1.bf16.xpose.msra.mxu0 0
        %1169 = vmatprep.subr.bf16.mxu0 0
        %1170 = vmatpush1.bf16.xpose.msra.mxu0 0
        %1171 = vmatprep.subr.bf16.mxu0 0
        %1172 = vmatpush1.bf16.xpose.msra.mxu0 0
        %1173 = vmatprep.subr.bf16.mxu0 0
        %1174 = vmatpush1.bf16.xpose.msra.mxu0 0
        %1175 = vmatprep.mubr.bf16.mxu0 0
        %1176 = vmatmul.mubr.bf16.gmra.mrb[0].mxu0 %v1126
        %v1177 = vpop.f32.mrb[0].mxu0
        %v1178 = vadd.f32 %v638, %v1177
        %v1179 = vpop.f32.mrb[0].mxu0
        %v1180 = vpop.f32.mrb[0].mxu0
        %v1181 = vadd.f32 %v639, %v1180
        %v1182 = vpop.f32.mrb[0].mxu0
        %1183 = vmatprep.mubr.bf16.mxu0 0
        %1184 = vmatmul.mubr.bf16.gmra.mrb[0].mxu0 %v1129
        %v1185 = vpop.f32.mrb[0].mxu0
        %v1186 = vadd.f32 %v640, %v1185
        %v1187 = vpop.f32.mrb[0].mxu0
        %v1188 = vpop.f32.mrb[0].mxu0
        %v1189 = vadd.f32 %v641, %v1188
        %v1190 = vpop.f32.mrb[0].mxu0
        %1191 = vmatprep.mubr.bf16.mxu0 0
        %1192 = vmatmul.mubr.bf16.gmra.mrb[0].mxu0 %v1132
        %v1193 = vpop.f32.mrb[0].mxu0
        %v1194 = vadd.f32 %v642, %v1193
        %v1195 = vpop.f32.mrb[0].mxu0
        %v1196 = vpop.f32.mrb[0].mxu0
        %v1197 = vpop.f32.mrb[0].mxu0
        %1198 = vdwg.mxu0
        %vm1199 = vcmask 326656
        %v1200 = vsel %vm1199, %v1178, -inf
        %1201 = vmax.xlane.f32.xlu0 %v1200
        %v1202 = vpop.xlane.xlu0 %1201
        %v1203 = vsel %vm1199, %v1181, -inf
        %1204 = vmax.xlane.f32.xlu0 %v1203
        %v1205 = vpop.xlane.xlu0 %1204
        %v1206 = vsel %vm1199, %v1186, -inf
        %1207 = vmax.xlane.f32.xlu0 %v1206
        %v1208 = vpop.xlane.xlu0 %1207
        %v1209 = vsel %vm1199, %v1189, -inf
        %1210 = vmax.xlane.f32.xlu0 %v1209
        %v1211 = vpop.xlane.xlu0 %1210
        %v1212 = vsel %vm1199, %v1194, -inf
        %1213 = vmax.xlane.f32.xlu0 %v1212
        %v1214 = vpop.xlane.xlu0 %1213
        %v1215 = vsub.f32 %v1178, %v1202
        %v1216 = vsub.f32 %v1181, %v1205
        %v1217 = vsub.f32 %v1186, %v1208
        %v1218 = vsub.f32 %v1189, %v1211
        %v1219 = vsub.f32 %v1194, %v1214
        %v1220 = vmul.f32 %v1215, 1.442695
        %v1221 = vpow.pop %v1220
        %v1222 = vmul.f32 %v1216, 1.442695
        %v1223 = vpow.pop %v1222
        %v1224 = vmul.f32 %v1217, 1.442695
        %v1225 = vpow.pop %v1224
        %v1226 = vmul.f32 %v1218, 1.442695
        %v1227 = vpow.pop %v1226
        %v1228 = vmul.f32 %v1219, 1.442695
        %v1229 = vpow.pop %v1228
        %v1230 = vsel %vm1199, %v1221, 0.0
        %1231 = vadd.xlane.f32.xlu0 %v1230
        %v1232 = vpop.xlane.xlu0 %1231
        %v1233 = vsel %vm1199, %v1223, 0.0
        %1234 = vadd.xlane.f32.xlu0 %v1233
        %v1235 = vpop.xlane.xlu0 %1234
        %v1236 = vsel %vm1199, %v1225, 0.0
        %1237 = vadd.xlane.f32.xlu0 %v1236
        %v1238 = vpop.xlane.xlu0 %1237
        %v1239 = vsel %vm1199, %v1227, 0.0
        %1240 = vadd.xlane.f32.xlu0 %v1239
        %v1241 = vpop.xlane.xlu0 %1240
        %v1242 = vsel %vm1199, %v1229, 0.0
        %1243 = vadd.xlane.f32.xlu0 %v1242
        %v1244 = vpop.xlane.xlu0 %1243
        %v1245 = vrcp.pop %v1232
        %v1246 = vrcp.pop %v1235
        %v1247 = vrcp.pop %v1238
        %v1248 = vrcp.pop %v1241
        %v1249 = vrcp.pop %v1244
        %v1250 = vmul.f32 %v1221, %v1245
        %v1251 = vmul.f32 %v1223, %v1246
        %v1252 = vmul.f32 %v1225, %v1247
        %v1253 = vmul.f32 %v1227, %v1248
        %v1254 = vmul.f32 %v1229, %v1249
        %v1255 = vpack.c.bf16 %v1251, %v1250
        %v1256 = vpack.c.bf16 %v1253, %v1252
        %v1257 = vpack.c.bf16 %v1254, %v1254
        %v1259 = vsel %vm1199, %v1255, 0
        %v1262 = vsel %vm1199, %v1256, 0
        %v1265 = vsel %vm1199, %v1257, 0
        %v1268 = vsel %vm756, %v1123, 0
        %1270 = vmatprep.subr.bf16.mxu0 0
        %1271 = vmatpush1.bf16.msra.mxu0 %v1121
        %1272 = vmatprep.subr.bf16.mxu0 0
        %1273 = vmatpush1.bf16.msra.mxu0 %v1122
        %1274 = vmatprep.subr.bf16.mxu0 0
        %1275 = vmatpush1.bf16.msra.mxu0 %v1268
        %1276 = vmatprep.subr.bf16.mxu0 0
        %1277 = vmatpush1.bf16.msra.mxu0 0
        %1278 = vmatprep.subr.bf16.mxu0 0
        %1279 = vmatpush1.bf16.msra.mxu0 0
        %1280 = vmatprep.subr.bf16.mxu0 0
        %1281 = vmatpush1.bf16.msra.mxu0 0
        %1282 = vmatprep.subr.bf16.mxu0 0
        %1283 = vmatpush1.bf16.msra.mxu0 0
        %1284 = vmatprep.subr.bf16.mxu0 0
        %1285 = vmatpush1.bf16.msra.mxu0 0
        %1286 = vmatprep.subr.bf16.mxu0 0
        %1287 = vmatpush1.bf16.msra.mxu0 0
        %1288 = vmatprep.subr.bf16.mxu0 0
        %1289 = vmatpush1.bf16.msra.mxu0 0
        %1290 = vmatprep.subr.bf16.mxu0 0
        %1291 = vmatpush1.bf16.msra.mxu0 0
        %1292 = vmatprep.subr.bf16.mxu0 0
        %1293 = vmatpush1.bf16.msra.mxu0 0
        %1294 = vmatprep.subr.bf16.mxu0 0
        %1295 = vmatpush1.bf16.msra.mxu0 0
        %1296 = vmatprep.subr.bf16.mxu0 0
        %1297 = vmatpush1.bf16.msra.mxu0 0
        %1298 = vmatprep.subr.bf16.mxu0 0
        %1299 = vmatpush1.bf16.msra.mxu0 0
        %1300 = vmatprep.subr.bf16.mxu0 0
        %1301 = vmatpush1.bf16.msra.mxu0 0
        %1302 = vmatprep.mubr.bf16.mxu0 0
        %1303 = vmatmul.mubr.bf16.gmra.mrb[0].mxu0 %v1259
        %v1304 = vpop.f32.mrb[0].mxu0
        %v1305 = vadd.f32 0.0, %v1304
        %v1306 = vpop.f32.mrb[0].mxu0
        %v1307 = vpop.f32.mrb[0].mxu0
        %v1308 = vadd.f32 0.0, %v1307
        %v1309 = vpop.f32.mrb[0].mxu0
        %1310 = vmatprep.mubr.bf16.mxu0 0
        %1311 = vmatmul.mubr.bf16.gmra.mrb[0].mxu0 %v1262
        %v1312 = vpop.f32.mrb[0].mxu0
        %v1313 = vadd.f32 0.0, %v1312
        %v1314 = vpop.f32.mrb[0].mxu0
        %v1315 = vpop.f32.mrb[0].mxu0
        %v1316 = vadd.f32 0.0, %v1315
        %v1317 = vpop.f32.mrb[0].mxu0
        %1318 = vmatprep.mubr.bf16.mxu0 0
        %1319 = vmatmul.mubr.bf16.gmra.mrb[0].mxu0 %v1265
        %v1320 = vpop.f32.mrb[0].mxu0
        %v1321 = vadd.f32 0.0, %v1320
        %v1322 = vpop.f32.mrb[0].mxu0
        %v1323 = vpop.f32.mrb[0].mxu0
        %v1324 = vpop.f32.mrb[0].mxu0
        %1325 = vdwg.mxu0
        %v1326 = vpack.c.bf16 %v1308, %v1305
        %v1327 = vpack.c.bf16 %v1316, %v1313
        %v1328 = vpack.c.bf16 %v1321, %v1321
        %v1329 = vld [vmem:[%s8] sm:$0xf]
        %v1330 = vld [vmem:[%s8 + $0x4] sm:$0xf]
        %v1331 = vld [vmem:[%s8 + $0x8] sm:$0xf]
        %v1332 = vld [vmem:[%s8 + $0xc] sm:$0xf]
        %1336 = vrot.lane.b32.xlu0 %v1115, 96
        %v1337 = vpop.permute.xlu0 %1336
        %1338 = vrot.lane.b32.xlu0 %v1116, 96
        %v1339 = vpop.permute.xlu0 %1338
        %1340 = vrot.lane.b32.xlu0 %v1117, 96
        %v1341 = vpop.permute.xlu0 %1340
        %1345 = vrot.lane.b32.xlu0 %v1118, 96
        %v1346 = vpop.permute.xlu0 %1345
        %1347 = vrot.lane.b32.xlu0 %v1119, 96
        %v1348 = vpop.permute.xlu0 %1347
        %1349 = vrot.lane.b32.xlu0 %v1120, 96
        %v1350 = vpop.permute.xlu0 %1349
        %v1352 = vsel %vm1124, %v1337, 0
        %v1355 = vsel %vm1124, %v1339, 0
        %v1358 = vsel %vm1124, %v1341, 0
        %v1361 = vsel %vm1124, %v1346, 0
        %v1364 = vsel %vm1124, %v1348, 0
        %v1367 = vsel %vm1124, %v1350, 0
        %1369 = vmatprep.subr.bf16.mxu0 0
        %1370 = vmatpush1.bf16.xpose.msra.mxu0 %v1361
        %1371 = vmatprep.subr.bf16.mxu0 0
        %1372 = vmatpush1.bf16.xpose.msra.mxu0 %v1364
        %1373 = vmatprep.subr.bf16.mxu0 0
        %1374 = vmatpush1.bf16.xpose.msra.mxu0 %v1367
        %1375 = vmatprep.subr.bf16.mxu0 0
        %1376 = vmatpush1.bf16.xpose.msra.mxu0 0
        %1377 = vmatprep.subr.bf16.mxu0 0
        %1378 = vmatpush1.bf16.xpose.msra.mxu0 0
        %1379 = vmatprep.subr.bf16.mxu0 0
        %1380 = vmatpush1.bf16.xpose.msra.mxu0 0
        %1381 = vmatprep.subr.bf16.mxu0 0
        %1382 = vmatpush1.bf16.xpose.msra.mxu0 0
        %1383 = vmatprep.subr.bf16.mxu0 0
        %1384 = vmatpush1.bf16.xpose.msra.mxu0 0
        %1385 = vmatprep.subr.bf16.mxu0 0
        %1386 = vmatpush1.bf16.xpose.msra.mxu0 0
        %1387 = vmatprep.subr.bf16.mxu0 0
        %1388 = vmatpush1.bf16.xpose.msra.mxu0 0
        %1389 = vmatprep.subr.bf16.mxu0 0
        %1390 = vmatpush1.bf16.xpose.msra.mxu0 0
        %1391 = vmatprep.subr.bf16.mxu0 0
        %1392 = vmatpush1.bf16.xpose.msra.mxu0 0
        %1393 = vmatprep.subr.bf16.mxu0 0
        %1394 = vmatpush1.bf16.xpose.msra.mxu0 0
        %1395 = vmatprep.subr.bf16.mxu0 0
        %1396 = vmatpush1.bf16.xpose.msra.mxu0 0
        %1397 = vmatprep.subr.bf16.mxu0 0
        %1398 = vmatpush1.bf16.xpose.msra.mxu0 0
        %1399 = vmatprep.subr.bf16.mxu0 0
        %1400 = vmatpush1.bf16.xpose.msra.mxu0 0
        %1401 = vmatprep.mubr.bf16.mxu0 0
        %1402 = vmatmul.mubr.bf16.gmra.mrb[0].mxu0 %v1352
        %v1403 = vpop.f32.mrb[0].mxu0
        %v1404 = vadd.f32 %v638, %v1403
        %v1405 = vpop.f32.mrb[0].mxu0
        %v1406 = vpop.f32.mrb[0].mxu0
        %v1407 = vadd.f32 %v639, %v1406
        %v1408 = vpop.f32.mrb[0].mxu0
        %1409 = vmatprep.mubr.bf16.mxu0 0
        %1410 = vmatmul.mubr.bf16.gmra.mrb[0].mxu0 %v1355
        %v1411 = vpop.f32.mrb[0].mxu0
        %v1412 = vadd.f32 %v640, %v1411
        %v1413 = vpop.f32.mrb[0].mxu0
        %v1414 = vpop.f32.mrb[0].mxu0
        %v1415 = vadd.f32 %v641, %v1414
        %v1416 = vpop.f32.mrb[0].mxu0
        %1417 = vmatprep.mubr.bf16.mxu0 0
        %1418 = vmatmul.mubr.bf16.gmra.mrb[0].mxu0 %v1358
        %v1419 = vpop.f32.mrb[0].mxu0
        %v1420 = vadd.f32 %v642, %v1419
        %v1421 = vpop.f32.mrb[0].mxu0
        %v1422 = vpop.f32.mrb[0].mxu0
        %v1423 = vpop.f32.mrb[0].mxu0
        %1424 = vdwg.mxu0
        %v1425 = vsel %vm1199, %v1404, -inf
        %1426 = vmax.xlane.f32.xlu0 %v1425
        %v1427 = vpop.xlane.xlu0 %1426
        %v1428 = vsel %vm1199, %v1407, -inf
        %1429 = vmax.xlane.f32.xlu0 %v1428
        %v1430 = vpop.xlane.xlu0 %1429
        %v1431 = vsel %vm1199, %v1412, -inf
        %1432 = vmax.xlane.f32.xlu0 %v1431
        %v1433 = vpop.xlane.xlu0 %1432
        %v1434 = vsel %vm1199, %v1415, -inf
        %1435 = vmax.xlane.f32.xlu0 %v1434
        %v1436 = vpop.xlane.xlu0 %1435
        %v1437 = vsel %vm1199, %v1420, -inf
        %1438 = vmax.xlane.f32.xlu0 %v1437
        %v1439 = vpop.xlane.xlu0 %1438
        %v1440 = vsub.f32 %v1404, %v1427
        %v1441 = vsub.f32 %v1407, %v1430
        %v1442 = vsub.f32 %v1412, %v1433
        %v1443 = vsub.f32 %v1415, %v1436
        %v1444 = vsub.f32 %v1420, %v1439
        %v1445 = vmul.f32 %v1440, 1.442695
        %v1446 = vpow.pop %v1445
        %v1447 = vmul.f32 %v1441, 1.442695
        %v1448 = vpow.pop %v1447
        %v1449 = vmul.f32 %v1442, 1.442695
        %v1450 = vpow.pop %v1449
        %v1451 = vmul.f32 %v1443, 1.442695
        %v1452 = vpow.pop %v1451
        %v1453 = vmul.f32 %v1444, 1.442695
        %v1454 = vpow.pop %v1453
        %v1455 = vsel %vm1199, %v1446, 0.0
        %1456 = vadd.xlane.f32.xlu0 %v1455
        %v1457 = vpop.xlane.xlu0 %1456
        %v1458 = vsel %vm1199, %v1448, 0.0
        %1459 = vadd.xlane.f32.xlu0 %v1458
        %v1460 = vpop.xlane.xlu0 %1459
        %v1461 = vsel %vm1199, %v1450, 0.0
        %1462 = vadd.xlane.f32.xlu0 %v1461
        %v1463 = vpop.xlane.xlu0 %1462
        %v1464 = vsel %vm1199, %v1452, 0.0
        %1465 = vadd.xlane.f32.xlu0 %v1464
        %v1466 = vpop.xlane.xlu0 %1465
        %v1467 = vsel %vm1199, %v1454, 0.0
        %1468 = vadd.xlane.f32.xlu0 %v1467
        %v1469 = vpop.xlane.xlu0 %1468
        %v1470 = vrcp.pop %v1457
        %v1471 = vrcp.pop %v1460
        %v1472 = vrcp.pop %v1463
        %v1473 = vrcp.pop %v1466
        %v1474 = vrcp.pop %v1469
        %v1475 = vmul.f32 %v1446, %v1470
        %v1476 = vmul.f32 %v1448, %v1471
        %v1477 = vmul.f32 %v1450, %v1472
        %v1478 = vmul.f32 %v1452, %v1473
        %v1479 = vmul.f32 %v1454, %v1474
        %v1480 = vpack.c.bf16 %v1476, %v1475
        %v1481 = vpack.c.bf16 %v1478, %v1477
        %v1482 = vpack.c.bf16 %v1479, %v1479
        %1486 = vrot.lane.b32.xlu0 %v1121, 96
        %v1487 = vpop.permute.xlu0 %1486
        %1488 = vrot.lane.b32.xlu0 %v1122, 96
        %v1489 = vpop.permute.xlu0 %1488
        %1490 = vrot.lane.b32.xlu0 %v1123, 96
        %v1491 = vpop.permute.xlu0 %1490
        %v1495 = vsel %vm1199, %v1480, 0
        %v1498 = vsel %vm1199, %v1481, 0
        %v1501 = vsel %vm1199, %v1482, 0
        %v1504 = vsel %vm756, %v1491, 0
        %1506 = vmatprep.subr.bf16.mxu0 0
        %1507 = vmatpush1.bf16.msra.mxu0 %v1487
        %1508 = vmatprep.subr.bf16.mxu0 0
        %1509 = vmatpush1.bf16.msra.mxu0 %v1489
        %1510 = vmatprep.subr.bf16.mxu0 0
        %1511 = vmatpush1.bf16.msra.mxu0 %v1504
        %1512 = vmatprep.subr.bf16.mxu0 0
        %1513 = vmatpush1.bf16.msra.mxu0 0
        %1514 = vmatprep.subr.bf16.mxu0 0
        %1515 = vmatpush1.bf16.msra.mxu0 0
        %1516 = vmatprep.subr.bf16.mxu0 0
        %1517 = vmatpush1.bf16.msra.mxu0 0
        %1518 = vmatprep.subr.bf16.mxu0 0
        %1519 = vmatpush1.bf16.msra.mxu0 0
        %1520 = vmatprep.subr.bf16.mxu0 0
        %1521 = vmatpush1.bf16.msra.mxu0 0
        %1522 = vmatprep.subr.bf16.mxu0 0
        %1523 = vmatpush1.bf16.msra.mxu0 0
        %1524 = vmatprep.subr.bf16.mxu0 0
        %1525 = vmatpush1.bf16.msra.mxu0 0
        %1526 = vmatprep.subr.bf16.mxu0 0
        %1527 = vmatpush1.bf16.msra.mxu0 0
        %1528 = vmatprep.subr.bf16.mxu0 0
        %1529 = vmatpush1.bf16.msra.mxu0 0
        %1530 = vmatprep.subr.bf16.mxu0 0
        %1531 = vmatpush1.bf16.msra.mxu0 0
        %1532 = vmatprep.subr.bf16.mxu0 0
        %1533 = vmatpush1.bf16.msra.mxu0 0
        %1534 = vmatprep.subr.bf16.mxu0 0
        %1535 = vmatpush1.bf16.msra.mxu0 0
        %1536 = vmatprep.subr.bf16.mxu0 0
        %1537 = vmatpush1.bf16.msra.mxu0 0
        %1538 = vmatprep.mubr.bf16.mxu0 0
        %1539 = vmatmul.mubr.bf16.gmra.mrb[0].mxu0 %v1495
        %v1540 = vpop.f32.mrb[0].mxu0
        %v1541 = vadd.f32 0.0, %v1540
        %v1542 = vpop.f32.mrb[0].mxu0
        %v1543 = vpop.f32.mrb[0].mxu0
        %v1544 = vadd.f32 0.0, %v1543
        %v1545 = vpop.f32.mrb[0].mxu0
        %1546 = vmatprep.mubr.bf16.mxu0 0
        %1547 = vmatmul.mubr.bf16.gmra.mrb[0].mxu0 %v1498
        %v1548 = vpop.f32.mrb[0].mxu0
        %v1549 = vadd.f32 0.0, %v1548
        %v1550 = vpop.f32.mrb[0].mxu0
        %v1551 = vpop.f32.mrb[0].mxu0
        %v1552 = vadd.f32 0.0, %v1551
        %v1553 = vpop.f32.mrb[0].mxu0
        %1554 = vmatprep.mubr.bf16.mxu0 0
        %1555 = vmatmul.mubr.bf16.gmra.mrb[0].mxu0 %v1501
        %v1556 = vpop.f32.mrb[0].mxu0
        %v1557 = vadd.f32 0.0, %v1556
        %v1558 = vpop.f32.mrb[0].mxu0
        %v1559 = vpop.f32.mrb[0].mxu0
        %v1560 = vpop.f32.mrb[0].mxu0
        %1561 = vdwg.mxu0
        %v1562 = vpack.c.bf16 %v1544, %v1541
        %v1563 = vpack.c.bf16 %v1552, %v1549
        %v1564 = vpack.c.bf16 %v1557, %v1557
        %s1565 = scalar_lea.vmem %s8, 16
        %v1566 = vld [vmem:[%s1565] sm:$0xf]
        %v1567 = vld [vmem:[%s1565 + $0x4] sm:$0xf]
        %v1568 = vld [vmem:[%s1565 + $0x8] sm:$0xf]
        %v1569 = vld [vmem:[%s1565 + $0xc] sm:$0xf]
        %v1574 = vunpack.c.l.b16 %v1566
        %v1575 = vunpack.c.l.b16 %v1567
        %v1576 = vunpack.c.l.b16 %v1568
        %v1577 = vunpack.c.l.b16 %v1569
        %v1578 = vpack.c.b16 %v1575, %v1574
        %v1579 = vpack.c.b16 %v1577, %v1576
        %v1583 = vsel %vm1124, %v1562, 0
        %v1586 = vsel %vm1124, %v1563, 0
        %v1589 = vsel %vm1124, %v1564, 0
        %1591 = vmatprep.subr.bf16.mxu0 0
        %1592 = vmatpush1.bf16.msra.mxu0 %v1578
        %1593 = vmatprep.subr.bf16.mxu0 0
        %1594 = vmatpush1.bf16.msra.mxu0 %v1579
        %1595 = vmatprep.subr.bf16.mxu0 0
        %1596 = vmatpush1.bf16.msra.mxu0 0
        %1597 = vmatprep.subr.bf16.mxu0 0
        %1598 = vmatpush1.bf16.msra.mxu0 0
        %1599 = vmatprep.subr.bf16.mxu0 0
        %1600 = vmatpush1.bf16.msra.mxu0 0
        %1601 = vmatprep.subr.bf16.mxu0 0
        %1602 = vmatpush1.bf16.msra.mxu0 0
        %1603 = vmatprep.subr.bf16.mxu0 0
        %1604 = vmatpush1.bf16.msra.mxu0 0
        %1605 = vmatprep.subr.bf16.mxu0 0
        %1606 = vmatpush1.bf16.msra.mxu0 0
        %1607 = vmatprep.subr.bf16.mxu0 0
        %1608 = vmatpush1.bf16.msra.mxu0 0
        %1609 = vmatprep.subr.bf16.mxu0 0
        %1610 = vmatpush1.bf16.msra.mxu0 0
        %1611 = vmatprep.subr.bf16.mxu0 0
        %1612 = vmatpush1.bf16.msra.mxu0 0
        %1613 = vmatprep.subr.bf16.mxu0 0
        %1614 = vmatpush1.bf16.msra.mxu0 0
        %1615 = vmatprep.subr.bf16.mxu0 0
        %1616 = vmatpush1.bf16.msra.mxu0 0
        %1617 = vmatprep.subr.bf16.mxu0 0
        %1618 = vmatpush1.bf16.msra.mxu0 0
        %1619 = vmatprep.subr.bf16.mxu0 0
        %1620 = vmatpush1.bf16.msra.mxu0 0
        %1621 = vmatprep.subr.bf16.mxu0 0
        %1622 = vmatpush1.bf16.msra.mxu0 0
        %1623 = vmatprep.mubr.bf16.mxu0 0
        %1624 = vmatmul.mubr.bf16.gmra.mrb[0].mxu0 %v1583
        %v1625 = vpop.f32.mrb[0].mxu0
        %v1626 = vadd.f32 0.0, %v1625
        %v1627 = vpop.f32.mrb[0].mxu0
        %v1628 = vpop.f32.mrb[0].mxu0
        %v1629 = vadd.f32 0.0, %v1628
        %v1630 = vpop.f32.mrb[0].mxu0
        %1631 = vmatprep.mubr.bf16.mxu0 0
        %1632 = vmatmul.mubr.bf16.gmra.mrb[0].mxu0 %v1586
        %v1633 = vpop.f32.mrb[0].mxu0
        %v1634 = vadd.f32 0.0, %v1633
        %v1635 = vpop.f32.mrb[0].mxu0
        %v1636 = vpop.f32.mrb[0].mxu0
        %v1637 = vadd.f32 0.0, %v1636
        %v1638 = vpop.f32.mrb[0].mxu0
        %1639 = vmatprep.mubr.bf16.mxu0 0
        %1640 = vmatmul.mubr.bf16.gmra.mrb[0].mxu0 %v1589
        %v1641 = vpop.f32.mrb[0].mxu0
        %v1642 = vadd.f32 0.0, %v1641
        %v1643 = vpop.f32.mrb[0].mxu0
        %v1644 = vpop.f32.mrb[0].mxu0
        %v1645 = vpop.f32.mrb[0].mxu0
        %1646 = vdwg.mxu0
        %v1651 = vunpack.c.l.b16 %v1329
        %v1652 = vunpack.c.l.b16 %v1330
        %v1653 = vunpack.c.l.b16 %v1331
        %v1654 = vunpack.c.l.b16 %v1332
        %v1655 = vpack.c.b16 %v1652, %v1651
        %v1656 = vpack.c.b16 %v1654, %v1653
        %v1660 = vsel %vm1124, %v1326, 0
        %v1663 = vsel %vm1124, %v1327, 0
        %v1666 = vsel %vm1124, %v1328, 0
        %1668 = vmatprep.subr.bf16.mxu0 0
        %1669 = vmatpush1.bf16.msra.mxu0 %v1655
        %1670 = vmatprep.subr.bf16.mxu0 0
        %1671 = vmatpush1.bf16.msra.mxu0 %v1656
        %1672 = vmatprep.subr.bf16.mxu0 0
        %1673 = vmatpush1.bf16.msra.mxu0 0
        %1674 = vmatprep.subr.bf16.mxu0 0
        %1675 = vmatpush1.bf16.msra.mxu0 0
        %1676 = vmatprep.subr.bf16.mxu0 0
        %1677 = vmatpush1.bf16.msra.mxu0 0
        %1678 = vmatprep.subr.bf16.mxu0 0
        %1679 = vmatpush1.bf16.msra.mxu0 0
        %1680 = vmatprep.subr.bf16.mxu0 0
        %1681 = vmatpush1.bf16.msra.mxu0 0
        %1682 = vmatprep.subr.bf16.mxu0 0
        %1683 = vmatpush1.bf16.msra.mxu0 0
        %1684 = vmatprep.subr.bf16.mxu0 0
        %1685 = vmatpush1.bf16.msra.mxu0 0
        %1686 = vmatprep.subr.bf16.mxu0 0
        %1687 = vmatpush1.bf16.msra.mxu0 0
        %1688 = vmatprep.subr.bf16.mxu0 0
        %1689 = vmatpush1.bf16.msra.mxu0 0
        %1690 = vmatprep.subr.bf16.mxu0 0
        %1691 = vmatpush1.bf16.msra.mxu0 0
        %1692 = vmatprep.subr.bf16.mxu0 0
        %1693 = vmatpush1.bf16.msra.mxu0 0
        %1694 = vmatprep.subr.bf16.mxu0 0
        %1695 = vmatpush1.bf16.msra.mxu0 0
        %1696 = vmatprep.subr.bf16.mxu0 0
        %1697 = vmatpush1.bf16.msra.mxu0 0
        %1698 = vmatprep.subr.bf16.mxu0 0
        %1699 = vmatpush1.bf16.msra.mxu0 0
        %1700 = vmatprep.mubr.bf16.mxu0 0
        %1701 = vmatmul.mubr.bf16.gmra.mrb[0].mxu0 %v1660
        %v1702 = vpop.f32.mrb[0].mxu0
        %v1703 = vadd.f32 %v1626, %v1702
        %v1704 = vpop.f32.mrb[0].mxu0
        %v1705 = vpop.f32.mrb[0].mxu0
        %v1706 = vadd.f32 %v1629, %v1705
        %v1707 = vpop.f32.mrb[0].mxu0
        %1708 = vmatprep.mubr.bf16.mxu0 0
        %1709 = vmatmul.mubr.bf16.gmra.mrb[0].mxu0 %v1663
        %v1710 = vpop.f32.mrb[0].mxu0
        %v1711 = vadd.f32 %v1634, %v1710
        %v1712 = vpop.f32.mrb[0].mxu0
        %v1713 = vpop.f32.mrb[0].mxu0
        %v1714 = vadd.f32 %v1637, %v1713
        %v1715 = vpop.f32.mrb[0].mxu0
        %1716 = vmatprep.mubr.bf16.mxu0 0
        %1717 = vmatmul.mubr.bf16.gmra.mrb[0].mxu0 %v1666
        %v1718 = vpop.f32.mrb[0].mxu0
        %v1719 = vadd.f32 %v1642, %v1718
        %v1720 = vpop.f32.mrb[0].mxu0
        %v1721 = vpop.f32.mrb[0].mxu0
        %v1722 = vpop.f32.mrb[0].mxu0
        %1723 = vdwg.mxu0
        %1724 = vrot.lane.b32.xlu0 %v1115, 64
        %v1725 = vpop.permute.xlu0 %1724
        %1726 = vrot.lane.b32.xlu0 %v1116, 64
        %v1727 = vpop.permute.xlu0 %1726
        %1728 = vrot.lane.b32.xlu0 %v1117, 64
        %v1729 = vpop.permute.xlu0 %1728
        %1730 = vrot.lane.b32.xlu0 %v1118, 64
        %v1731 = vpop.permute.xlu0 %1730
        %1732 = vrot.lane.b32.xlu0 %v1119, 64
        %v1733 = vpop.permute.xlu0 %1732
        %1734 = vrot.lane.b32.xlu0 %v1120, 64
        %v1735 = vpop.permute.xlu0 %1734
        %v1737 = vsel %vm1124, %v1725, 0
        %v1740 = vsel %vm1124, %v1727, 0
        %v1743 = vsel %vm1124, %v1729, 0
        %v1746 = vsel %vm1124, %v1731, 0
        %v1749 = vsel %vm1124, %v1733, 0
        %v1752 = vsel %vm1124, %v1735, 0
        %1754 = vmatprep.subr.bf16.mxu0 0
        %1755 = vmatpush1.bf16.xpose.msra.mxu0 %v1746
        %1756 = vmatprep.subr.bf16.mxu0 0
        %1757 = vmatpush1.bf16.xpose.msra.mxu0 %v1749
        %1758 = vmatprep.subr.bf16.mxu0 0
        %1759 = vmatpush1.bf16.xpose.msra.mxu0 %v1752
        %1760 = vmatprep.subr.bf16.mxu0 0
        %1761 = vmatpush1.bf16.xpose.msra.mxu0 0
        %1762 = vmatprep.subr.bf16.mxu0 0
        %1763 = vmatpush1.bf16.xpose.msra.mxu0 0
        %1764 = vmatprep.subr.bf16.mxu0 0
        %1765 = vmatpush1.bf16.xpose.msra.mxu0 0
        %1766 = vmatprep.subr.bf16.mxu0 0
        %1767 = vmatpush1.bf16.xpose.msra.mxu0 0
        %1768 = vmatprep.subr.bf16.mxu0 0
        %1769 = vmatpush1.bf16.xpose.msra.mxu0 0
        %1770 = vmatprep.subr.bf16.mxu0 0
        %1771 = vmatpush1.bf16.xpose.msra.mxu0 0
        %1772 = vmatprep.subr.bf16.mxu0 0
        %1773 = vmatpush1.bf16.xpose.msra.mxu0 0
        %1774 = vmatprep.subr.bf16.mxu0 0
        %1775 = vmatpush1.bf16.xpose.msra.mxu0 0
        %1776 = vmatprep.subr.bf16.mxu0 0
        %1777 = vmatpush1.bf16.xpose.msra.mxu0 0
        %1778 = vmatprep.subr.bf16.mxu0 0
        %1779 = vmatpush1.bf16.xpose.msra.mxu0 0
        %1780 = vmatprep.subr.bf16.mxu0 0
        %1781 = vmatpush1.bf16.xpose.msra.mxu0 0
        %1782 = vmatprep.subr.bf16.mxu0 0
        %1783 = vmatpush1.bf16.xpose.msra.mxu0 0
        %1784 = vmatprep.subr.bf16.mxu0 0
        %1785 = vmatpush1.bf16.xpose.msra.mxu0 0
        %1786 = vmatprep.mubr.bf16.mxu0 0
        %1787 = vmatmul.mubr.bf16.gmra.mrb[0].mxu0 %v1737
        %v1788 = vpop.f32.mrb[0].mxu0
        %v1789 = vadd.f32 %v638, %v1788
        %v1790 = vpop.f32.mrb[0].mxu0
        %v1791 = vpop.f32.mrb[0].mxu0
        %v1792 = vadd.f32 %v639, %v1791
        %v1793 = vpop.f32.mrb[0].mxu0
        %1794 = vmatprep.mubr.bf16.mxu0 0
        %1795 = vmatmul.mubr.bf16.gmra.mrb[0].mxu0 %v1740
        %v1796 = vpop.f32.mrb[0].mxu0
        %v1797 = vadd.f32 %v640, %v1796
        %v1798 = vpop.f32.mrb[0].mxu0
        %v1799 = vpop.f32.mrb[0].mxu0
        %v1800 = vadd.f32 %v641, %v1799
        %v1801 = vpop.f32.mrb[0].mxu0
        %1802 = vmatprep.mubr.bf16.mxu0 0
        %1803 = vmatmul.mubr.bf16.gmra.mrb[0].mxu0 %v1743
        %v1804 = vpop.f32.mrb[0].mxu0
        %v1805 = vadd.f32 %v642, %v1804
        %v1806 = vpop.f32.mrb[0].mxu0
        %v1807 = vpop.f32.mrb[0].mxu0
        %v1808 = vpop.f32.mrb[0].mxu0
        %1809 = vdwg.mxu0
        %v1810 = vsel %vm1199, %v1789, -inf
        %1811 = vmax.xlane.f32.xlu0 %v1810
        %v1812 = vpop.xlane.xlu0 %1811
        %v1813 = vsel %vm1199, %v1792, -inf
        %1814 = vmax.xlane.f32.xlu0 %v1813
        %v1815 = vpop.xlane.xlu0 %1814
        %v1816 = vsel %vm1199, %v1797, -inf
        %1817 = vmax.xlane.f32.xlu0 %v1816
        %v1818 = vpop.xlane.xlu0 %1817
        %v1819 = vsel %vm1199, %v1800, -inf
        %1820 = vmax.xlane.f32.xlu0 %v1819
        %v1821 = vpop.xlane.xlu0 %1820
        %v1822 = vsel %vm1199, %v1805, -inf
        %1823 = vmax.xlane.f32.xlu0 %v1822
        %v1824 = vpop.xlane.xlu0 %1823
        %v1825 = vsub.f32 %v1789, %v1812
        %v1826 = vsub.f32 %v1792, %v1815
        %v1827 = vsub.f32 %v1797, %v1818
        %v1828 = vsub.f32 %v1800, %v1821
        %v1829 = vsub.f32 %v1805, %v1824
        %v1830 = vmul.f32 %v1825, 1.442695
        %v1831 = vpow.pop %v1830
        %v1832 = vmul.f32 %v1826, 1.442695
        %v1833 = vpow.pop %v1832
        %v1834 = vmul.f32 %v1827, 1.442695
        %v1835 = vpow.pop %v1834
        %v1836 = vmul.f32 %v1828, 1.442695
        %v1837 = vpow.pop %v1836
        %v1838 = vmul.f32 %v1829, 1.442695
        %v1839 = vpow.pop %v1838
        %v1840 = vsel %vm1199, %v1831, 0.0
        %1841 = vadd.xlane.f32.xlu0 %v1840
        %v1842 = vpop.xlane.xlu0 %1841
        %v1843 = vsel %vm1199, %v1833, 0.0
        %1844 = vadd.xlane.f32.xlu0 %v1843
        %v1845 = vpop.xlane.xlu0 %1844
        %v1846 = vsel %vm1199, %v1835, 0.0
        %1847 = vadd.xlane.f32.xlu0 %v1846
        %v1848 = vpop.xlane.xlu0 %1847
        %v1849 = vsel %vm1199, %v1837, 0.0
        %1850 = vadd.xlane.f32.xlu0 %v1849
        %v1851 = vpop.xlane.xlu0 %1850
        %v1852 = vsel %vm1199, %v1839, 0.0
        %1853 = vadd.xlane.f32.xlu0 %v1852
        %v1854 = vpop.xlane.xlu0 %1853
        %v1855 = vrcp.pop %v1842
        %v1856 = vrcp.pop %v1845
        %v1857 = vrcp.pop %v1848
        %v1858 = vrcp.pop %v1851
        %v1859 = vrcp.pop %v1854
        %v1860 = vmul.f32 %v1831, %v1855
        %v1861 = vmul.f32 %v1833, %v1856
        %v1862 = vmul.f32 %v1835, %v1857
        %v1863 = vmul.f32 %v1837, %v1858
        %v1864 = vmul.f32 %v1839, %v1859
        %v1865 = vpack.c.bf16 %v1861, %v1860
        %v1866 = vpack.c.bf16 %v1863, %v1862
        %v1867 = vpack.c.bf16 %v1864, %v1864
        %1868 = vrot.lane.b32.xlu0 %v1121, 64
        %v1869 = vpop.permute.xlu0 %1868
        %1870 = vrot.lane.b32.xlu0 %v1122, 64
        %v1871 = vpop.permute.xlu0 %1870
        %1872 = vrot.lane.b32.xlu0 %v1123, 64
        %v1873 = vpop.permute.xlu0 %1872
        %v1877 = vsel %vm1199, %v1865, 0
        %v1880 = vsel %vm1199, %v1866, 0
        %v1883 = vsel %vm1199, %v1867, 0
        %v1886 = vsel %vm756, %v1873, 0
        %1888 = vmatprep.subr.bf16.mxu0 0
        %1889 = vmatpush1.bf16.msra.mxu0 %v1869
        %1890 = vmatprep.subr.bf16.mxu0 0
        %1891 = vmatpush1.bf16.msra.mxu0 %v1871
        %1892 = vmatprep.subr.bf16.mxu0 0
        %1893 = vmatpush1.bf16.msra.mxu0 %v1886
        %1894 = vmatprep.subr.bf16.mxu0 0
        %1895 = vmatpush1.bf16.msra.mxu0 0
        %1896 = vmatprep.subr.bf16.mxu0 0
        %1897 = vmatpush1.bf16.msra.mxu0 0
        %1898 = vmatprep.subr.bf16.mxu0 0
        %1899 = vmatpush1.bf16.msra.mxu0 0
        %1900 = vmatprep.subr.bf16.mxu0 0
        %1901 = vmatpush1.bf16.msra.mxu0 0
        %1902 = vmatprep.subr.bf16.mxu0 0
        %1903 = vmatpush1.bf16.msra.mxu0 0
        %1904 = vmatprep.subr.bf16.mxu0 0
        %1905 = vmatpush1.bf16.msra.mxu0 0
        %1906 = vmatprep.subr.bf16.mxu0 0
        %1907 = vmatpush1.bf16.msra.mxu0 0
        %1908 = vmatprep.subr.bf16.mxu0 0
        %1909 = vmatpush1.bf16.msra.mxu0 0
        %1910 = vmatprep.subr.bf16.mxu0 0
        %1911 = vmatpush1.bf16.msra.mxu0 0
        %1912 = vmatprep.subr.bf16.mxu0 0
        %1913 = vmatpush1.bf16.msra.mxu0 0
        %1914 = vmatprep.subr.bf16.mxu0 0
        %1915 = vmatpush1.bf16.msra.mxu0 0
        %1916 = vmatprep.subr.bf16.mxu0 0
        %1917 = vmatpush1.bf16.msra.mxu0 0
        %1918 = vmatprep.subr.bf16.mxu0 0
        %1919 = vmatpush1.bf16.msra.mxu0 0
        %1920 = vmatprep.mubr.bf16.mxu0 0
        %1921 = vmatmul.mubr.bf16.gmra.mrb[0].mxu0 %v1877
        %v1922 = vpop.f32.mrb[0].mxu0
        %v1923 = vadd.f32 0.0, %v1922
        %v1924 = vpop.f32.mrb[0].mxu0
        %v1925 = vpop.f32.mrb[0].mxu0
        %v1926 = vadd.f32 0.0, %v1925
        %v1927 = vpop.f32.mrb[0].mxu0
        %1928 = vmatprep.mubr.bf16.mxu0 0
        %1929 = vmatmul.mubr.bf16.gmra.mrb[0].mxu0 %v1880
        %v1930 = vpop.f32.mrb[0].mxu0
        %v1931 = vadd.f32 0.0, %v1930
        %v1932 = vpop.f32.mrb[0].mxu0
        %v1933 = vpop.f32.mrb[0].mxu0
        %v1934 = vadd.f32 0.0, %v1933
        %v1935 = vpop.f32.mrb[0].mxu0
        %1936 = vmatprep.mubr.bf16.mxu0 0
        %1937 = vmatmul.mubr.bf16.gmra.mrb[0].mxu0 %v1883
        %v1938 = vpop.f32.mrb[0].mxu0
        %v1939 = vadd.f32 0.0, %v1938
        %v1940 = vpop.f32.mrb[0].mxu0
        %v1941 = vpop.f32.mrb[0].mxu0
        %v1942 = vpop.f32.mrb[0].mxu0
        %1943 = vdwg.mxu0
        %v1944 = vpack.c.bf16 %v1926, %v1923
        %v1945 = vpack.c.bf16 %v1934, %v1931
        %v1946 = vpack.c.bf16 %v1939, %v1939
        %s1947 = scalar_lea.vmem %s8, 32
        %v1948 = vld [vmem:[%s1947] sm:$0xf]
        %v1949 = vld [vmem:[%s1947 + $0x4] sm:$0xf]
        %v1950 = vld [vmem:[%s1947 + $0x8] sm:$0xf]
        %v1951 = vld [vmem:[%s1947 + $0xc] sm:$0xf]
        %v1956 = vunpack.c.l.b16 %v1948
        %v1957 = vunpack.c.l.b16 %v1949
        %v1958 = vunpack.c.l.b16 %v1950
        %v1959 = vunpack.c.l.b16 %v1951
        %v1960 = vpack.c.b16 %v1957, %v1956
        %v1961 = vpack.c.b16 %v1959, %v1958
        %v1965 = vsel %vm1124, %v1944, 0
        %v1968 = vsel %vm1124, %v1945, 0
        %v1971 = vsel %vm1124, %v1946, 0
        %1973 = vmatprep.subr.bf16.mxu0 0
        %1974 = vmatpush1.bf16.msra.mxu0 %v1960
        %1975 = vmatprep.subr.bf16.mxu0 0
        %1976 = vmatpush1.bf16.msra.mxu0 %v1961
        %1977 = vmatprep.subr.bf16.mxu0 0
        %1978 = vmatpush1.bf16.msra.mxu0 0
        %1979 = vmatprep.subr.bf16.mxu0 0
        %1980 = vmatpush1.bf16.msra.mxu0 0
        %1981 = vmatprep.subr.bf16.mxu0 0
        %1982 = vmatpush1.bf16.msra.mxu0 0
        %1983 = vmatprep.subr.bf16.mxu0 0
        %1984 = vmatpush1.bf16.msra.mxu0 0
        %1985 = vmatprep.subr.bf16.mxu0 0
        %1986 = vmatpush1.bf16.msra.mxu0 0
        %1987 = vmatprep.subr.bf16.mxu0 0
        %1988 = vmatpush1.bf16.msra.mxu0 0
        %1989 = vmatprep.subr.bf16.mxu0 0
        %1990 = vmatpush1.bf16.msra.mxu0 0
        %1991 = vmatprep.subr.bf16.mxu0 0
        %1992 = vmatpush1.bf16.msra.mxu0 0
        %1993 = vmatprep.subr.bf16.mxu0 0
        %1994 = vmatpush1.bf16.msra.mxu0 0
        %1995 = vmatprep.subr.bf16.mxu0 0
        %1996 = vmatpush1.bf16.msra.mxu0 0
        %1997 = vmatprep.subr.bf16.mxu0 0
        %1998 = vmatpush1.bf16.msra.mxu0 0
        %1999 = vmatprep.subr.bf16.mxu0 0
        %2000 = vmatpush1.bf16.msra.mxu0 0
        %2001 = vmatprep.subr.bf16.mxu0 0
        %2002 = vmatpush1.bf16.msra.mxu0 0
        %2003 = vmatprep.subr.bf16.mxu0 0
        %2004 = vmatpush1.bf16.msra.mxu0 0
        %2005 = vmatprep.mubr.bf16.mxu0 0
        %2006 = vmatmul.mubr.bf16.gmra.mrb[0].mxu0 %v1965
        %v2007 = vpop.f32.mrb[0].mxu0
        %v2008 = vadd.f32 0.0, %v2007
        %v2009 = vpop.f32.mrb[0].mxu0
        %v2010 = vpop.f32.mrb[0].mxu0
        %v2011 = vadd.f32 0.0, %v2010
        %v2012 = vpop.f32.mrb[0].mxu0
        %2013 = vmatprep.mubr.bf16.mxu0 0
        %2014 = vmatmul.mubr.bf16.gmra.mrb[0].mxu0 %v1968
        %v2015 = vpop.f32.mrb[0].mxu0
        %v2016 = vadd.f32 0.0, %v2015
        %v2017 = vpop.f32.mrb[0].mxu0
        %v2018 = vpop.f32.mrb[0].mxu0
        %v2019 = vadd.f32 0.0, %v2018
        %v2020 = vpop.f32.mrb[0].mxu0
        %2021 = vmatprep.mubr.bf16.mxu0 0
        %2022 = vmatmul.mubr.bf16.gmra.mrb[0].mxu0 %v1971
        %v2023 = vpop.f32.mrb[0].mxu0
        %v2024 = vadd.f32 0.0, %v2023
        %v2025 = vpop.f32.mrb[0].mxu0
        %v2026 = vpop.f32.mrb[0].mxu0
        %v2027 = vpop.f32.mrb[0].mxu0
        %2028 = vdwg.mxu0
        %v2029 = vadd.f32 %v1703, %v2008
        %v2030 = vadd.f32 %v1706, %v2011
        %v2031 = vadd.f32 %v1711, %v2016
        %v2032 = vadd.f32 %v1714, %v2019
        %v2033 = vadd.f32 %v1719, %v2024
        %2034 = vrot.lane.b32.xlu0 %v1115, 32
        %v2035 = vpop.permute.xlu0 %2034
        %2036 = vrot.lane.b32.xlu0 %v1116, 32
        %v2037 = vpop.permute.xlu0 %2036
        %2038 = vrot.lane.b32.xlu0 %v1117, 32
        %v2039 = vpop.permute.xlu0 %2038
        %2040 = vrot.lane.b32.xlu0 %v1118, 32
        %v2041 = vpop.permute.xlu0 %2040
        %2042 = vrot.lane.b32.xlu0 %v1119, 32
        %v2043 = vpop.permute.xlu0 %2042
        %2044 = vrot.lane.b32.xlu0 %v1120, 32
        %v2045 = vpop.permute.xlu0 %2044
        %v2047 = vsel %vm1124, %v2035, 0
        %v2050 = vsel %vm1124, %v2037, 0
        %v2053 = vsel %vm1124, %v2039, 0
        %v2056 = vsel %vm1124, %v2041, 0
        %v2059 = vsel %vm1124, %v2043, 0
        %v2062 = vsel %vm1124, %v2045, 0
        %2064 = vmatprep.subr.bf16.mxu0 0
        %2065 = vmatpush1.bf16.xpose.msra.mxu0 %v2056
        %2066 = vmatprep.subr.bf16.mxu0 0
        %2067 = vmatpush1.bf16.xpose.msra.mxu0 %v2059
        %2068 = vmatprep.subr.bf16.mxu0 0
        %2069 = vmatpush1.bf16.xpose.msra.mxu0 %v2062
        %2070 = vmatprep.subr.bf16.mxu0 0
        %2071 = vmatpush1.bf16.xpose.msra.mxu0 0
        %2072 = vmatprep.subr.bf16.mxu0 0
        %2073 = vmatpush1.bf16.xpose.msra.mxu0 0
        %2074 = vmatprep.subr.bf16.mxu0 0
        %2075 = vmatpush1.bf16.xpose.msra.mxu0 0
        %2076 = vmatprep.subr.bf16.mxu0 0
        %2077 = vmatpush1.bf16.xpose.msra.mxu0 0
        %2078 = vmatprep.subr.bf16.mxu0 0
        %2079 = vmatpush1.bf16.xpose.msra.mxu0 0
        %2080 = vmatprep.subr.bf16.mxu0 0
        %2081 = vmatpush1.bf16.xpose.msra.mxu0 0
        %2082 = vmatprep.subr.bf16.mxu0 0
        %2083 = vmatpush1.bf16.xpose.msra.mxu0 0
        %2084 = vmatprep.subr.bf16.mxu0 0
        %2085 = vmatpush1.bf16.xpose.msra.mxu0 0
        %2086 = vmatprep.subr.bf16.mxu0 0
        %2087 = vmatpush1.bf16.xpose.msra.mxu0 0
        %2088 = vmatprep.subr.bf16.mxu0 0
        %2089 = vmatpush1.bf16.xpose.msra.mxu0 0
        %2090 = vmatprep.subr.bf16.mxu0 0
        %2091 = vmatpush1.bf16.xpose.msra.mxu0 0
        %2092 = vmatprep.subr.bf16.mxu0 0
        %2093 = vmatpush1.bf16.xpose.msra.mxu0 0
        %2094 = vmatprep.subr.bf16.mxu0 0
        %2095 = vmatpush1.bf16.xpose.msra.mxu0 0
        %2096 = vmatprep.mubr.bf16.mxu0 0
        %2097 = vmatmul.mubr.bf16.gmra.mrb[0].mxu0 %v2047
        %v2098 = vpop.f32.mrb[0].mxu0
        %v2099 = vadd.f32 %v638, %v2098
        %v2100 = vpop.f32.mrb[0].mxu0
        %v2101 = vpop.f32.mrb[0].mxu0
        %v2102 = vadd.f32 %v639, %v2101
        %v2103 = vpop.f32.mrb[0].mxu0
        %2104 = vmatprep.mubr.bf16.mxu0 0
        %2105 = vmatmul.mubr.bf16.gmra.mrb[0].mxu0 %v2050
        %v2106 = vpop.f32.mrb[0].mxu0
        %v2107 = vadd.f32 %v640, %v2106
        %v2108 = vpop.f32.mrb[0].mxu0
        %v2109 = vpop.f32.mrb[0].mxu0
        %v2110 = vadd.f32 %v641, %v2109
        %v2111 = vpop.f32.mrb[0].mxu0
        %2112 = vmatprep.mubr.bf16.mxu0 0
        %2113 = vmatmul.mubr.bf16.gmra.mrb[0].mxu0 %v2053
        %v2114 = vpop.f32.mrb[0].mxu0
        %v2115 = vadd.f32 %v642, %v2114
        %v2116 = vpop.f32.mrb[0].mxu0
        %v2117 = vpop.f32.mrb[0].mxu0
        %v2118 = vpop.f32.mrb[0].mxu0
        %2119 = vdwg.mxu0
        %v2120 = vsel %vm1199, %v2099, -inf
        %2121 = vmax.xlane.f32.xlu0 %v2120
        %v2122 = vpop.xlane.xlu0 %2121
        %v2123 = vsel %vm1199, %v2102, -inf
        %2124 = vmax.xlane.f32.xlu0 %v2123
        %v2125 = vpop.xlane.xlu0 %2124
        %v2126 = vsel %vm1199, %v2107, -inf
        %2127 = vmax.xlane.f32.xlu0 %v2126
        %v2128 = vpop.xlane.xlu0 %2127
        %v2129 = vsel %vm1199, %v2110, -inf
        %2130 = vmax.xlane.f32.xlu0 %v2129
        %v2131 = vpop.xlane.xlu0 %2130
        %v2132 = vsel %vm1199, %v2115, -inf
        %2133 = vmax.xlane.f32.xlu0 %v2132
        %v2134 = vpop.xlane.xlu0 %2133
        %v2135 = vsub.f32 %v2099, %v2122
        %v2136 = vsub.f32 %v2102, %v2125
        %v2137 = vsub.f32 %v2107, %v2128
        %v2138 = vsub.f32 %v2110, %v2131
        %v2139 = vsub.f32 %v2115, %v2134
        %v2140 = vmul.f32 %v2135, 1.442695
        %v2141 = vpow.pop %v2140
        %v2142 = vmul.f32 %v2136, 1.442695
        %v2143 = vpow.pop %v2142
        %v2144 = vmul.f32 %v2137, 1.442695
        %v2145 = vpow.pop %v2144
        %v2146 = vmul.f32 %v2138, 1.442695
        %v2147 = vpow.pop %v2146
        %v2148 = vmul.f32 %v2139, 1.442695
        %v2149 = vpow.pop %v2148
        %v2150 = vsel %vm1199, %v2141, 0.0
        %2151 = vadd.xlane.f32.xlu0 %v2150
        %v2152 = vpop.xlane.xlu0 %2151
        %v2153 = vsel %vm1199, %v2143, 0.0
        %2154 = vadd.xlane.f32.xlu0 %v2153
        %v2155 = vpop.xlane.xlu0 %2154
        %v2156 = vsel %vm1199, %v2145, 0.0
        %2157 = vadd.xlane.f32.xlu0 %v2156
        %v2158 = vpop.xlane.xlu0 %2157
        %v2159 = vsel %vm1199, %v2147, 0.0
        %2160 = vadd.xlane.f32.xlu0 %v2159
        %v2161 = vpop.xlane.xlu0 %2160
        %v2162 = vsel %vm1199, %v2149, 0.0
        %2163 = vadd.xlane.f32.xlu0 %v2162
        %v2164 = vpop.xlane.xlu0 %2163
        %v2165 = vrcp.pop %v2152
        %v2166 = vrcp.pop %v2155
        %v2167 = vrcp.pop %v2158
        %v2168 = vrcp.pop %v2161
        %v2169 = vrcp.pop %v2164
        %v2170 = vmul.f32 %v2141, %v2165
        %v2171 = vmul.f32 %v2143, %v2166
        %v2172 = vmul.f32 %v2145, %v2167
        %v2173 = vmul.f32 %v2147, %v2168
        %v2174 = vmul.f32 %v2149, %v2169
        %v2175 = vpack.c.bf16 %v2171, %v2170
        %v2176 = vpack.c.bf16 %v2173, %v2172
        %v2177 = vpack.c.bf16 %v2174, %v2174
        %2178 = vrot.lane.b32.xlu0 %v1121, 32
        %v2179 = vpop.permute.xlu0 %2178
        %2180 = vrot.lane.b32.xlu0 %v1122, 32
        %v2181 = vpop.permute.xlu0 %2180
        %2182 = vrot.lane.b32.xlu0 %v1123, 32
        %v2183 = vpop.permute.xlu0 %2182
        %v2187 = vsel %vm1199, %v2175, 0
        %v2190 = vsel %vm1199, %v2176, 0
        %v2193 = vsel %vm1199, %v2177, 0
        %v2196 = vsel %vm756, %v2183, 0
        %2198 = vmatprep.subr.bf16.mxu0 0
        %2199 = vmatpush1.bf16.msra.mxu0 %v2179
        %2200 = vmatprep.subr.bf16.mxu0 0
        %2201 = vmatpush1.bf16.msra.mxu0 %v2181
        %2202 = vmatprep.subr.bf16.mxu0 0
        %2203 = vmatpush1.bf16.msra.mxu0 %v2196
        %2204 = vmatprep.subr.bf16.mxu0 0
        %2205 = vmatpush1.bf16.msra.mxu0 0
        %2206 = vmatprep.subr.bf16.mxu0 0
        %2207 = vmatpush1.bf16.msra.mxu0 0
        %2208 = vmatprep.subr.bf16.mxu0 0
        %2209 = vmatpush1.bf16.msra.mxu0 0
        %2210 = vmatprep.subr.bf16.mxu0 0
        %2211 = vmatpush1.bf16.msra.mxu0 0
        %2212 = vmatprep.subr.bf16.mxu0 0
        %2213 = vmatpush1.bf16.msra.mxu0 0
        %2214 = vmatprep.subr.bf16.mxu0 0
        %2215 = vmatpush1.bf16.msra.mxu0 0
        %2216 = vmatprep.subr.bf16.mxu0 0
        %2217 = vmatpush1.bf16.msra.mxu0 0
        %2218 = vmatprep.subr.bf16.mxu0 0
        %2219 = vmatpush1.bf16.msra.mxu0 0
        %2220 = vmatprep.subr.bf16.mxu0 0
        %2221 = vmatpush1.bf16.msra.mxu0 0
        %2222 = vmatprep.subr.bf16.mxu0 0
        %2223 = vmatpush1.bf16.msra.mxu0 0
        %2224 = vmatprep.subr.bf16.mxu0 0
        %2225 = vmatpush1.bf16.msra.mxu0 0
        %2226 = vmatprep.subr.bf16.mxu0 0
        %2227 = vmatpush1.bf16.msra.mxu0 0
        %2228 = vmatprep.subr.bf16.mxu0 0
        %2229 = vmatpush1.bf16.msra.mxu0 0
        %2230 = vmatprep.mubr.bf16.mxu0 0
        %2231 = vmatmul.mubr.bf16.gmra.mrb[0].mxu0 %v2187
        %v2232 = vpop.f32.mrb[0].mxu0
        %v2233 = vadd.f32 0.0, %v2232
        %v2234 = vpop.f32.mrb[0].mxu0
        %v2235 = vpop.f32.mrb[0].mxu0
        %v2236 = vadd.f32 0.0, %v2235
        %v2237 = vpop.f32.mrb[0].mxu0
        %2238 = vmatprep.mubr.bf16.mxu0 0
        %2239 = vmatmul.mubr.bf16.gmra.mrb[0].mxu0 %v2190
        %v2240 = vpop.f32.mrb[0].mxu0
        %v2241 = vadd.f32 0.0, %v2240
        %v2242 = vpop.f32.mrb[0].mxu0
        %v2243 = vpop.f32.mrb[0].mxu0
        %v2244 = vadd.f32 0.0, %v2243
        %v2245 = vpop.f32.mrb[0].mxu0
        %2246 = vmatprep.mubr.bf16.mxu0 0
        %2247 = vmatmul.mubr.bf16.gmra.mrb[0].mxu0 %v2193
        %v2248 = vpop.f32.mrb[0].mxu0
        %v2249 = vadd.f32 0.0, %v2248
        %v2250 = vpop.f32.mrb[0].mxu0
        %v2251 = vpop.f32.mrb[0].mxu0
        %v2252 = vpop.f32.mrb[0].mxu0
        %2253 = vdwg.mxu0
        %v2254 = vpack.c.bf16 %v2236, %v2233
        %v2255 = vpack.c.bf16 %v2244, %v2241
        %v2256 = vpack.c.bf16 %v2249, %v2249
        %s2257 = scalar_lea.vmem %s8, 48
        %v2258 = vld [vmem:[%s2257] sm:$0xf]
        %v2259 = vld [vmem:[%s2257 + $0x4] sm:$0xf]
        %v2260 = vld [vmem:[%s2257 + $0x8] sm:$0xf]
        %v2261 = vld [vmem:[%s2257 + $0xc] sm:$0xf]
        %v2266 = vunpack.c.l.b16 %v2258
        %v2267 = vunpack.c.l.b16 %v2259
        %v2268 = vunpack.c.l.b16 %v2260
        %v2269 = vunpack.c.l.b16 %v2261
        %v2270 = vpack.c.b16 %v2267, %v2266
        %v2271 = vpack.c.b16 %v2269, %v2268
        %v2275 = vsel %vm1124, %v2254, 0
        %v2278 = vsel %vm1124, %v2255, 0
        %v2281 = vsel %vm1124, %v2256, 0
        %2283 = vmatprep.subr.bf16.mxu0 0
        %2284 = vmatpush1.bf16.msra.mxu0 %v2270
        %2285 = vmatprep.subr.bf16.mxu0 0
        %2286 = vmatpush1.bf16.msra.mxu0 %v2271
        %2287 = vmatprep.subr.bf16.mxu0 0
        %2288 = vmatpush1.bf16.msra.mxu0 0
        %2289 = vmatprep.subr.bf16.mxu0 0
        %2290 = vmatpush1.bf16.msra.mxu0 0
        %2291 = vmatprep.subr.bf16.mxu0 0
        %2292 = vmatpush1.bf16.msra.mxu0 0
        %2293 = vmatprep.subr.bf16.mxu0 0
        %2294 = vmatpush1.bf16.msra.mxu0 0
        %2295 = vmatprep.subr.bf16.mxu0 0
        %2296 = vmatpush1.bf16.msra.mxu0 0
        %2297 = vmatprep.subr.bf16.mxu0 0
        %2298 = vmatpush1.bf16.msra.mxu0 0
        %2299 = vmatprep.subr.bf16.mxu0 0
        %2300 = vmatpush1.bf16.msra.mxu0 0
        %2301 = vmatprep.subr.bf16.mxu0 0
        %2302 = vmatpush1.bf16.msra.mxu0 0
        %2303 = vmatprep.subr.bf16.mxu0 0
        %2304 = vmatpush1.bf16.msra.mxu0 0
        %2305 = vmatprep.subr.bf16.mxu0 0
        %2306 = vmatpush1.bf16.msra.mxu0 0
        %2307 = vmatprep.subr.bf16.mxu0 0
        %2308 = vmatpush1.bf16.msra.mxu0 0
        %2309 = vmatprep.subr.bf16.mxu0 0
        %2310 = vmatpush1.bf16.msra.mxu0 0
        %2311 = vmatprep.subr.bf16.mxu0 0
        %2312 = vmatpush1.bf16.msra.mxu0 0
        %2313 = vmatprep.subr.bf16.mxu0 0
        %2314 = vmatpush1.bf16.msra.mxu0 0
        %2315 = vmatprep.mubr.bf16.mxu0 0
        %2316 = vmatmul.mubr.bf16.gmra.mrb[0].mxu0 %v2275
        %v2317 = vpop.f32.mrb[0].mxu0
        %v2318 = vadd.f32 0.0, %v2317
        %v2319 = vpop.f32.mrb[0].mxu0
        %v2320 = vpop.f32.mrb[0].mxu0
        %v2321 = vadd.f32 0.0, %v2320
        %v2322 = vpop.f32.mrb[0].mxu0
        %2323 = vmatprep.mubr.bf16.mxu0 0
        %2324 = vmatmul.mubr.bf16.gmra.mrb[0].mxu0 %v2278
        %v2325 = vpop.f32.mrb[0].mxu0
        %v2326 = vadd.f32 0.0, %v2325
        %v2327 = vpop.f32.mrb[0].mxu0
        %v2328 = vpop.f32.mrb[0].mxu0
        %v2329 = vadd.f32 0.0, %v2328
        %v2330 = vpop.f32.mrb[0].mxu0
        %2331 = vmatprep.mubr.bf16.mxu0 0
        %2332 = vmatmul.mubr.bf16.gmra.mrb[0].mxu0 %v2281
        %v2333 = vpop.f32.mrb[0].mxu0
        %v2334 = vadd.f32 0.0, %v2333
        %v2335 = vpop.f32.mrb[0].mxu0
        %v2336 = vpop.f32.mrb[0].mxu0
        %v2337 = vpop.f32.mrb[0].mxu0
        %2338 = vdwg.mxu0
        %v2339 = vadd.f32 %v2029, %v2318
        %v2340 = vadd.f32 %v2030, %v2321
        %v2341 = vadd.f32 %v2031, %v2326
        %v2342 = vadd.f32 %v2032, %v2329
        %v2343 = vadd.f32 %v2033, %v2334
        %v2344 = vld [vmem:[%s9] sm:$0x1]
        %v2346 = vlaneseq
        %v2347 = vshrl.u32 %v2346, 7
        %v2348 = vsub.s32 0, %v2347
        %v2349 = vrot.slane %v2344, %v2348
        %v2351 = vadd.f32 %v2339, %v2349
        %v2352 = vadd.f32 %v2340, %v2349
        %v2353 = vadd.f32 %v2341, %v2349
        %v2354 = vadd.f32 %v2342, %v2349
        %v2355 = vadd.f32 %v2343, %v2349
        %v2356 = vadd.f32 %v797, %v2351
        %v2357 = vadd.f32 %v800, %v2352
        %v2358 = vadd.f32 %v805, %v2353
        %v2359 = vadd.f32 %v808, %v2354
        %v2360 = vadd.f32 %v813, %v2355
        %v2361 = vld [vmem:[%s14] sm:$0x1]
        %v2362 = vld [vmem:[%s15] sm:$0x1]
        %2363 = vadd.xlane.f32.xlu0 %v2356
        %v2364 = vpop.xlane.xlu0 %2363
        %2365 = vadd.xlane.f32.xlu0 %v2357
        %v2366 = vpop.xlane.xlu0 %2365
        %2367 = vadd.xlane.f32.xlu0 %v2358
        %v2368 = vpop.xlane.xlu0 %2367
        %2369 = vadd.xlane.f32.xlu0 %v2359
        %v2370 = vpop.xlane.xlu0 %2369
        %2371 = vadd.xlane.f32.xlu0 %v2360
        %v2372 = vpop.xlane.xlu0 %2371
        %v2373 = vrcp.pop 128.0
        %v2374 = vmul.f32 %v2364, %v2373
        %v2375 = vmul.f32 %v2366, %v2373
        %v2376 = vmul.f32 %v2368, %v2373
        %v2377 = vmul.f32 %v2370, %v2373
        %v2378 = vmul.f32 %v2372, %v2373
        %v2379 = vsub.f32 %v2356, %v2374
        %v2380 = vsub.f32 %v2357, %v2375
        %v2381 = vsub.f32 %v2358, %v2376
        %v2382 = vsub.f32 %v2359, %v2377
        %v2383 = vsub.f32 %v2360, %v2378
        %v2384 = vmul.f32 %v2379, %v2379
        %v2385 = vmul.f32 %v2380, %v2380
        %v2386 = vmul.f32 %v2381, %v2381
        %v2387 = vmul.f32 %v2382, %v2382
        %v2388 = vmul.f32 %v2383, %v2383
        %2389 = vadd.xlane.f32.xlu0 %v2384
        %v2390 = vpop.xlane.xlu0 %2389
        %2391 = vadd.xlane.f32.xlu0 %v2385
        %v2392 = vpop.xlane.xlu0 %2391
        %2393 = vadd.xlane.f32.xlu0 %v2386
        %v2394 = vpop.xlane.xlu0 %2393
        %2395 = vadd.xlane.f32.xlu0 %v2387
        %v2396 = vpop.xlane.xlu0 %2395
        %2397 = vadd.xlane.f32.xlu0 %v2388
        %v2398 = vpop.xlane.xlu0 %2397
        %v2399 = vmul.f32 %v2390, %v2373
        %v2400 = vmul.f32 %v2392, %v2373
        %v2401 = vmul.f32 %v2394, %v2373
        %v2402 = vmul.f32 %v2396, %v2373
        %v2403 = vmul.f32 %v2398, %v2373
        %v2404 = vadd.f32 %v2399, 1e-05
        %v2405 = vadd.f32 %v2400, 1e-05
        %v2406 = vadd.f32 %v2401, 1e-05
        %v2407 = vadd.f32 %v2402, 1e-05
        %v2408 = vadd.f32 %v2403, 1e-05
        %v2409 = vrsqrt.pop %v2404
        %v2410 = vrsqrt.pop %v2405
        %v2411 = vrsqrt.pop %v2406
        %v2412 = vrsqrt.pop %v2407
        %v2413 = vrsqrt.pop %v2408
        %v2414 = vmul.f32 %v2379, %v2409
        %v2415 = vmul.f32 %v2380, %v2410
        %v2416 = vmul.f32 %v2381, %v2411
        %v2417 = vmul.f32 %v2382, %v2412
        %v2418 = vmul.f32 %v2383, %v2413
        %v2420 = vlaneseq
        %v2421 = vshrl.u32 %v2420, 7
        %v2422 = vsub.s32 0, %v2421
        %v2423 = vrot.slane %v2361, %v2422
        %v2425 = vmul.f32 %v2414, %v2423
        %v2426 = vmul.f32 %v2415, %v2423
        %v2427 = vmul.f32 %v2416, %v2423
        %v2428 = vmul.f32 %v2417, %v2423
        %v2429 = vmul.f32 %v2418, %v2423
        %v2431 = vlaneseq
        %v2432 = vshrl.u32 %v2431, 7
        %v2433 = vsub.s32 0, %v2432
        %v2434 = vrot.slane %v2362, %v2433
        %v2436 = vadd.f32 %v2425, %v2434
        %v2437 = vadd.f32 %v2426, %v2434
        %v2438 = vadd.f32 %v2427, %v2434
        %v2439 = vadd.f32 %v2428, %v2434
        %v2440 = vadd.f32 %v2429, %v2434
        %v2441 = vpack.c.bf16 %v2437, %v2436
        %v2442 = vpack.c.bf16 %v2439, %v2438
        %v2443 = vpack.c.bf16 %v2440, %v2440
        %v2444 = vld [vmem:[%s10] sm:$0xff]
        %v2445 = vld [vmem:[%s10 + $0x8] sm:$0xff]
        %v2446 = vld [vmem:[%s10 + $0x10] sm:$0xff]
        %v2447 = vld [vmem:[%s10 + $0x18] sm:$0xff]
        %v2448 = vld [vmem:[%s10 + $0x20] sm:$0xff]
        %v2449 = vld [vmem:[%s10 + $0x28] sm:$0xff]
        %v2450 = vld [vmem:[%s10 + $0x30] sm:$0xff]
        %v2451 = vld [vmem:[%s10 + $0x38] sm:$0xff]
        %v2452 = vld [vmem:[%s10 + $0x40] sm:$0xff]
        %v2453 = vld [vmem:[%s10 + $0x48] sm:$0xff]
        %v2454 = vld [vmem:[%s10 + $0x50] sm:$0xff]
        %v2455 = vld [vmem:[%s10 + $0x58] sm:$0xff]
        %v2456 = vld [vmem:[%s10 + $0x60] sm:$0xff]
        %v2457 = vld [vmem:[%s10 + $0x68] sm:$0xff]
        %v2458 = vld [vmem:[%s10 + $0x70] sm:$0xff]
        %v2459 = vld [vmem:[%s10 + $0x78] sm:$0xff]
        %v2460 = vld [vmem:[%s11] sm:$0x3]
        %v2462 = vlaneseq
        %v2463 = vshrl.u32 %v2462, 7
        %v2464 = vsub.s32 0, %v2463
        %v2465 = vrot.slane %v2460, %v2464
        %v2466 = vlaneseq
        %v2467 = vshrl.u32 %v2466, 7
        %v2468 = vsub.s32 1, %v2467
        %v2469 = vrot.slane %v2460, %v2468
        %v2488 = vunpack.c.l.b16 %v2444
        %v2489 = vunpack.c.h.b16 %v2444
        %v2490 = vunpack.c.l.b16 %v2445
        %v2491 = vunpack.c.h.b16 %v2445
        %v2492 = vunpack.c.l.b16 %v2446
        %v2493 = vunpack.c.h.b16 %v2446
        %v2494 = vunpack.c.l.b16 %v2447
        %v2495 = vunpack.c.h.b16 %v2447
        %v2496 = vunpack.c.l.b16 %v2448
        %v2497 = vunpack.c.h.b16 %v2448
        %v2498 = vunpack.c.l.b16 %v2449
        %v2499 = vunpack.c.h.b16 %v2449
        %v2500 = vunpack.c.l.b16 %v2450
        %v2501 = vunpack.c.h.b16 %v2450
        %v2502 = vunpack.c.l.b16 %v2451
        %v2503 = vunpack.c.h.b16 %v2451
        %v2504 = vunpack.c.l.b16 %v2452
        %v2505 = vunpack.c.h.b16 %v2452
        %v2506 = vunpack.c.l.b16 %v2453
        %v2507 = vunpack.c.h.b16 %v2453
        %v2508 = vunpack.c.l.b16 %v2454
        %v2509 = vunpack.c.h.b16 %v2454
        %v2510 = vunpack.c.l.b16 %v2455
        %v2511 = vunpack.c.h.b16 %v2455
        %v2512 = vunpack.c.l.b16 %v2456
        %v2513 = vunpack.c.h.b16 %v2456
        %v2514 = vunpack.c.l.b16 %v2457
        %v2515 = vunpack.c.h.b16 %v2457
        %v2516 = vunpack.c.l.b16 %v2458
        %v2517 = vunpack.c.h.b16 %v2458
        %v2518 = vunpack.c.l.b16 %v2459
        %v2519 = vunpack.c.h.b16 %v2459
        %v2520 = vpack.c.b16 %v2490, %v2488
        %v2521 = vpack.c.b16 %v2491, %v2489
        %v2522 = vpack.c.b16 %v2494, %v2492
        %v2523 = vpack.c.b16 %v2495, %v2493
        %v2524 = vpack.c.b16 %v2498, %v2496
        %v2525 = vpack.c.b16 %v2499, %v2497
        %v2526 = vpack.c.b16 %v2502, %v2500
        %v2527 = vpack.c.b16 %v2503, %v2501
        %v2528 = vpack.c.b16 %v2506, %v2504
        %v2529 = vpack.c.b16 %v2507, %v2505
        %v2530 = vpack.c.b16 %v2510, %v2508
        %v2531 = vpack.c.b16 %v2511, %v2509
        %v2532 = vpack.c.b16 %v2514, %v2512
        %v2533 = vpack.c.b16 %v2515, %v2513
        %v2534 = vpack.c.b16 %v2518, %v2516
        %v2535 = vpack.c.b16 %v2519, %v2517
        %2552 = vmatprep.subr.bf16.mxu0 %v2521
        %2553 = vmatpush1.bf16.msra.mxu0 %v2520
        %2554 = vmatprep.subr.bf16.mxu0 %v2523
        %2555 = vmatpush1.bf16.msra.mxu0 %v2522
        %2556 = vmatprep.subr.bf16.mxu0 %v2525
        %2557 = vmatpush1.bf16.msra.mxu0 %v2524
        %2558 = vmatprep.subr.bf16.mxu0 %v2527
        %2559 = vmatpush1.bf16.msra.mxu0 %v2526
        %2560 = vmatprep.subr.bf16.mxu0 %v2529
        %2561 = vmatpush1.bf16.msra.mxu0 %v2528
        %2562 = vmatprep.subr.bf16.mxu0 %v2531
        %2563 = vmatpush1.bf16.msra.mxu0 %v2530
        %2564 = vmatprep.subr.bf16.mxu0 %v2533
        %2565 = vmatpush1.bf16.msra.mxu0 %v2532
        %2566 = vmatprep.subr.bf16.mxu0 %v2535
        %2567 = vmatpush1.bf16.msra.mxu0 %v2534
        %2568 = vmatprep.subr.bf16.mxu0 0
        %2569 = vmatpush1.bf16.msra.mxu0 0
        %2570 = vmatprep.subr.bf16.mxu0 0
        %2571 = vmatpush1.bf16.msra.mxu0 0
        %2572 = vmatprep.subr.bf16.mxu0 0
        %2573 = vmatpush1.bf16.msra.mxu0 0
        %2574 = vmatprep.subr.bf16.mxu0 0
        %2575 = vmatpush1.bf16.msra.mxu0 0
        %2576 = vmatprep.subr.bf16.mxu0 0
        %2577 = vmatpush1.bf16.msra.mxu0 0
        %2578 = vmatprep.subr.bf16.mxu0 0
        %2579 = vmatpush1.bf16.msra.mxu0 0
        %2580 = vmatprep.subr.bf16.mxu0 0
        %2581 = vmatpush1.bf16.msra.mxu0 0
        %2582 = vmatprep.subr.bf16.mxu0 0
        %2583 = vmatpush1.bf16.msra.mxu0 0
        %2584 = vmatprep.mubr.bf16.mxu0 0
        %2585 = vmatmul.mubr.bf16.gmra.mrb[0].mxu0 %v2441
        %v2586 = vpop.f32.mrb[0].mxu0
        %v2587 = vadd.f32 %v2465, %v2586
        %v2588 = vpop.f32.mrb[0].mxu0
        %v2589 = vadd.f32 %v2469, %v2588
        %v2590 = vpop.f32.mrb[0].mxu0
        %v2591 = vadd.f32 %v2465, %v2590
        %v2592 = vpop.f32.mrb[0].mxu0
        %v2593 = vadd.f32 %v2469, %v2592
        %2594 = vmatprep.mubr.bf16.mxu0 0
        %2595 = vmatmul.mubr.bf16.gmra.mrb[0].mxu0 %v2442
        %v2596 = vpop.f32.mrb[0].mxu0
        %v2597 = vadd.f32 %v2465, %v2596
        %v2598 = vpop.f32.mrb[0].mxu0
        %v2599 = vadd.f32 %v2469, %v2598
        %v2600 = vpop.f32.mrb[0].mxu0
        %v2601 = vadd.f32 %v2465, %v2600
        %v2602 = vpop.f32.mrb[0].mxu0
        %v2603 = vadd.f32 %v2469, %v2602
        %2604 = vmatprep.mubr.bf16.mxu0 0
        %2605 = vmatmul.mubr.bf16.gmra.mrb[0].mxu0 %v2443
        %v2606 = vpop.f32.mrb[0].mxu0
        %v2607 = vadd.f32 %v2465, %v2606
        %v2608 = vpop.f32.mrb[0].mxu0
        %v2609 = vadd.f32 %v2469, %v2608
        %v2610 = vpop.f32.mrb[0].mxu0
        %v2611 = vpop.f32.mrb[0].mxu0
        %2612 = vdwg.mxu0
        %v2613 = vmul.f32 %v2587, 0.5
        %v2614 = vmul.f32 %v2589, 0.5
        %v2615 = vmul.f32 %v2591, 0.5
        %v2616 = vmul.f32 %v2593, 0.5
        %v2617 = vmul.f32 %v2597, 0.5
        %v2618 = vmul.f32 %v2599, 0.5
        %v2619 = vmul.f32 %v2601, 0.5
        %v2620 = vmul.f32 %v2603, 0.5
        %v2621 = vmul.f32 %v2607, 0.5
        %v2622 = vmul.f32 %v2609, 0.5
        %v2623 = vmul.f32 %v2587, 0.70710677
        %v2624 = vmul.f32 %v2589, 0.70710677
        %v2625 = vmul.f32 %v2591, 0.70710677
        %v2626 = vmul.f32 %v2593, 0.70710677
        %v2627 = vmul.f32 %v2597, 0.70710677
        %v2628 = vmul.f32 %v2599, 0.70710677
        %v2629 = vmul.f32 %v2601, 0.70710677
        %v2630 = vmul.f32 %v2603, 0.70710677
        %v2631 = vmul.f32 %v2607, 0.70710677
        %v2632 = vmul.f32 %v2609, 0.70710677
        %v2633 = verf.f32.pop %v2623
        %v2634 = verf.f32.pop %v2624
        %v2635 = verf.f32.pop %v2625
        %v2636 = verf.f32.pop %v2626
        %v2637 = verf.f32.pop %v2627
        %v2638 = verf.f32.pop %v2628
        %v2639 = verf.f32.pop %v2629
        %v2640 = verf.f32.pop %v2630
        %v2641 = verf.f32.pop %v2631
        %v2642 = verf.f32.pop %v2632
        %v2643 = vadd.f32 %v2633, 1.0
        %v2644 = vadd.f32 %v2634, 1.0
        %v2645 = vadd.f32 %v2635, 1.0
        %v2646 = vadd.f32 %v2636, 1.0
        %v2647 = vadd.f32 %v2637, 1.0
        %v2648 = vadd.f32 %v2638, 1.0
        %v2649 = vadd.f32 %v2639, 1.0
        %v2650 = vadd.f32 %v2640, 1.0
        %v2651 = vadd.f32 %v2641, 1.0
        %v2652 = vadd.f32 %v2642, 1.0
        %v2653 = vmul.f32 %v2613, %v2643
        %v2654 = vmul.f32 %v2614, %v2644
        %v2655 = vmul.f32 %v2615, %v2645
        %v2656 = vmul.f32 %v2616, %v2646
        %v2657 = vmul.f32 %v2617, %v2647
        %v2658 = vmul.f32 %v2618, %v2648
        %v2659 = vmul.f32 %v2619, %v2649
        %v2660 = vmul.f32 %v2620, %v2650
        %v2661 = vmul.f32 %v2621, %v2651
        %v2662 = vmul.f32 %v2622, %v2652
        %v2663 = vpack.c.bf16 %v2655, %v2653
        %v2664 = vpack.c.bf16 %v2656, %v2654
        %v2665 = vpack.c.bf16 %v2659, %v2657
        %v2666 = vpack.c.bf16 %v2660, %v2658
        %v2667 = vpack.c.bf16 %v2661, %v2661
        %v2668 = vpack.c.bf16 %v2662, %v2662
        %v2669 = vld [vmem:[%s12] sm:$0xf]
        %v2670 = vld [vmem:[%s12 + $0x4] sm:$0xf]
        %v2671 = vld [vmem:[%s12 + $0x8] sm:$0xf]
        %v2672 = vld [vmem:[%s12 + $0xc] sm:$0xf]
        %v2673 = vld [vmem:[%s12 + $0x10] sm:$0xf]
        %v2674 = vld [vmem:[%s12 + $0x14] sm:$0xf]
        %v2675 = vld [vmem:[%s12 + $0x18] sm:$0xf]
        %v2676 = vld [vmem:[%s12 + $0x1c] sm:$0xf]
        %v2677 = vld [vmem:[%s12 + $0x20] sm:$0xf]
        %v2678 = vld [vmem:[%s12 + $0x24] sm:$0xf]
        %v2679 = vld [vmem:[%s12 + $0x28] sm:$0xf]
        %v2680 = vld [vmem:[%s12 + $0x2c] sm:$0xf]
        %v2681 = vld [vmem:[%s12 + $0x30] sm:$0xf]
        %v2682 = vld [vmem:[%s12 + $0x34] sm:$0xf]
        %v2683 = vld [vmem:[%s12 + $0x38] sm:$0xf]
        %v2684 = vld [vmem:[%s12 + $0x3c] sm:$0xf]
        %v2685 = vld [vmem:[%s12 + $0x40] sm:$0xf]
        %v2686 = vld [vmem:[%s12 + $0x44] sm:$0xf]
        %v2687 = vld [vmem:[%s12 + $0x48] sm:$0xf]
        %v2688 = vld [vmem:[%s12 + $0x4c] sm:$0xf]
        %v2689 = vld [vmem:[%s12 + $0x50] sm:$0xf]
        %v2690 = vld [vmem:[%s12 + $0x54] sm:$0xf]
        %v2691 = vld [vmem:[%s12 + $0x58] sm:$0xf]
        %v2692 = vld [vmem:[%s12 + $0x5c] sm:$0xf]
        %v2693 = vld [vmem:[%s12 + $0x60] sm:$0xf]
        %v2694 = vld [vmem:[%s12 + $0x64] sm:$0xf]
        %v2695 = vld [vmem:[%s12 + $0x68] sm:$0xf]
        %v2696 = vld [vmem:[%s12 + $0x6c] sm:$0xf]
        %v2697 = vld [vmem:[%s12 + $0x70] sm:$0xf]
        %v2698 = vld [vmem:[%s12 + $0x74] sm:$0xf]
        %v2699 = vld [vmem:[%s12 + $0x78] sm:$0xf]
        %v2700 = vld [vmem:[%s12 + $0x7c] sm:$0xf]
        %v2701 = vld [vmem:[%s13] sm:$0x1]
        %v2703 = vlaneseq
        %v2704 = vshrl.u32 %v2703, 7
        %v2705 = vsub.s32 0, %v2704
        %v2706 = vrot.slane %v2701, %v2705
        %v2740 = vunpack.c.l.b16 %v2669
        %v2741 = vunpack.c.l.b16 %v2670
        %v2742 = vunpack.c.l.b16 %v2671
        %v2743 = vunpack.c.l.b16 %v2672
        %v2744 = vunpack.c.l.b16 %v2673
        %v2745 = vunpack.c.l.b16 %v2674
        %v2746 = vunpack.c.l.b16 %v2675
        %v2747 = vunpack.c.l.b16 %v2676
        %v2748 = vunpack.c.l.b16 %v2677
        %v2749 = vunpack.c.l.b16 %v2678
        %v2750 = vunpack.c.l.b16 %v2679
        %v2751 = vunpack.c.l.b16 %v2680
        %v2752 = vunpack.c.l.b16 %v2681
        %v2753 = vunpack.c.l.b16 %v2682
        %v2754 = vunpack.c.l.b16 %v2683
        %v2755 = vunpack.c.l.b16 %v2684
        %v2756 = vunpack.c.l.b16 %v2685
        %v2757 = vunpack.c.l.b16 %v2686
        %v2758 = vunpack.c.l.b16 %v2687
        %v2759 = vunpack.c.l.b16 %v2688
        %v2760 = vunpack.c.l.b16 %v2689
        %v2761 = vunpack.c.l.b16 %v2690
        %v2762 = vunpack.c.l.b16 %v2691
        %v2763 = vunpack.c.l.b16 %v2692
        %v2764 = vunpack.c.l.b16 %v2693
        %v2765 = vunpack.c.l.b16 %v2694
        %v2766 = vunpack.c.l.b16 %v2695
        %v2767 = vunpack.c.l.b16 %v2696
        %v2768 = vunpack.c.l.b16 %v2697
        %v2769 = vunpack.c.l.b16 %v2698
        %v2770 = vunpack.c.l.b16 %v2699
        %v2771 = vunpack.c.l.b16 %v2700
        %v2772 = vpack.c.b16 %v2741, %v2740
        %v2773 = vpack.c.b16 %v2743, %v2742
        %v2774 = vpack.c.b16 %v2745, %v2744
        %v2775 = vpack.c.b16 %v2747, %v2746
        %v2776 = vpack.c.b16 %v2749, %v2748
        %v2777 = vpack.c.b16 %v2751, %v2750
        %v2778 = vpack.c.b16 %v2753, %v2752
        %v2779 = vpack.c.b16 %v2755, %v2754
        %v2780 = vpack.c.b16 %v2757, %v2756
        %v2781 = vpack.c.b16 %v2759, %v2758
        %v2782 = vpack.c.b16 %v2761, %v2760
        %v2783 = vpack.c.b16 %v2763, %v2762
        %v2784 = vpack.c.b16 %v2765, %v2764
        %v2785 = vpack.c.b16 %v2767, %v2766
        %v2786 = vpack.c.b16 %v2769, %v2768
        %v2787 = vpack.c.b16 %v2771, %v2770
        %2804 = vmatprep.subr.bf16.mxu0 0
        %2805 = vmatpush1.bf16.msra.mxu0 %v2772
        %2806 = vmatprep.subr.bf16.mxu0 0
        %2807 = vmatpush1.bf16.msra.mxu0 %v2773
        %2808 = vmatprep.subr.bf16.mxu0 0
        %2809 = vmatpush1.bf16.msra.mxu0 %v2774
        %2810 = vmatprep.subr.bf16.mxu0 0
        %2811 = vmatpush1.bf16.msra.mxu0 %v2775
        %2812 = vmatprep.subr.bf16.mxu0 0
        %2813 = vmatpush1.bf16.msra.mxu0 %v2776
        %2814 = vmatprep.subr.bf16.mxu0 0
        %2815 = vmatpush1.bf16.msra.mxu0 %v2777
        %2816 = vmatprep.subr.bf16.mxu0 0
        %2817 = vmatpush1.bf16.msra.mxu0 %v2778
        %2818 = vmatprep.subr.bf16.mxu0 0
        %2819 = vmatpush1.bf16.msra.mxu0 %v2779
        %2820 = vmatprep.subr.bf16.mxu0 0
        %2821 = vmatpush1.bf16.msra.mxu0 %v2780
        %2822 = vmatprep.subr.bf16.mxu0 0
        %2823 = vmatpush1.bf16.msra.mxu0 %v2781
        %2824 = vmatprep.subr.bf16.mxu0 0
        %2825 = vmatpush1.bf16.msra.mxu0 %v2782
        %2826 = vmatprep.subr.bf16.mxu0 0
        %2827 = vmatpush1.bf16.msra.mxu0 %v2783
        %2828 = vmatprep.subr.bf16.mxu0 0
        %2829 = vmatpush1.bf16.msra.mxu0 %v2784
        %2830 = vmatprep.subr.bf16.mxu0 0
        %2831 = vmatpush1.bf16.msra.mxu0 %v2785
        %2832 = vmatprep.subr.bf16.mxu0 0
        %2833 = vmatpush1.bf16.msra.mxu0 %v2786
        %2834 = vmatprep.subr.bf16.mxu0 0
        %2835 = vmatpush1.bf16.msra.mxu0 %v2787
        %2836 = vmatprep.mubr.bf16.mxu0 %v2664
        %2837 = vmatmul.mubr.bf16.gmra.mrb[0].mxu0 %v2663
        %v2838 = vpop.f32.mrb[0].mxu0
        %v2839 = vadd.f32 %v2706, %v2838
        %v2840 = vpop.f32.mrb[0].mxu0
        %v2841 = vpop.f32.mrb[0].mxu0
        %v2842 = vadd.f32 %v2706, %v2841
        %v2843 = vpop.f32.mrb[0].mxu0
        %2844 = vmatprep.mubr.bf16.mxu0 %v2666
        %2845 = vmatmul.mubr.bf16.gmra.mrb[0].mxu0 %v2665
        %v2846 = vpop.f32.mrb[0].mxu0
        %v2847 = vadd.f32 %v2706, %v2846
        %v2848 = vpop.f32.mrb[0].mxu0
        %v2849 = vpop.f32.mrb[0].mxu0
        %v2850 = vadd.f32 %v2706, %v2849
        %v2851 = vpop.f32.mrb[0].mxu0
        %2852 = vmatprep.mubr.bf16.mxu0 %v2668
        %2853 = vmatmul.mubr.bf16.gmra.mrb[0].mxu0 %v2667
        %v2854 = vpop.f32.mrb[0].mxu0
        %v2855 = vadd.f32 %v2706, %v2854
        %v2856 = vpop.f32.mrb[0].mxu0
        %v2857 = vpop.f32.mrb[0].mxu0
        %v2858 = vpop.f32.mrb[0].mxu0
        %2859 = vdwg.mxu0
        %v2860 = vadd.f32 %v2436, %v2839
        %v2861 = vadd.f32 %v2437, %v2842
        %v2862 = vadd.f32 %v2438, %v2847
        %v2863 = vadd.f32 %v2439, %v2850
        %v2864 = vadd.f32 %v2440, %v2855
        %v2865 = vld [vmem:[%s16] sm:$0x1]
        %v2866 = vld [vmem:[%s17] sm:$0x1]
        %2867 = vadd.xlane.f32.xlu0 %v2860
        %v2868 = vpop.xlane.xlu0 %2867
        %2869 = vadd.xlane.f32.xlu0 %v2861
        %v2870 = vpop.xlane.xlu0 %2869
        %2871 = vadd.xlane.f32.xlu0 %v2862
        %v2872 = vpop.xlane.xlu0 %2871
        %2873 = vadd.xlane.f32.xlu0 %v2863
        %v2874 = vpop.xlane.xlu0 %2873
        %2875 = vadd.xlane.f32.xlu0 %v2864
        %v2876 = vpop.xlane.xlu0 %2875
        %v2877 = vmul.f32 %v2868, %v2373
        %v2878 = vmul.f32 %v2870, %v2373
        %v2879 = vmul.f32 %v2872, %v2373
        %v2880 = vmul.f32 %v2874, %v2373
        %v2881 = vmul.f32 %v2876, %v2373
        %v2882 = vsub.f32 %v2860, %v2877
        %v2883 = vsub.f32 %v2861, %v2878
        %v2884 = vsub.f32 %v2862, %v2879
        %v2885 = vsub.f32 %v2863, %v2880
        %v2886 = vsub.f32 %v2864, %v2881
        %v2887 = vmul.f32 %v2882, %v2882
        %v2888 = vmul.f32 %v2883, %v2883
        %v2889 = vmul.f32 %v2884, %v2884
        %v2890 = vmul.f32 %v2885, %v2885
        %v2891 = vmul.f32 %v2886, %v2886
        %2892 = vadd.xlane.f32.xlu0 %v2887
        %v2893 = vpop.xlane.xlu0 %2892
        %2894 = vadd.xlane.f32.xlu0 %v2888
        %v2895 = vpop.xlane.xlu0 %2894
        %2896 = vadd.xlane.f32.xlu0 %v2889
        %v2897 = vpop.xlane.xlu0 %2896
        %2898 = vadd.xlane.f32.xlu0 %v2890
        %v2899 = vpop.xlane.xlu0 %2898
        %2900 = vadd.xlane.f32.xlu0 %v2891
        %v2901 = vpop.xlane.xlu0 %2900
        %v2902 = vmul.f32 %v2893, %v2373
        %v2903 = vmul.f32 %v2895, %v2373
        %v2904 = vmul.f32 %v2897, %v2373
        %v2905 = vmul.f32 %v2899, %v2373
        %v2906 = vmul.f32 %v2901, %v2373
        %v2907 = vadd.f32 %v2902, 1e-05
        %v2908 = vadd.f32 %v2903, 1e-05
        %v2909 = vadd.f32 %v2904, 1e-05
        %v2910 = vadd.f32 %v2905, 1e-05
        %v2911 = vadd.f32 %v2906, 1e-05
        %v2912 = vrsqrt.pop %v2907
        %v2913 = vrsqrt.pop %v2908
        %v2914 = vrsqrt.pop %v2909
        %v2915 = vrsqrt.pop %v2910
        %v2916 = vrsqrt.pop %v2911
        %v2917 = vmul.f32 %v2882, %v2912
        %v2918 = vmul.f32 %v2883, %v2913
        %v2919 = vmul.f32 %v2884, %v2914
        %v2920 = vmul.f32 %v2885, %v2915
        %v2921 = vmul.f32 %v2886, %v2916
        %v2923 = vlaneseq
        %v2924 = vshrl.u32 %v2923, 7
        %v2925 = vsub.s32 0, %v2924
        %v2926 = vrot.slane %v2865, %v2925
        %v2928 = vmul.f32 %v2917, %v2926
        %v2929 = vmul.f32 %v2918, %v2926
        %v2930 = vmul.f32 %v2919, %v2926
        %v2931 = vmul.f32 %v2920, %v2926
        %v2932 = vmul.f32 %v2921, %v2926
        %v2934 = vlaneseq
        %v2935 = vshrl.u32 %v2934, 7
        %v2936 = vsub.s32 0, %v2935
        %v2937 = vrot.slane %v2866, %v2936
        %v2939 = vadd.f32 %v2928, %v2937
        %v2940 = vadd.f32 %v2929, %v2937
        %v2941 = vadd.f32 %v2930, %v2937
        %v2942 = vadd.f32 %v2931, %v2937
        %v2943 = vadd.f32 %v2932, %v2937
        %v2944 = vpack.c.bf16 %v2940, %v2939
        %v2945 = vpack.c.bf16 %v2942, %v2941
        %v2946 = vpack.c.bf16 %v2943, %v2943
        %s2947 = scalar_lea.vmem %s6, 192
        %v2948 = vld [vmem:[%s2947] sm:$0xff]
        %v2949 = vld [vmem:[%s2947 + $0x8] sm:$0xf]
        %v2950 = vld [vmem:[%s2947 + $0xc] sm:$0xff]
        %v2951 = vld [vmem:[%s2947 + $0x14] sm:$0xf]
        %v2952 = vld [vmem:[%s2947 + $0x18] sm:$0xff]
        %v2953 = vld [vmem:[%s2947 + $0x20] sm:$0xf]
        %v2954 = vld [vmem:[%s2947 + $0x24] sm:$0xff]
        %v2955 = vld [vmem:[%s2947 + $0x2c] sm:$0xf]
        %v2956 = vld [vmem:[%s2947 + $0x30] sm:$0xff]
        %v2957 = vld [vmem:[%s2947 + $0x38] sm:$0xf]
        %v2958 = vld [vmem:[%s2947 + $0x3c] sm:$0xff]
        %v2959 = vld [vmem:[%s2947 + $0x44] sm:$0xf]
        %v2960 = vld [vmem:[%s2947 + $0x48] sm:$0xff]
        %v2961 = vld [vmem:[%s2947 + $0x50] sm:$0xf]
        %v2962 = vld [vmem:[%s2947 + $0x54] sm:$0xff]
        %v2963 = vld [vmem:[%s2947 + $0x5c] sm:$0xf]
        %v2964 = vld [vmem:[%s2947 + $0x60] sm:$0xff]
        %v2965 = vld [vmem:[%s2947 + $0x68] sm:$0xf]
        %v2966 = vld [vmem:[%s2947 + $0x6c] sm:$0xff]
        %v2967 = vld [vmem:[%s2947 + $0x74] sm:$0xf]
        %v2968 = vld [vmem:[%s2947 + $0x78] sm:$0xff]
        %v2969 = vld [vmem:[%s2947 + $0x80] sm:$0xf]
        %v2970 = vld [vmem:[%s2947 + $0x84] sm:$0xff]
        %v2971 = vld [vmem:[%s2947 + $0x8c] sm:$0xf]
        %v2972 = vld [vmem:[%s2947 + $0x90] sm:$0xff]
        %v2973 = vld [vmem:[%s2947 + $0x98] sm:$0xf]
        %v2974 = vld [vmem:[%s2947 + $0x9c] sm:$0xff]
        %v2975 = vld [vmem:[%s2947 + $0xa4] sm:$0xf]
        %v2976 = vld [vmem:[%s2947 + $0xa8] sm:$0xff]
        %v2977 = vld [vmem:[%s2947 + $0xb0] sm:$0xf]
        %v2978 = vld [vmem:[%s2947 + $0xb4] sm:$0xff]
        %v2979 = vld [vmem:[%s2947 + $0xbc] sm:$0xf]
        %s2980 = scalar_lea.vmem %s7, 3
        %v2981 = vld [vmem:[%s2980] sm:$0x7]
        %v2983 = vlaneseq
        %v2984 = vshrl.u32 %v2983, 7
        %v2985 = vsub.s32 0, %v2984
        %v2986 = vrot.slane %v2981, %v2985
        %v2987 = vlaneseq
        %v2988 = vshrl.u32 %v2987, 7
        %v2989 = vsub.s32 1, %v2988
        %v2990 = vrot.slane %v2981, %v2989
        %v2991 = vlaneseq
        %v2992 = vshrl.u32 %v2991, 7
        %v2993 = vsub.s32 2, %v2992
        %v2994 = vrot.slane %v2981, %v2993
        %v3030 = vunpack.c.l.b16 %v2948
        %v3031 = vunpack.c.h.b16 %v2948
        %v3032 = vunpack.c.l.b16 %v2949
        %v3033 = vunpack.c.l.b16 %v2950
        %v3034 = vunpack.c.h.b16 %v2950
        %v3035 = vunpack.c.l.b16 %v2951
        %v3036 = vunpack.c.l.b16 %v2952
        %v3037 = vunpack.c.h.b16 %v2952
        %v3038 = vunpack.c.l.b16 %v2953
        %v3039 = vunpack.c.l.b16 %v2954
        %v3040 = vunpack.c.h.b16 %v2954
        %v3041 = vunpack.c.l.b16 %v2955
        %v3042 = vunpack.c.l.b16 %v2956
        %v3043 = vunpack.c.h.b16 %v2956
        %v3044 = vunpack.c.l.b16 %v2957
        %v3045 = vunpack.c.l.b16 %v2958
        %v3046 = vunpack.c.h.b16 %v2958
        %v3047 = vunpack.c.l.b16 %v2959
        %v3048 = vunpack.c.l.b16 %v2960
        %v3049 = vunpack.c.h.b16 %v2960
        %v3050 = vunpack.c.l.b16 %v2961
        %v3051 = vunpack.c.l.b16 %v2962
        %v3052 = vunpack.c.h.b16 %v2962
        %v3053 = vunpack.c.l.b16 %v2963
        %v3054 = vunpack.c.l.b16 %v2964
        %v3055 = vunpack.c.h.b16 %v2964
        %v3056 = vunpack.c.l.b16 %v2965
        %v3057 = vunpack.c.l.b16 %v2966
        %v3058 = vunpack.c.h.b16 %v2966
        %v3059 = vunpack.c.l.b16 %v2967
        %v3060 = vunpack.c.l.b16 %v2968
        %v3061 = vunpack.c.h.b16 %v2968
        %v3062 = vunpack.c.l.b16 %v2969
        %v3063 = vunpack.c.l.b16 %v2970
        %v3064 = vunpack.c.h.b16 %v2970
        %v3065 = vunpack.c.l.b16 %v2971
        %v3066 = vunpack.c.l.b16 %v2972
        %v3067 = vunpack.c.h.b16 %v2972
        %v3068 = vunpack.c.l.b16 %v2973
        %v3069 = vunpack.c.l.b16 %v2974
        %v3070 = vunpack.c.h.b16 %v2974
        %v3071 = vunpack.c.l.b16 %v2975
        %v3072 = vunpack.c.l.b16 %v2976
        %v3073 = vunpack.c.h.b16 %v2976
        %v3074 = vunpack.c.l.b16 %v2977
        %v3075 = vunpack.c.l.b16 %v2978
        %v3076 = vunpack.c.h.b16 %v2978
        %v3077 = vunpack.c.l.b16 %v2979
        %v3078 = vpack.c.b16 %v3033, %v3030
        %v3079 = vpack.c.b16 %v3034, %v3031
        %v3080 = vpack.c.b16 %v3035, %v3032
        %v3081 = vpack.c.b16 %v3039, %v3036
        %v3082 = vpack.c.b16 %v3040, %v3037
        %v3083 = vpack.c.b16 %v3041, %v3038
        %v3084 = vpack.c.b16 %v3045, %v3042
        %v3085 = vpack.c.b16 %v3046, %v3043
        %v3086 = vpack.c.b16 %v3047, %v3044
        %v3087 = vpack.c.b16 %v3051, %v3048
        %v3088 = vpack.c.b16 %v3052, %v3049
        %v3089 = vpack.c.b16 %v3053, %v3050
        %v3090 = vpack.c.b16 %v3057, %v3054
        %v3091 = vpack.c.b16 %v3058, %v3055
        %v3092 = vpack.c.b16 %v3059, %v3056
        %v3093 = vpack.c.b16 %v3063, %v3060
        %v3094 = vpack.c.b16 %v3064, %v3061
        %v3095 = vpack.c.b16 %v3065, %v3062
        %v3096 = vpack.c.b16 %v3069, %v3066
        %v3097 = vpack.c.b16 %v3070, %v3067
        %v3098 = vpack.c.b16 %v3071, %v3068
        %v3099 = vpack.c.b16 %v3075, %v3072
        %v3100 = vpack.c.b16 %v3076, %v3073
        %v3101 = vpack.c.b16 %v3077, %v3074
        %3126 = vmatprep.subr.bf16.mxu0 %v3079
        %3127 = vmatpush1.bf16.msra.mxu0 %v3078
        %3128 = vmatprep.subr.bf16.mxu0 %v3082
        %3129 = vmatpush1.bf16.msra.mxu0 %v3081
        %3130 = vmatprep.subr.bf16.mxu0 %v3085
        %3131 = vmatpush1.bf16.msra.mxu0 %v3084
        %3132 = vmatprep.subr.bf16.mxu0 %v3088
        %3133 = vmatpush1.bf16.msra.mxu0 %v3087
        %3134 = vmatprep.subr.bf16.mxu0 %v3091
        %3135 = vmatpush1.bf16.msra.mxu0 %v3090
        %3136 = vmatprep.subr.bf16.mxu0 %v3094
        %3137 = vmatpush1.bf16.msra.mxu0 %v3093
        %3138 = vmatprep.subr.bf16.mxu0 %v3097
        %3139 = vmatpush1.bf16.msra.mxu0 %v3096
        %3140 = vmatprep.subr.bf16.mxu0 %v3100
        %3141 = vmatpush1.bf16.msra.mxu0 %v3099
        %3142 = vmatprep.subr.bf16.mxu0 0
        %3143 = vmatpush1.bf16.msra.mxu0 0
        %3144 = vmatprep.subr.bf16.mxu0 0
        %3145 = vmatpush1.bf16.msra.mxu0 0
        %3146 = vmatprep.subr.bf16.mxu0 0
        %3147 = vmatpush1.bf16.msra.mxu0 0
        %3148 = vmatprep.subr.bf16.mxu0 0
        %3149 = vmatpush1.bf16.msra.mxu0 0
        %3150 = vmatprep.subr.bf16.mxu0 0
        %3151 = vmatpush1.bf16.msra.mxu0 0
        %3152 = vmatprep.subr.bf16.mxu0 0
        %3153 = vmatpush1.bf16.msra.mxu0 0
        %3154 = vmatprep.subr.bf16.mxu0 0
        %3155 = vmatpush1.bf16.msra.mxu0 0
        %3156 = vmatprep.subr.bf16.mxu0 0
        %3157 = vmatpush1.bf16.msra.mxu0 0
        %3158 = vmatprep.mubr.bf16.mxu0 0
        %3159 = vmatmul.mubr.bf16.gmra.mrb[0].mxu0 %v2944
        %v3160 = vpop.f32.mrb[0].mxu0
        %v3161 = vadd.f32 %v2986, %v3160
        %v3162 = vpop.f32.mrb[0].mxu0
        %v3163 = vadd.f32 %v2990, %v3162
        %v3164 = vpop.f32.mrb[0].mxu0
        %v3165 = vpop.f32.mrb[0].mxu0
        %v3166 = vadd.f32 %v2990, %v3165
        %3167 = vmatprep.mubr.bf16.mxu0 0
        %3168 = vmatmul.mubr.bf16.gmra.mrb[0].mxu0 %v2945
        %v3169 = vpop.f32.mrb[0].mxu0
        %v3170 = vpop.f32.mrb[0].mxu0
        %v3171 = vadd.f32 %v2990, %v3170
        %v3172 = vpop.f32.mrb[0].mxu0
        %v3173 = vpop.f32.mrb[0].mxu0
        %v3174 = vadd.f32 %v2990, %v3173
        %3175 = vmatprep.mubr.bf16.mxu0 0
        %3176 = vmatmul.mubr.bf16.gmra.mrb[0].mxu0 %v2946
        %v3177 = vpop.f32.mrb[0].mxu0
        %v3178 = vpop.f32.mrb[0].mxu0
        %v3179 = vadd.f32 %v2990, %v3178
        %v3180 = vpop.f32.mrb[0].mxu0
        %v3181 = vpop.f32.mrb[0].mxu0
        %3182 = vdwg.mxu0
        %3183 = vmatprep.subr.bf16.mxu0 0
        %3184 = vmatpush1.bf16.msra.mxu0 %v3080
        %3185 = vmatprep.subr.bf16.mxu0 0
        %3186 = vmatpush1.bf16.msra.mxu0 %v3083
        %3187 = vmatprep.subr.bf16.mxu0 0
        %3188 = vmatpush1.bf16.msra.mxu0 %v3086
        %3189 = vmatprep.subr.bf16.mxu0 0
        %3190 = vmatpush1.bf16.msra.mxu0 %v3089
        %3191 = vmatprep.subr.bf16.mxu0 0
        %3192 = vmatpush1.bf16.msra.mxu0 %v3092
        %3193 = vmatprep.subr.bf16.mxu0 0
        %3194 = vmatpush1.bf16.msra.mxu0 %v3095
        %3195 = vmatprep.subr.bf16.mxu0 0
        %3196 = vmatpush1.bf16.msra.mxu0 %v3098
        %3197 = vmatprep.subr.bf16.mxu0 0
        %3198 = vmatpush1.bf16.msra.mxu0 %v3101
        %3199 = vmatprep.subr.bf16.mxu0 0
        %3200 = vmatpush1.bf16.msra.mxu0 0
        %3201 = vmatprep.subr.bf16.mxu0 0
        %3202 = vmatpush1.bf16.msra.mxu0 0
        %3203 = vmatprep.subr.bf16.mxu0 0
        %3204 = vmatpush1.bf16.msra.mxu0 0
        %3205 = vmatprep.subr.bf16.mxu0 0
        %3206 = vmatpush1.bf16.msra.mxu0 0
        %3207 = vmatprep.subr.bf16.mxu0 0
        %3208 = vmatpush1.bf16.msra.mxu0 0
        %3209 = vmatprep.subr.bf16.mxu0 0
        %3210 = vmatpush1.bf16.msra.mxu0 0
        %3211 = vmatprep.subr.bf16.mxu0 0
        %3212 = vmatpush1.bf16.msra.mxu0 0
        %3213 = vmatprep.subr.bf16.mxu0 0
        %3214 = vmatpush1.bf16.msra.mxu0 0
        %3215 = vmatprep.mubr.bf16.mxu0 0
        %3216 = vmatmul.mubr.bf16.gmra.mrb[0].mxu0 %v2944
        %v3217 = vpop.f32.mrb[0].mxu0
        %v3218 = vadd.f32 %v2994, %v3217
        %v3219 = vpop.f32.mrb[0].mxu0
        %v3220 = vpop.f32.mrb[0].mxu0
        %v3221 = vadd.f32 %v2994, %v3220
        %v3222 = vpop.f32.mrb[0].mxu0
        %3223 = vmatprep.mubr.bf16.mxu0 0
        %3224 = vmatmul.mubr.bf16.gmra.mrb[0].mxu0 %v2945
        %v3225 = vpop.f32.mrb[0].mxu0
        %v3226 = vadd.f32 %v2994, %v3225
        %v3227 = vpop.f32.mrb[0].mxu0
        %v3228 = vpop.f32.mrb[0].mxu0
        %v3229 = vadd.f32 %v2994, %v3228
        %v3230 = vpop.f32.mrb[0].mxu0
        %3231 = vmatprep.mubr.bf16.mxu0 0
        %3232 = vmatmul.mubr.bf16.gmra.mrb[0].mxu0 %v2946
        %v3233 = vpop.f32.mrb[0].mxu0
        %v3234 = vadd.f32 %v2994, %v3233
        %v3235 = vpop.f32.mrb[0].mxu0
        %v3236 = vpop.f32.mrb[0].mxu0
        %v3237 = vpop.f32.mrb[0].mxu0
        %3238 = vdwg.mxu0
        %v3239 = vpack.c.bf16 %v3161, %v3161
        %v3240 = vpack.c.bf16 %v3166, %v3163
        %v3241 = vpack.c.bf16 %v3174, %v3171
        %v3242 = vpack.c.bf16 %v3179, %v3179
        %v3243 = vpack.c.bf16 %v3221, %v3218
        %v3244 = vpack.c.bf16 %v3229, %v3226
        %v3245 = vpack.c.bf16 %v3234, %v3234
        %v3247 = vsel %vm1124, %v3239, 0
        %v3250 = vsel %vm1124, %v3240, 0
        %v3253 = vsel %vm1124, %v3241, 0
        %v3256 = vsel %vm1124, %v3242, 0
        %3258 = vmatprep.subr.bf16.mxu0 0
        %3259 = vmatpush1.bf16.xpose.msra.mxu0 %v3250
        %3260 = vmatprep.subr.bf16.mxu0 0
        %3261 = vmatpush1.bf16.xpose.msra.mxu0 %v3253
        %3262 = vmatprep.subr.bf16.mxu0 0
        %3263 = vmatpush1.bf16.xpose.msra.mxu0 %v3256
        %3264 = vmatprep.subr.bf16.mxu0 0
        %3265 = vmatpush1.bf16.xpose.msra.mxu0 0
        %3266 = vmatprep.subr.bf16.mxu0 0
        %3267 = vmatpush1.bf16.xpose.msra.mxu0 0
        %3268 = vmatprep.subr.bf16.mxu0 0
        %3269 = vmatpush1.bf16.xpose.msra.mxu0 0
        %3270 = vmatprep.subr.bf16.mxu0 0
        %3271 = vmatpush1.bf16.xpose.msra.mxu0 0
        %3272 = vmatprep.subr.bf16.mxu0 0
        %3273 = vmatpush1.bf16.xpose.msra.mxu0 0
        %3274 = vmatprep.subr.bf16.mxu0 0
        %3275 = vmatpush1.bf16.xpose.msra.mxu0 0
        %3276 = vmatprep.subr.bf16.mxu0 0
        %3277 = vmatpush1.bf16.xpose.msra.mxu0 0
        %3278 = vmatprep.subr.bf16.mxu0 0
        %3279 = vmatpush1.bf16.xpose.msra.mxu0 0
        %3280 = vmatprep.subr.bf16.mxu0 0
        %3281 = vmatpush1.bf16.xpose.msra.mxu0 0
        %3282 = vmatprep.subr.bf16.mxu0 0
        %3283 = vmatpush1.bf16.xpose.msra.mxu0 0
        %3284 = vmatprep.subr.bf16.mxu0 0
        %3285 = vmatpush1.bf16.xpose.msra.mxu0 0
        %3286 = vmatprep.subr.bf16.mxu0 0
        %3287 = vmatpush1.bf16.xpose.msra.mxu0 0
        %3288 = vmatprep.subr.bf16.mxu0 0
        %3289 = vmatpush1.bf16.xpose.msra.mxu0 0
        %3290 = vmatprep.mubr.bf16.mxu0 0
        %3291 = vmatmul.mubr.bf16.gmra.mrb[0].mxu0 %v3247
        %v3292 = vpop.f32.mrb[0].mxu0
        %v3293 = vadd.f32 %v638, %v3292
        %v3294 = vpop.f32.mrb[0].mxu0
        %v3295 = vpop.f32.mrb[0].mxu0
        %v3296 = vpop.f32.mrb[0].mxu0
        %3297 = vdwg.mxu0
        %vm3298 = vcmask 322560
        %v3299 = vsel %vm3298, %v3293, -inf
        %3300 = vmax.xlane.f32.xlu0 %v3299
        %v3301 = vpop.xlane.xlu0 %3300
        %v3302 = vsub.f32 %v3293, %v3301
        %v3303 = vmul.f32 %v3302, 1.442695
        %v3304 = vpow.pop %v3303
        %v3305 = vsel %vm3298, %v3304, 0.0
        %3306 = vadd.xlane.f32.xlu0 %v3305
        %v3307 = vpop.xlane.xlu0 %3306
        %v3308 = vrcp.pop %v3307
        %v3309 = vmul.f32 %v3304, %v3308
        %v3310 = vpack.c.bf16 %v3309, %v3309
        %v3312 = vsel %vm1199, %v3310, 0
        %v3315 = vsel %vm756, %v3245, 0
        %3317 = vmatprep.subr.bf16.mxu0 0
        %3318 = vmatpush1.bf16.msra.mxu0 %v3243
        %3319 = vmatprep.subr.bf16.mxu0 0
        %3320 = vmatpush1.bf16.msra.mxu0 %v3244
        %3321 = vmatprep.subr.bf16.mxu0 0
        %3322 = vmatpush1.bf16.msra.mxu0 %v3315
        %3323 = vmatprep.subr.bf16.mxu0 0
        %3324 = vmatpush1.bf16.msra.mxu0 0
        %3325 = vmatprep.subr.bf16.mxu0 0
        %3326 = vmatpush1.bf16.msra.mxu0 0
        %3327 = vmatprep.subr.bf16.mxu0 0
        %3328 = vmatpush1.bf16.msra.mxu0 0
        %3329 = vmatprep.subr.bf16.mxu0 0
        %3330 = vmatpush1.bf16.msra.mxu0 0
        %3331 = vmatprep.subr.bf16.mxu0 0
        %3332 = vmatpush1.bf16.msra.mxu0 0
        %3333 = vmatprep.subr.bf16.mxu0 0
        %3334 = vmatpush1.bf16.msra.mxu0 0
        %3335 = vmatprep.subr.bf16.mxu0 0
        %3336 = vmatpush1.bf16.msra.mxu0 0
        %3337 = vmatprep.subr.bf16.mxu0 0
        %3338 = vmatpush1.bf16.msra.mxu0 0
        %3339 = vmatprep.subr.bf16.mxu0 0
        %3340 = vmatpush1.bf16.msra.mxu0 0
        %3341 = vmatprep.subr.bf16.mxu0 0
        %3342 = vmatpush1.bf16.msra.mxu0 0
        %3343 = vmatprep.subr.bf16.mxu0 0
        %3344 = vmatpush1.bf16.msra.mxu0 0
        %3345 = vmatprep.subr.bf16.mxu0 0
        %3346 = vmatpush1.bf16.msra.mxu0 0
        %3347 = vmatprep.subr.bf16.mxu0 0
        %3348 = vmatpush1.bf16.msra.mxu0 0
        %3349 = vmatprep.mubr.bf16.mxu0 0
        %3350 = vmatmul.mubr.bf16.gmra.mrb[0].mxu0 %v3312
        %v3351 = vpop.f32.mrb[0].mxu0
        %v3352 = vadd.f32 0.0, %v3351
        %v3353 = vpop.f32.mrb[0].mxu0
        %v3354 = vpop.f32.mrb[0].mxu0
        %v3355 = vpop.f32.mrb[0].mxu0
        %3356 = vdwg.mxu0
        %v3357 = vpack.c.bf16 %v3352, %v3352
        %s3358 = scalar_lea.vmem %s8, 64
        %v3359 = vld [vmem:[%s3358] sm:$0xf]
        %v3360 = vld [vmem:[%s3358 + $0x4] sm:$0xf]
        %v3361 = vld [vmem:[%s3358 + $0x8] sm:$0xf]
        %v3362 = vld [vmem:[%s3358 + $0xc] sm:$0xf]
        %3364 = vrot.lane.b32.xlu0 %v3239, 96
        %v3365 = vpop.permute.xlu0 %3364
        %3369 = vrot.lane.b32.xlu0 %v3240, 96
        %v3370 = vpop.permute.xlu0 %3369
        %3371 = vrot.lane.b32.xlu0 %v3241, 96
        %v3372 = vpop.permute.xlu0 %3371
        %3373 = vrot.lane.b32.xlu0 %v3242, 96
        %v3374 = vpop.permute.xlu0 %3373
        %v3376 = vsel %vm1124, %v3365, 0
        %v3379 = vsel %vm1124, %v3370, 0
        %v3382 = vsel %vm1124, %v3372, 0
        %v3385 = vsel %vm1124, %v3374, 0
        %3387 = vmatprep.subr.bf16.mxu0 0
        %3388 = vmatpush1.bf16.xpose.msra.mxu0 %v3379
        %3389 = vmatprep.subr.bf16.mxu0 0
        %3390 = vmatpush1.bf16.xpose.msra.mxu0 %v3382
        %3391 = vmatprep.subr.bf16.mxu0 0
        %3392 = vmatpush1.bf16.xpose.msra.mxu0 %v3385
        %3393 = vmatprep.subr.bf16.mxu0 0
        %3394 = vmatpush1.bf16.xpose.msra.mxu0 0
        %3395 = vmatprep.subr.bf16.mxu0 0
        %3396 = vmatpush1.bf16.xpose.msra.mxu0 0
        %3397 = vmatprep.subr.bf16.mxu0 0
        %3398 = vmatpush1.bf16.xpose.msra.mxu0 0
        %3399 = vmatprep.subr.bf16.mxu0 0
        %3400 = vmatpush1.bf16.xpose.msra.mxu0 0
        %3401 = vmatprep.subr.bf16.mxu0 0
        %3402 = vmatpush1.bf16.xpose.msra.mxu0 0
        %3403 = vmatprep.subr.bf16.mxu0 0
        %3404 = vmatpush1.bf16.xpose.msra.mxu0 0
        %3405 = vmatprep.subr.bf16.mxu0 0
        %3406 = vmatpush1.bf16.xpose.msra.mxu0 0
        %3407 = vmatprep.subr.bf16.mxu0 0
        %3408 = vmatpush1.bf16.xpose.msra.mxu0 0
        %3409 = vmatprep.subr.bf16.mxu0 0
        %3410 = vmatpush1.bf16.xpose.msra.mxu0 0
        %3411 = vmatprep.subr.bf16.mxu0 0
        %3412 = vmatpush1.bf16.xpose.msra.mxu0 0
        %3413 = vmatprep.subr.bf16.mxu0 0
        %3414 = vmatpush1.bf16.xpose.msra.mxu0 0
        %3415 = vmatprep.subr.bf16.mxu0 0
        %3416 = vmatpush1.bf16.xpose.msra.mxu0 0
        %3417 = vmatprep.subr.bf16.mxu0 0
        %3418 = vmatpush1.bf16.xpose.msra.mxu0 0
        %3419 = vmatprep.mubr.bf16.mxu0 0
        %3420 = vmatmul.mubr.bf16.gmra.mrb[0].mxu0 %v3376
        %v3421 = vpop.f32.mrb[0].mxu0
        %v3422 = vadd.f32 %v638, %v3421
        %v3423 = vpop.f32.mrb[0].mxu0
        %v3424 = vpop.f32.mrb[0].mxu0
        %v3425 = vpop.f32.mrb[0].mxu0
        %3426 = vdwg.mxu0
        %v3427 = vsel %vm3298, %v3422, -inf
        %3428 = vmax.xlane.f32.xlu0 %v3427
        %v3429 = vpop.xlane.xlu0 %3428
        %v3430 = vsub.f32 %v3422, %v3429
        %v3431 = vmul.f32 %v3430, 1.442695
        %v3432 = vpow.pop %v3431
        %v3433 = vsel %vm3298, %v3432, 0.0
        %3434 = vadd.xlane.f32.xlu0 %v3433
        %v3435 = vpop.xlane.xlu0 %3434
        %v3436 = vrcp.pop %v3435
        %v3437 = vmul.f32 %v3432, %v3436
        %v3438 = vpack.c.bf16 %v3437, %v3437
        %3442 = vrot.lane.b32.xlu0 %v3243, 96
        %v3443 = vpop.permute.xlu0 %3442
        %3444 = vrot.lane.b32.xlu0 %v3244, 96
        %v3445 = vpop.permute.xlu0 %3444
        %3446 = vrot.lane.b32.xlu0 %v3245, 96
        %v3447 = vpop.permute.xlu0 %3446
        %v3451 = vsel %vm1199, %v3438, 0
        %v3454 = vsel %vm756, %v3447, 0
        %3456 = vmatprep.subr.bf16.mxu0 0
        %3457 = vmatpush1.bf16.msra.mxu0 %v3443
        %3458 = vmatprep.subr.bf16.mxu0 0
        %3459 = vmatpush1.bf16.msra.mxu0 %v3445
        %3460 = vmatprep.subr.bf16.mxu0 0
        %3461 = vmatpush1.bf16.msra.mxu0 %v3454
        %3462 = vmatprep.subr.bf16.mxu0 0
        %3463 = vmatpush1.bf16.msra.mxu0 0
        %3464 = vmatprep.subr.bf16.mxu0 0
        %3465 = vmatpush1.bf16.msra.mxu0 0
        %3466 = vmatprep.subr.bf16.mxu0 0
        %3467 = vmatpush1.bf16.msra.mxu0 0
        %3468 = vmatprep.subr.bf16.mxu0 0
        %3469 = vmatpush1.bf16.msra.mxu0 0
        %3470 = vmatprep.subr.bf16.mxu0 0
        %3471 = vmatpush1.bf16.msra.mxu0 0
        %3472 = vmatprep.subr.bf16.mxu0 0
        %3473 = vmatpush1.bf16.msra.mxu0 0
        %3474 = vmatprep.subr.bf16.mxu0 0
        %3475 = vmatpush1.bf16.msra.mxu0 0
        %3476 = vmatprep.subr.bf16.mxu0 0
        %3477 = vmatpush1.bf16.msra.mxu0 0
        %3478 = vmatprep.subr.bf16.mxu0 0
        %3479 = vmatpush1.bf16.msra.mxu0 0
        %3480 = vmatprep.subr.bf16.mxu0 0
        %3481 = vmatpush1.bf16.msra.mxu0 0
        %3482 = vmatprep.subr.bf16.mxu0 0
        %3483 = vmatpush1.bf16.msra.mxu0 0
        %3484 = vmatprep.subr.bf16.mxu0 0
        %3485 = vmatpush1.bf16.msra.mxu0 0
        %3486 = vmatprep.subr.bf16.mxu0 0
        %3487 = vmatpush1.bf16.msra.mxu0 0
        %3488 = vmatprep.mubr.bf16.mxu0 0
        %3489 = vmatmul.mubr.bf16.gmra.mrb[0].mxu0 %v3451
        %v3490 = vpop.f32.mrb[0].mxu0
        %v3491 = vadd.f32 0.0, %v3490
        %v3492 = vpop.f32.mrb[0].mxu0
        %v3493 = vpop.f32.mrb[0].mxu0
        %v3494 = vpop.f32.mrb[0].mxu0
        %3495 = vdwg.mxu0
        %v3496 = vpack.c.bf16 %v3491, %v3491
        %s3497 = scalar_lea.vmem %s8, 80
        %v3498 = vld [vmem:[%s3497] sm:$0xf]
        %v3499 = vld [vmem:[%s3497 + $0x4] sm:$0xf]
        %v3500 = vld [vmem:[%s3497 + $0x8] sm:$0xf]
        %v3501 = vld [vmem:[%s3497 + $0xc] sm:$0xf]
        %v3506 = vunpack.c.l.b16 %v3498
        %v3507 = vunpack.c.l.b16 %v3499
        %v3508 = vunpack.c.l.b16 %v3500
        %v3509 = vunpack.c.l.b16 %v3501
        %v3510 = vpack.c.b16 %v3507, %v3506
        %v3511 = vpack.c.b16 %v3509, %v3508
        %v3515 = vsel %vm1124, %v3496, 0
        %3517 = vmatprep.subr.bf16.mxu0 0
        %3518 = vmatpush1.bf16.msra.mxu0 %v3510
        %3519 = vmatprep.subr.bf16.mxu0 0
        %3520 = vmatpush1.bf16.msra.mxu0 %v3511
        %3521 = vmatprep.subr.bf16.mxu0 0
        %3522 = vmatpush1.bf16.msra.mxu0 0
        %3523 = vmatprep.subr.bf16.mxu0 0
        %3524 = vmatpush1.bf16.msra.mxu0 0
        %3525 = vmatprep.subr.bf16.mxu0 0
        %3526 = vmatpush1.bf16.msra.mxu0 0
        %3527 = vmatprep.subr.bf16.mxu0 0
        %3528 = vmatpush1.bf16.msra.mxu0 0
        %3529 = vmatprep.subr.bf16.mxu0 0
        %3530 = vmatpush1.bf16.msra.mxu0 0
        %3531 = vmatprep.subr.bf16.mxu0 0
        %3532 = vmatpush1.bf16.msra.mxu0 0
        %3533 = vmatprep.subr.bf16.mxu0 0
        %3534 = vmatpush1.bf16.msra.mxu0 0
        %3535 = vmatprep.subr.bf16.mxu0 0
        %3536 = vmatpush1.bf16.msra.mxu0 0
        %3537 = vmatprep.subr.bf16.mxu0 0
        %3538 = vmatpush1.bf16.msra.mxu0 0
        %3539 = vmatprep.subr.bf16.mxu0 0
        %3540 = vmatpush1.bf16.msra.mxu0 0
        %3541 = vmatprep.subr.bf16.mxu0 0
        %3542 = vmatpush1.bf16.msra.mxu0 0
        %3543 = vmatprep.subr.bf16.mxu0 0
        %3544 = vmatpush1.bf16.msra.mxu0 0
        %3545 = vmatprep.subr.bf16.mxu0 0
        %3546 = vmatpush1.bf16.msra.mxu0 0
        %3547 = vmatprep.subr.bf16.mxu0 0
        %3548 = vmatpush1.bf16.msra.mxu0 0
        %3549 = vmatprep.mubr.bf16.mxu0 0
        %3550 = vmatmul.mubr.bf16.gmra.mrb[0].mxu0 %v3515
        %v3551 = vpop.f32.mrb[0].mxu0
        %v3552 = vadd.f32 0.0, %v3551
        %v3553 = vpop.f32.mrb[0].mxu0
        %v3554 = vpop.f32.mrb[0].mxu0
        %v3555 = vpop.f32.mrb[0].mxu0
        %3556 = vdwg.mxu0
        %v3561 = vunpack.c.l.b16 %v3359
        %v3562 = vunpack.c.l.b16 %v3360
        %v3563 = vunpack.c.l.b16 %v3361
        %v3564 = vunpack.c.l.b16 %v3362
        %v3565 = vpack.c.b16 %v3562, %v3561
        %v3566 = vpack.c.b16 %v3564, %v3563
        %v3570 = vsel %vm1124, %v3357, 0
        %3572 = vmatprep.subr.bf16.mxu0 0
        %3573 = vmatpush1.bf16.msra.mxu0 %v3565
        %3574 = vmatprep.subr.bf16.mxu0 0
        %3575 = vmatpush1.bf16.msra.mxu0 %v3566
        %3576 = vmatprep.subr.bf16.mxu0 0
        %3577 = vmatpush1.bf16.msra.mxu0 0
        %3578 = vmatprep.subr.bf16.mxu0 0
        %3579 = vmatpush1.bf16.msra.mxu0 0
        %3580 = vmatprep.subr.bf16.mxu0 0
        %3581 = vmatpush1.bf16.msra.mxu0 0
        %3582 = vmatprep.subr.bf16.mxu0 0
        %3583 = vmatpush1.bf16.msra.mxu0 0
        %3584 = vmatprep.subr.bf16.mxu0 0
        %3585 = vmatpush1.bf16.msra.mxu0 0
        %3586 = vmatprep.subr.bf16.mxu0 0
        %3587 = vmatpush1.bf16.msra.mxu0 0
        %3588 = vmatprep.subr.bf16.mxu0 0
        %3589 = vmatpush1.bf16.msra.mxu0 0
        %3590 = vmatprep.subr.bf16.mxu0 0
        %3591 = vmatpush1.bf16.msra.mxu0 0
        %3592 = vmatprep.subr.bf16.mxu0 0
        %3593 = vmatpush1.bf16.msra.mxu0 0
        %3594 = vmatprep.subr.bf16.mxu0 0
        %3595 = vmatpush1.bf16.msra.mxu0 0
        %3596 = vmatprep.subr.bf16.mxu0 0
        %3597 = vmatpush1.bf16.msra.mxu0 0
        %3598 = vmatprep.subr.bf16.mxu0 0
        %3599 = vmatpush1.bf16.msra.mxu0 0
        %3600 = vmatprep.subr.bf16.mxu0 0
        %3601 = vmatpush1.bf16.msra.mxu0 0
        %3602 = vmatprep.subr.bf16.mxu0 0
        %3603 = vmatpush1.bf16.msra.mxu0 0
        %3604 = vmatprep.mubr.bf16.mxu0 0
        %3605 = vmatmul.mubr.bf16.gmra.mrb[0].mxu0 %v3570
        %v3606 = vpop.f32.mrb[0].mxu0
        %v3607 = vadd.f32 %v3552, %v3606
        %v3608 = vpop.f32.mrb[0].mxu0
        %v3609 = vpop.f32.mrb[0].mxu0
        %v3610 = vpop.f32.mrb[0].mxu0
        %3611 = vdwg.mxu0
        %3612 = vrot.lane.b32.xlu0 %v3239, 64
        %v3613 = vpop.permute.xlu0 %3612
        %3614 = vrot.lane.b32.xlu0 %v3240, 64
        %v3615 = vpop.permute.xlu0 %3614
        %3616 = vrot.lane.b32.xlu0 %v3241, 64
        %v3617 = vpop.permute.xlu0 %3616
        %3618 = vrot.lane.b32.xlu0 %v3242, 64
        %v3619 = vpop.permute.xlu0 %3618
        %v3621 = vsel %vm1124, %v3613, 0
        %v3624 = vsel %vm1124, %v3615, 0
        %v3627 = vsel %vm1124, %v3617, 0
        %v3630 = vsel %vm1124, %v3619, 0
        %3632 = vmatprep.subr.bf16.mxu0 0
        %3633 = vmatpush1.bf16.xpose.msra.mxu0 %v3624
        %3634 = vmatprep.subr.bf16.mxu0 0
        %3635 = vmatpush1.bf16.xpose.msra.mxu0 %v3627
        %3636 = vmatprep.subr.bf16.mxu0 0
        %3637 = vmatpush1.bf16.xpose.msra.mxu0 %v3630
        %3638 = vmatprep.subr.bf16.mxu0 0
        %3639 = vmatpush1.bf16.xpose.msra.mxu0 0
        %3640 = vmatprep.subr.bf16.mxu0 0
        %3641 = vmatpush1.bf16.xpose.msra.mxu0 0
        %3642 = vmatprep.subr.bf16.mxu0 0
        %3643 = vmatpush1.bf16.xpose.msra.mxu0 0
        %3644 = vmatprep.subr.bf16.mxu0 0
        %3645 = vmatpush1.bf16.xpose.msra.mxu0 0
        %3646 = vmatprep.subr.bf16.mxu0 0
        %3647 = vmatpush1.bf16.xpose.msra.mxu0 0
        %3648 = vmatprep.subr.bf16.mxu0 0
        %3649 = vmatpush1.bf16.xpose.msra.mxu0 0
        %3650 = vmatprep.subr.bf16.mxu0 0
        %3651 = vmatpush1.bf16.xpose.msra.mxu0 0
        %3652 = vmatprep.subr.bf16.mxu0 0
        %3653 = vmatpush1.bf16.xpose.msra.mxu0 0
        %3654 = vmatprep.subr.bf16.mxu0 0
        %3655 = vmatpush1.bf16.xpose.msra.mxu0 0
        %3656 = vmatprep.subr.bf16.mxu0 0
        %3657 = vmatpush1.bf16.xpose.msra.mxu0 0
        %3658 = vmatprep.subr.bf16.mxu0 0
        %3659 = vmatpush1.bf16.xpose.msra.mxu0 0
        %3660 = vmatprep.subr.bf16.mxu0 0
        %3661 = vmatpush1.bf16.xpose.msra.mxu0 0
        %3662 = vmatprep.subr.bf16.mxu0 0
        %3663 = vmatpush1.bf16.xpose.msra.mxu0 0
        %3664 = vmatprep.mubr.bf16.mxu0 0
        %3665 = vmatmul.mubr.bf16.gmra.mrb[0].mxu0 %v3621
        %v3666 = vpop.f32.mrb[0].mxu0
        %v3667 = vadd.f32 %v638, %v3666
        %v3668 = vpop.f32.mrb[0].mxu0
        %v3669 = vpop.f32.mrb[0].mxu0
        %v3670 = vpop.f32.mrb[0].mxu0
        %3671 = vdwg.mxu0
        %v3672 = vsel %vm3298, %v3667, -inf
        %3673 = vmax.xlane.f32.xlu0 %v3672
        %v3674 = vpop.xlane.xlu0 %3673
        %v3675 = vsub.f32 %v3667, %v3674
        %v3676 = vmul.f32 %v3675, 1.442695
        %v3677 = vpow.pop %v3676
        %v3678 = vsel %vm3298, %v3677, 0.0
        %3679 = vadd.xlane.f32.xlu0 %v3678
        %v3680 = vpop.xlane.xlu0 %3679
        %v3681 = vrcp.pop %v3680
        %v3682 = vmul.f32 %v3677, %v3681
        %v3683 = vpack.c.bf16 %v3682, %v3682
        %3684 = vrot.lane.b32.xlu0 %v3243, 64
        %v3685 = vpop.permute.xlu0 %3684
        %3686 = vrot.lane.b32.xlu0 %v3244, 64
        %v3687 = vpop.permute.xlu0 %3686
        %3688 = vrot.lane.b32.xlu0 %v3245, 64
        %v3689 = vpop.permute.xlu0 %3688
        %v3693 = vsel %vm1199, %v3683, 0
        %v3696 = vsel %vm756, %v3689, 0
        %3698 = vmatprep.subr.bf16.mxu0 0
        %3699 = vmatpush1.bf16.msra.mxu0 %v3685
        %3700 = vmatprep.subr.bf16.mxu0 0
        %3701 = vmatpush1.bf16.msra.mxu0 %v3687
        %3702 = vmatprep.subr.bf16.mxu0 0
        %3703 = vmatpush1.bf16.msra.mxu0 %v3696
        %3704 = vmatprep.subr.bf16.mxu0 0
        %3705 = vmatpush1.bf16.msra.mxu0 0
        %3706 = vmatprep.subr.bf16.mxu0 0
        %3707 = vmatpush1.bf16.msra.mxu0 0
        %3708 = vmatprep.subr.bf16.mxu0 0
        %3709 = vmatpush1.bf16.msra.mxu0 0
        %3710 = vmatprep.subr.bf16.mxu0 0
        %3711 = vmatpush1.bf16.msra.mxu0 0
        %3712 = vmatprep.subr.bf16.mxu0 0
        %3713 = vmatpush1.bf16.msra.mxu0 0
        %3714 = vmatprep.subr.bf16.mxu0 0
        %3715 = vmatpush1.bf16.msra.mxu0 0
        %3716 = vmatprep.subr.bf16.mxu0 0
        %3717 = vmatpush1.bf16.msra.mxu0 0
        %3718 = vmatprep.subr.bf16.mxu0 0
        %3719 = vmatpush1.bf16.msra.mxu0 0
        %3720 = vmatprep.subr.bf16.mxu0 0
        %3721 = vmatpush1.bf16.msra.mxu0 0
        %3722 = vmatprep.subr.bf16.mxu0 0
        %3723 = vmatpush1.bf16.msra.mxu0 0
        %3724 = vmatprep.subr.bf16.mxu0 0
        %3725 = vmatpush1.bf16.msra.mxu0 0
        %3726 = vmatprep.subr.bf16.mxu0 0
        %3727 = vmatpush1.bf16.msra.mxu0 0
        %3728 = vmatprep.subr.bf16.mxu0 0
        %3729 = vmatpush1.bf16.msra.mxu0 0
        %3730 = vmatprep.mubr.bf16.mxu0 0
        %3731 = vmatmul.mubr.bf16.gmra.mrb[0].mxu0 %v3693
        %v3732 = vpop.f32.mrb[0].mxu0
        %v3733 = vadd.f32 0.0, %v3732
        %v3734 = vpop.f32.mrb[0].mxu0
        %v3735 = vpop.f32.mrb[0].mxu0
        %v3736 = vpop.f32.mrb[0].mxu0
        %3737 = vdwg.mxu0
        %v3738 = vpack.c.bf16 %v3733, %v3733
        %s3739 = scalar_lea.vmem %s8, 96
        %v3740 = vld [vmem:[%s3739] sm:$0xf]
        %v3741 = vld [vmem:[%s3739 + $0x4] sm:$0xf]
        %v3742 = vld [vmem:[%s3739 + $0x8] sm:$0xf]
        %v3743 = vld [vmem:[%s3739 + $0xc] sm:$0xf]
        %v3748 = vunpack.c.l.b16 %v3740
        %v3749 = vunpack.c.l.b16 %v3741
        %v3750 = vunpack.c.l.b16 %v3742
        %v3751 = vunpack.c.l.b16 %v3743
        %v3752 = vpack.c.b16 %v3749, %v3748
        %v3753 = vpack.c.b16 %v3751, %v3750
        %v3757 = vsel %vm1124, %v3738, 0
        %3759 = vmatprep.subr.bf16.mxu0 0
        %3760 = vmatpush1.bf16.msra.mxu0 %v3752
        %3761 = vmatprep.subr.bf16.mxu0 0
        %3762 = vmatpush1.bf16.msra.mxu0 %v3753
        %3763 = vmatprep.subr.bf16.mxu0 0
        %3764 = vmatpush1.bf16.msra.mxu0 0
        %3765 = vmatprep.subr.bf16.mxu0 0
        %3766 = vmatpush1.bf16.msra.mxu0 0
        %3767 = vmatprep.subr.bf16.mxu0 0
        %3768 = vmatpush1.bf16.msra.mxu0 0
        %3769 = vmatprep.subr.bf16.mxu0 0
        %3770 = vmatpush1.bf16.msra.mxu0 0
        %3771 = vmatprep.subr.bf16.mxu0 0
        %3772 = vmatpush1.bf16.msra.mxu0 0
        %3773 = vmatprep.subr.bf16.mxu0 0
        %3774 = vmatpush1.bf16.msra.mxu0 0
        %3775 = vmatprep.subr.bf16.mxu0 0
        %3776 = vmatpush1.bf16.msra.mxu0 0
        %3777 = vmatprep.subr.bf16.mxu0 0
        %3778 = vmatpush1.bf16.msra.mxu0 0
        %3779 = vmatprep.subr.bf16.mxu0 0
        %3780 = vmatpush1.bf16.msra.mxu0 0
        %3781 = vmatprep.subr.bf16.mxu0 0
        %3782 = vmatpush1.bf16.msra.mxu0 0
        %3783 = vmatprep.subr.bf16.mxu0 0
        %3784 = vmatpush1.bf16.msra.mxu0 0
        %3785 = vmatprep.subr.bf16.mxu0 0
        %3786 = vmatpush1.bf16.msra.mxu0 0
        %3787 = vmatprep.subr.bf16.mxu0 0
        %3788 = vmatpush1.bf16.msra.mxu0 0
        %3789 = vmatprep.subr.bf16.mxu0 0
        %3790 = vmatpush1.bf16.msra.mxu0 0
        %3791 = vmatprep.mubr.bf16.mxu0 0
        %3792 = vmatmul.mubr.bf16.gmra.mrb[0].mxu0 %v3757
        %v3793 = vpop.f32.mrb[0].mxu0
        %v3794 = vadd.f32 0.0, %v3793
        %v3795 = vpop.f32.mrb[0].mxu0
        %v3796 = vpop.f32.mrb[0].mxu0
        %v3797 = vpop.f32.mrb[0].mxu0
        %3798 = vdwg.mxu0
        %v3799 = vadd.f32 %v3607, %v3794
        %3800 = vrot.lane.b32.xlu0 %v3239, 32
        %v3801 = vpop.permute.xlu0 %3800
        %3802 = vrot.lane.b32.xlu0 %v3240, 32
        %v3803 = vpop.permute.xlu0 %3802
        %3804 = vrot.lane.b32.xlu0 %v3241, 32
        %v3805 = vpop.permute.xlu0 %3804
        %3806 = vrot.lane.b32.xlu0 %v3242, 32
        %v3807 = vpop.permute.xlu0 %3806
        %v3809 = vsel %vm1124, %v3801, 0
        %v3812 = vsel %vm1124, %v3803, 0
        %v3815 = vsel %vm1124, %v3805, 0
        %v3818 = vsel %vm1124, %v3807, 0
        %3820 = vmatprep.subr.bf16.mxu0 0
        %3821 = vmatpush1.bf16.xpose.msra.mxu0 %v3812
        %3822 = vmatprep.subr.bf16.mxu0 0
        %3823 = vmatpush1.bf16.xpose.msra.mxu0 %v3815
        %3824 = vmatprep.subr.bf16.mxu0 0
        %3825 = vmatpush1.bf16.xpose.msra.mxu0 %v3818
        %3826 = vmatprep.subr.bf16.mxu0 0
        %3827 = vmatpush1.bf16.xpose.msra.mxu0 0
        %3828 = vmatprep.subr.bf16.mxu0 0
        %3829 = vmatpush1.bf16.xpose.msra.mxu0 0
        %3830 = vmatprep.subr.bf16.mxu0 0
        %3831 = vmatpush1.bf16.xpose.msra.mxu0 0
        %3832 = vmatprep.subr.bf16.mxu0 0
        %3833 = vmatpush1.bf16.xpose.msra.mxu0 0
        %3834 = vmatprep.subr.bf16.mxu0 0
        %3835 = vmatpush1.bf16.xpose.msra.mxu0 0
        %3836 = vmatprep.subr.bf16.mxu0 0
        %3837 = vmatpush1.bf16.xpose.msra.mxu0 0
        %3838 = vmatprep.subr.bf16.mxu0 0
        %3839 = vmatpush1.bf16.xpose.msra.mxu0 0
        %3840 = vmatprep.subr.bf16.mxu0 0
        %3841 = vmatpush1.bf16.xpose.msra.mxu0 0
        %3842 = vmatprep.subr.bf16.mxu0 0
        %3843 = vmatpush1.bf16.xpose.msra.mxu0 0
        %3844 = vmatprep.subr.bf16.mxu0 0
        %3845 = vmatpush1.bf16.xpose.msra.mxu0 0
        %3846 = vmatprep.subr.bf16.mxu0 0
        %3847 = vmatpush1.bf16.xpose.msra.mxu0 0
        %3848 = vmatprep.subr.bf16.mxu0 0
        %3849 = vmatpush1.bf16.xpose.msra.mxu0 0
        %3850 = vmatprep.subr.bf16.mxu0 0
        %3851 = vmatpush1.bf16.xpose.msra.mxu0 0
        %3852 = vmatprep.mubr.bf16.mxu0 0
        %3853 = vmatmul.mubr.bf16.gmra.mrb[0].mxu0 %v3809
        %v3854 = vpop.f32.mrb[0].mxu0
        %v3855 = vadd.f32 %v638, %v3854
        %v3856 = vpop.f32.mrb[0].mxu0
        %v3857 = vpop.f32.mrb[0].mxu0
        %v3858 = vpop.f32.mrb[0].mxu0
        %3859 = vdwg.mxu0
        %v3860 = vsel %vm3298, %v3855, -inf
        %3861 = vmax.xlane.f32.xlu0 %v3860
        %v3862 = vpop.xlane.xlu0 %3861
        %v3863 = vsub.f32 %v3855, %v3862
        %v3864 = vmul.f32 %v3863, 1.442695
        %v3865 = vpow.pop %v3864
        %v3866 = vsel %vm3298, %v3865, 0.0
        %3867 = vadd.xlane.f32.xlu0 %v3866
        %v3868 = vpop.xlane.xlu0 %3867
        %v3869 = vrcp.pop %v3868
        %v3870 = vmul.f32 %v3865, %v3869
        %v3871 = vpack.c.bf16 %v3870, %v3870
        %3872 = vrot.lane.b32.xlu0 %v3243, 32
        %v3873 = vpop.permute.xlu0 %3872
        %3874 = vrot.lane.b32.xlu0 %v3244, 32
        %v3875 = vpop.permute.xlu0 %3874
        %3876 = vrot.lane.b32.xlu0 %v3245, 32
        %v3877 = vpop.permute.xlu0 %3876
        %v3881 = vsel %vm1199, %v3871, 0
        %v3884 = vsel %vm756, %v3877, 0
        %3886 = vmatprep.subr.bf16.mxu0 0
        %3887 = vmatpush1.bf16.msra.mxu0 %v3873
        %3888 = vmatprep.subr.bf16.mxu0 0
        %3889 = vmatpush1.bf16.msra.mxu0 %v3875
        %3890 = vmatprep.subr.bf16.mxu0 0
        %3891 = vmatpush1.bf16.msra.mxu0 %v3884
        %3892 = vmatprep.subr.bf16.mxu0 0
        %3893 = vmatpush1.bf16.msra.mxu0 0
        %3894 = vmatprep.subr.bf16.mxu0 0
        %3895 = vmatpush1.bf16.msra.mxu0 0
        %3896 = vmatprep.subr.bf16.mxu0 0
        %3897 = vmatpush1.bf16.msra.mxu0 0
        %3898 = vmatprep.subr.bf16.mxu0 0
        %3899 = vmatpush1.bf16.msra.mxu0 0
        %3900 = vmatprep.subr.bf16.mxu0 0
        %3901 = vmatpush1.bf16.msra.mxu0 0
        %3902 = vmatprep.subr.bf16.mxu0 0
        %3903 = vmatpush1.bf16.msra.mxu0 0
        %3904 = vmatprep.subr.bf16.mxu0 0
        %3905 = vmatpush1.bf16.msra.mxu0 0
        %3906 = vmatprep.subr.bf16.mxu0 0
        %3907 = vmatpush1.bf16.msra.mxu0 0
        %3908 = vmatprep.subr.bf16.mxu0 0
        %3909 = vmatpush1.bf16.msra.mxu0 0
        %3910 = vmatprep.subr.bf16.mxu0 0
        %3911 = vmatpush1.bf16.msra.mxu0 0
        %3912 = vmatprep.subr.bf16.mxu0 0
        %3913 = vmatpush1.bf16.msra.mxu0 0
        %3914 = vmatprep.subr.bf16.mxu0 0
        %3915 = vmatpush1.bf16.msra.mxu0 0
        %3916 = vmatprep.subr.bf16.mxu0 0
        %3917 = vmatpush1.bf16.msra.mxu0 0
        %3918 = vmatprep.mubr.bf16.mxu0 0
        %3919 = vmatmul.mubr.bf16.gmra.mrb[0].mxu0 %v3881
        %v3920 = vpop.f32.mrb[0].mxu0
        %v3921 = vadd.f32 0.0, %v3920
        %v3922 = vpop.f32.mrb[0].mxu0
        %v3923 = vpop.f32.mrb[0].mxu0
        %v3924 = vpop.f32.mrb[0].mxu0
        %3925 = vdwg.mxu0
        %v3926 = vpack.c.bf16 %v3921, %v3921
        %s3927 = scalar_lea.vmem %s8, 112
        %v3928 = vld [vmem:[%s3927] sm:$0xf]
        %v3929 = vld [vmem:[%s3927 + $0x4] sm:$0xf]
        %v3930 = vld [vmem:[%s3927 + $0x8] sm:$0xf]
        %v3931 = vld [vmem:[%s3927 + $0xc] sm:$0xf]
        %v3936 = vunpack.c.l.b16 %v3928
        %v3937 = vunpack.c.l.b16 %v3929
        %v3938 = vunpack.c.l.b16 %v3930
        %v3939 = vunpack.c.l.b16 %v3931
        %v3940 = vpack.c.b16 %v3937, %v3936
        %v3941 = vpack.c.b16 %v3939, %v3938
        %v3945 = vsel %vm1124, %v3926, 0
        %3947 = vmatprep.subr.bf16.mxu0 0
        %3948 = vmatpush1.bf16.msra.mxu0 %v3940
        %3949 = vmatprep.subr.bf16.mxu0 0
        %3950 = vmatpush1.bf16.msra.mxu0 %v3941
        %3951 = vmatprep.subr.bf16.mxu0 0
        %3952 = vmatpush1.bf16.msra.mxu0 0
        %3953 = vmatprep.subr.bf16.mxu0 0
        %3954 = vmatpush1.bf16.msra.mxu0 0
        %3955 = vmatprep.subr.bf16.mxu0 0
        %3956 = vmatpush1.bf16.msra.mxu0 0
        %3957 = vmatprep.subr.bf16.mxu0 0
        %3958 = vmatpush1.bf16.msra.mxu0 0
        %3959 = vmatprep.subr.bf16.mxu0 0
        %3960 = vmatpush1.bf16.msra.mxu0 0
        %3961 = vmatprep.subr.bf16.mxu0 0
        %3962 = vmatpush1.bf16.msra.mxu0 0
        %3963 = vmatprep.subr.bf16.mxu0 0
        %3964 = vmatpush1.bf16.msra.mxu0 0
        %3965 = vmatprep.subr.bf16.mxu0 0
        %3966 = vmatpush1.bf16.msra.mxu0 0
        %3967 = vmatprep.subr.bf16.mxu0 0
        %3968 = vmatpush1.bf16.msra.mxu0 0
        %3969 = vmatprep.subr.bf16.mxu0 0
        %3970 = vmatpush1.bf16.msra.mxu0 0
        %3971 = vmatprep.subr.bf16.mxu0 0
        %3972 = vmatpush1.bf16.msra.mxu0 0
        %3973 = vmatprep.subr.bf16.mxu0 0
        %3974 = vmatpush1.bf16.msra.mxu0 0
        %3975 = vmatprep.subr.bf16.mxu0 0
        %3976 = vmatpush1.bf16.msra.mxu0 0
        %3977 = vmatprep.subr.bf16.mxu0 0
        %3978 = vmatpush1.bf16.msra.mxu0 0
        %3979 = vmatprep.mubr.bf16.mxu0 0
        %3980 = vmatmul.mubr.bf16.gmra.mrb[0].mxu0 %v3945
        %v3981 = vpop.f32.mrb[0].mxu0
        %v3982 = vadd.f32 0.0, %v3981
        %v3983 = vpop.f32.mrb[0].mxu0
        %v3984 = vpop.f32.mrb[0].mxu0
        %v3985 = vpop.f32.mrb[0].mxu0
        %3986 = vdwg.mxu0
        %v3987 = vadd.f32 %v3799, %v3982
        %s3988 = scalar_lea.vmem %s9, 1
        %v3989 = vld [vmem:[%s3988] sm:$0x1]
        %v3991 = vlaneseq
        %v3992 = vshrl.u32 %v3991, 7
        %v3993 = vsub.s32 0, %v3992
        %v3994 = vrot.slane %v3989, %v3993
        %v3996 = vadd.f32 %v3987, %v3994
        %v3997 = vadd.f32 %v2939, %v3996
        %s3998 = scalar_lea.vmem %s14, 1
        %v3999 = vld [vmem:[%s3998] sm:$0x1]
        %s4000 = scalar_lea.vmem %s15, 1
        %v4001 = vld [vmem:[%s4000] sm:$0x1]
        %v4002 = vsel %vm756, %v3997, 0.0
        %4003 = vadd.xlane.f32.xlu0 %v4002
        %v4004 = vpop.xlane.xlu0 %4003
        %v4005 = vmul.f32 %v4004, %v2373
        %v4006 = vsub.f32 %v3997, %v4005
        %v4007 = vmul.f32 %v4006, %v4006
        %v4008 = vsel %vm756, %v4007, 0.0
        %4009 = vadd.xlane.f32.xlu0 %v4008
        %v4010 = vpop.xlane.xlu0 %4009
        %v4011 = vmul.f32 %v4010, %v2373
        %v4012 = vadd.f32 %v4011, 1e-05
        %v4013 = vrsqrt.pop %v4012
        %v4014 = vmul.f32 %v4006, %v4013
        %v4016 = vlaneseq
        %v4017 = vshrl.u32 %v4016, 7
        %v4018 = vsub.s32 0, %v4017
        %v4019 = vrot.slane %v3999, %v4018
        %v4021 = vmul.f32 %v4014, %v4019
        %v4023 = vlaneseq
        %v4024 = vshrl.u32 %v4023, 7
        %v4025 = vsub.s32 0, %v4024
        %v4026 = vrot.slane %v4001, %v4025
        %v4028 = vadd.f32 %v4021, %v4026
        %v4029 = vpack.c.bf16 %v4028, %v4028
        %s4030 = scalar_lea.vmem %s10, 128
        %v4031 = vld [vmem:[%s4030] sm:$0xff]
        %v4032 = vld [vmem:[%s4030 + $0x8] sm:$0xff]
        %v4033 = vld [vmem:[%s4030 + $0x10] sm:$0xff]
        %v4034 = vld [vmem:[%s4030 + $0x18] sm:$0xff]
        %v4035 = vld [vmem:[%s4030 + $0x20] sm:$0xff]
        %v4036 = vld [vmem:[%s4030 + $0x28] sm:$0xff]
        %v4037 = vld [vmem:[%s4030 + $0x30] sm:$0xff]
        %v4038 = vld [vmem:[%s4030 + $0x38] sm:$0xff]
        %v4039 = vld [vmem:[%s4030 + $0x40] sm:$0xff]
        %v4040 = vld [vmem:[%s4030 + $0x48] sm:$0xff]
        %v4041 = vld [vmem:[%s4030 + $0x50] sm:$0xff]
        %v4042 = vld [vmem:[%s4030 + $0x58] sm:$0xff]
        %v4043 = vld [vmem:[%s4030 + $0x60] sm:$0xff]
        %v4044 = vld [vmem:[%s4030 + $0x68] sm:$0xff]
        %v4045 = vld [vmem:[%s4030 + $0x70] sm:$0xff]
        %v4046 = vld [vmem:[%s4030 + $0x78] sm:$0xff]
        %s4047 = scalar_lea.vmem %s11, 2
        %v4048 = vld [vmem:[%s4047] sm:$0x3]
        %v4050 = vlaneseq
        %v4051 = vshrl.u32 %v4050, 7
        %v4052 = vsub.s32 0, %v4051
        %v4053 = vrot.slane %v4048, %v4052
        %v4054 = vlaneseq
        %v4055 = vshrl.u32 %v4054, 7
        %v4056 = vsub.s32 1, %v4055
        %v4057 = vrot.slane %v4048, %v4056
        %v4076 = vunpack.c.l.b16 %v4031
        %v4077 = vunpack.c.h.b16 %v4031
        %v4078 = vunpack.c.l.b16 %v4032
        %v4079 = vunpack.c.h.b16 %v4032
        %v4080 = vunpack.c.l.b16 %v4033
        %v4081 = vunpack.c.h.b16 %v4033
        %v4082 = vunpack.c.l.b16 %v4034
        %v4083 = vunpack.c.h.b16 %v4034
        %v4084 = vunpack.c.l.b16 %v4035
        %v4085 = vunpack.c.h.b16 %v4035
        %v4086 = vunpack.c.l.b16 %v4036
        %v4087 = vunpack.c.h.b16 %v4036
        %v4088 = vunpack.c.l.b16 %v4037
        %v4089 = vunpack.c.h.b16 %v4037
        %v4090 = vunpack.c.l.b16 %v4038
        %v4091 = vunpack.c.h.b16 %v4038
        %v4092 = vunpack.c.l.b16 %v4039
        %v4093 = vunpack.c.h.b16 %v4039
        %v4094 = vunpack.c.l.b16 %v4040
        %v4095 = vunpack.c.h.b16 %v4040
        %v4096 = vunpack.c.l.b16 %v4041
        %v4097 = vunpack.c.h.b16 %v4041
        %v4098 = vunpack.c.l.b16 %v4042
        %v4099 = vunpack.c.h.b16 %v4042
        %v4100 = vunpack.c.l.b16 %v4043
        %v4101 = vunpack.c.h.b16 %v4043
        %v4102 = vunpack.c.l.b16 %v4044
        %v4103 = vunpack.c.h.b16 %v4044
        %v4104 = vunpack.c.l.b16 %v4045
        %v4105 = vunpack.c.h.b16 %v4045
        %v4106 = vunpack.c.l.b16 %v4046
        %v4107 = vunpack.c.h.b16 %v4046
        %v4108 = vpack.c.b16 %v4078, %v4076
        %v4109 = vpack.c.b16 %v4079, %v4077
        %v4110 = vpack.c.b16 %v4082, %v4080
        %v4111 = vpack.c.b16 %v4083, %v4081
        %v4112 = vpack.c.b16 %v4086, %v4084
        %v4113 = vpack.c.b16 %v4087, %v4085
        %v4114 = vpack.c.b16 %v4090, %v4088
        %v4115 = vpack.c.b16 %v4091, %v4089
        %v4116 = vpack.c.b16 %v4094, %v4092
        %v4117 = vpack.c.b16 %v4095, %v4093
        %v4118 = vpack.c.b16 %v4098, %v4096
        %v4119 = vpack.c.b16 %v4099, %v4097
        %v4120 = vpack.c.b16 %v4102, %v4100
        %v4121 = vpack.c.b16 %v4103, %v4101
        %v4122 = vpack.c.b16 %v4106, %v4104
        %v4123 = vpack.c.b16 %v4107, %v4105
        %4140 = vmatprep.subr.bf16.mxu0 %v4109
        %4141 = vmatpush1.bf16.msra.mxu0 %v4108
        %4142 = vmatprep.subr.bf16.mxu0 %v4111
        %4143 = vmatpush1.bf16.msra.mxu0 %v4110
        %4144 = vmatprep.subr.bf16.mxu0 %v4113
        %4145 = vmatpush1.bf16.msra.mxu0 %v4112
        %4146 = vmatprep.subr.bf16.mxu0 %v4115
        %4147 = vmatpush1.bf16.msra.mxu0 %v4114
        %4148 = vmatprep.subr.bf16.mxu0 %v4117
        %4149 = vmatpush1.bf16.msra.mxu0 %v4116
        %4150 = vmatprep.subr.bf16.mxu0 %v4119
        %4151 = vmatpush1.bf16.msra.mxu0 %v4118
        %4152 = vmatprep.subr.bf16.mxu0 %v4121
        %4153 = vmatpush1.bf16.msra.mxu0 %v4120
        %4154 = vmatprep.subr.bf16.mxu0 %v4123
        %4155 = vmatpush1.bf16.msra.mxu0 %v4122
        %4156 = vmatprep.subr.bf16.mxu0 0
        %4157 = vmatpush1.bf16.msra.mxu0 0
        %4158 = vmatprep.subr.bf16.mxu0 0
        %4159 = vmatpush1.bf16.msra.mxu0 0
        %4160 = vmatprep.subr.bf16.mxu0 0
        %4161 = vmatpush1.bf16.msra.mxu0 0
        %4162 = vmatprep.subr.bf16.mxu0 0
        %4163 = vmatpush1.bf16.msra.mxu0 0
        %4164 = vmatprep.subr.bf16.mxu0 0
        %4165 = vmatpush1.bf16.msra.mxu0 0
        %4166 = vmatprep.subr.bf16.mxu0 0
        %4167 = vmatpush1.bf16.msra.mxu0 0
        %4168 = vmatprep.subr.bf16.mxu0 0
        %4169 = vmatpush1.bf16.msra.mxu0 0
        %4170 = vmatprep.subr.bf16.mxu0 0
        %4171 = vmatpush1.bf16.msra.mxu0 0
        %4172 = vmatprep.mubr.bf16.mxu0 0
        %4173 = vmatmul.mubr.bf16.gmra.mrb[0].mxu0 %v4029
        %v4174 = vpop.f32.mrb[0].mxu0
        %v4175 = vadd.f32 %v4053, %v4174
        %v4176 = vpop.f32.mrb[0].mxu0
        %v4177 = vadd.f32 %v4057, %v4176
        %v4178 = vpop.f32.mrb[0].mxu0
        %v4179 = vpop.f32.mrb[0].mxu0
        %4180 = vdwg.mxu0
        %v4181 = vmul.f32 %v4175, 0.5
        %v4182 = vmul.f32 %v4177, 0.5
        %v4183 = vmul.f32 %v4175, 0.70710677
        %v4184 = vmul.f32 %v4177, 0.70710677
        %v4185 = verf.f32.pop %v4183
        %v4186 = verf.f32.pop %v4184
        %v4187 = vadd.f32 %v4185, 1.0
        %v4188 = vadd.f32 %v4186, 1.0
        %v4189 = vmul.f32 %v4181, %v4187
        %v4190 = vmul.f32 %v4182, %v4188
        %v4191 = vpack.c.bf16 %v4189, %v4189
        %v4192 = vpack.c.bf16 %v4190, %v4190
        %s4193 = scalar_lea.vmem %s12, 128
        %v4194 = vld [vmem:[%s4193] sm:$0xf]
        %v4195 = vld [vmem:[%s4193 + $0x4] sm:$0xf]
        %v4196 = vld [vmem:[%s4193 + $0x8] sm:$0xf]
        %v4197 = vld [vmem:[%s4193 + $0xc] sm:$0xf]
        %v4198 = vld [vmem:[%s4193 + $0x10] sm:$0xf]
        %v4199 = vld [vmem:[%s4193 + $0x14] sm:$0xf]
        %v4200 = vld [vmem:[%s4193 + $0x18] sm:$0xf]
        %v4201 = vld [vmem:[%s4193 + $0x1c] sm:$0xf]
        %v4202 = vld [vmem:[%s4193 + $0x20] sm:$0xf]
        %v4203 = vld [vmem:[%s4193 + $0x24] sm:$0xf]
        %v4204 = vld [vmem:[%s4193 + $0x28] sm:$0xf]
        %v4205 = vld [vmem:[%s4193 + $0x2c] sm:$0xf]
        %v4206 = vld [vmem:[%s4193 + $0x30] sm:$0xf]
        %v4207 = vld [vmem:[%s4193 + $0x34] sm:$0xf]
        %v4208 = vld [vmem:[%s4193 + $0x38] sm:$0xf]
        %v4209 = vld [vmem:[%s4193 + $0x3c] sm:$0xf]
        %v4210 = vld [vmem:[%s4193 + $0x40] sm:$0xf]
        %v4211 = vld [vmem:[%s4193 + $0x44] sm:$0xf]
        %v4212 = vld [vmem:[%s4193 + $0x48] sm:$0xf]
        %v4213 = vld [vmem:[%s4193 + $0x4c] sm:$0xf]
        %v4214 = vld [vmem:[%s4193 + $0x50] sm:$0xf]
        %v4215 = vld [vmem:[%s4193 + $0x54] sm:$0xf]
        %v4216 = vld [vmem:[%s4193 + $0x58] sm:$0xf]
        %v4217 = vld [vmem:[%s4193 + $0x5c] sm:$0xf]
        %v4218 = vld [vmem:[%s4193 + $0x60] sm:$0xf]
        %v4219 = vld [vmem:[%s4193 + $0x64] sm:$0xf]
        %v4220 = vld [vmem:[%s4193 + $0x68] sm:$0xf]
        %v4221 = vld [vmem:[%s4193 + $0x6c] sm:$0xf]
        %v4222 = vld [vmem:[%s4193 + $0x70] sm:$0xf]
        %v4223 = vld [vmem:[%s4193 + $0x74] sm:$0xf]
        %v4224 = vld [vmem:[%s4193 + $0x78] sm:$0xf]
        %v4225 = vld [vmem:[%s4193 + $0x7c] sm:$0xf]
        %s4226 = scalar_lea.vmem %s13, 1
        %v4227 = vld [vmem:[%s4226] sm:$0x1]
        %v4229 = vlaneseq
        %v4230 = vshrl.u32 %v4229, 7
        %v4231 = vsub.s32 0, %v4230
        %v4232 = vrot.slane %v4227, %v4231
        %v4266 = vunpack.c.l.b16 %v4194
        %v4267 = vunpack.c.l.b16 %v4195
        %v4268 = vunpack.c.l.b16 %v4196
        %v4269 = vunpack.c.l.b16 %v4197
        %v4270 = vunpack.c.l.b16 %v4198
        %v4271 = vunpack.c.l.b16 %v4199
        %v4272 = vunpack.c.l.b16 %v4200
        %v4273 = vunpack.c.l.b16 %v4201
        %v4274 = vunpack.c.l.b16 %v4202
        %v4275 = vunpack.c.l.b16 %v4203
        %v4276 = vunpack.c.l.b16 %v4204
        %v4277 = vunpack.c.l.b16 %v4205
        %v4278 = vunpack.c.l.b16 %v4206
        %v4279 = vunpack.c.l.b16 %v4207
        %v4280 = vunpack.c.l.b16 %v4208
        %v4281 = vunpack.c.l.b16 %v4209
        %v4282 = vunpack.c.l.b16 %v4210
        %v4283 = vunpack.c.l.b16 %v4211
        %v4284 = vunpack.c.l.b16 %v4212
        %v4285 = vunpack.c.l.b16 %v4213
        %v4286 = vunpack.c.l.b16 %v4214
        %v4287 = vunpack.c.l.b16 %v4215
        %v4288 = vunpack.c.l.b16 %v4216
        %v4289 = vunpack.c.l.b16 %v4217
        %v4290 = vunpack.c.l.b16 %v4218
        %v4291 = vunpack.c.l.b16 %v4219
        %v4292 = vunpack.c.l.b16 %v4220
        %v4293 = vunpack.c.l.b16 %v4221
        %v4294 = vunpack.c.l.b16 %v4222
        %v4295 = vunpack.c.l.b16 %v4223
        %v4296 = vunpack.c.l.b16 %v4224
        %v4297 = vunpack.c.l.b16 %v4225
        %v4298 = vpack.c.b16 %v4267, %v4266
        %v4299 = vpack.c.b16 %v4269, %v4268
        %v4300 = vpack.c.b16 %v4271, %v4270
        %v4301 = vpack.c.b16 %v4273, %v4272
        %v4302 = vpack.c.b16 %v4275, %v4274
        %v4303 = vpack.c.b16 %v4277, %v4276
        %v4304 = vpack.c.b16 %v4279, %v4278
        %v4305 = vpack.c.b16 %v4281, %v4280
        %v4306 = vpack.c.b16 %v4283, %v4282
        %v4307 = vpack.c.b16 %v4285, %v4284
        %v4308 = vpack.c.b16 %v4287, %v4286
        %v4309 = vpack.c.b16 %v4289, %v4288
        %v4310 = vpack.c.b16 %v4291, %v4290
        %v4311 = vpack.c.b16 %v4293, %v4292
        %v4312 = vpack.c.b16 %v4295, %v4294
        %v4313 = vpack.c.b16 %v4297, %v4296
        %4330 = vmatprep.subr.bf16.mxu0 0
        %4331 = vmatpush1.bf16.msra.mxu0 %v4298
        %4332 = vmatprep.subr.bf16.mxu0 0
        %4333 = vmatpush1.bf16.msra.mxu0 %v4299
        %4334 = vmatprep.subr.bf16.mxu0 0
        %4335 = vmatpush1.bf16.msra.mxu0 %v4300
        %4336 = vmatprep.subr.bf16.mxu0 0
        %4337 = vmatpush1.bf16.msra.mxu0 %v4301
        %4338 = vmatprep.subr.bf16.mxu0 0
        %4339 = vmatpush1.bf16.msra.mxu0 %v4302
        %4340 = vmatprep.subr.bf16.mxu0 0
        %4341 = vmatpush1.bf16.msra.mxu0 %v4303
        %4342 = vmatprep.subr.bf16.mxu0 0
        %4343 = vmatpush1.bf16.msra.mxu0 %v4304
        %4344 = vmatprep.subr.bf16.mxu0 0
        %4345 = vmatpush1.bf16.msra.mxu0 %v4305
        %4346 = vmatprep.subr.bf16.mxu0 0
        %4347 = vmatpush1.bf16.msra.mxu0 %v4306
        %4348 = vmatprep.subr.bf16.mxu0 0
        %4349 = vmatpush1.bf16.msra.mxu0 %v4307
        %4350 = vmatprep.subr.bf16.mxu0 0
        %4351 = vmatpush1.bf16.msra.mxu0 %v4308
        %4352 = vmatprep.subr.bf16.mxu0 0
        %4353 = vmatpush1.bf16.msra.mxu0 %v4309
        %4354 = vmatprep.subr.bf16.mxu0 0
        %4355 = vmatpush1.bf16.msra.mxu0 %v4310
        %4356 = vmatprep.subr.bf16.mxu0 0
        %4357 = vmatpush1.bf16.msra.mxu0 %v4311
        %4358 = vmatprep.subr.bf16.mxu0 0
        %4359 = vmatpush1.bf16.msra.mxu0 %v4312
        %4360 = vmatprep.subr.bf16.mxu0 0
        %4361 = vmatpush1.bf16.msra.mxu0 %v4313
        %4362 = vmatprep.mubr.bf16.mxu0 %v4192
        %4363 = vmatmul.mubr.bf16.gmra.mrb[0].mxu0 %v4191
        %v4364 = vpop.f32.mrb[0].mxu0
        %v4365 = vadd.f32 %v4232, %v4364
        %v4366 = vpop.f32.mrb[0].mxu0
        %v4367 = vpop.f32.mrb[0].mxu0
        %v4368 = vpop.f32.mrb[0].mxu0
        %4369 = vdwg.mxu0
        %v4370 = vadd.f32 %v4028, %v4365
        %s4371 = scalar_lea.vmem %s16, 1
        %v4372 = vld [vmem:[%s4371] sm:$0x1]
        %s4373 = scalar_lea.vmem %s17, 1
        %v4374 = vld [vmem:[%s4373] sm:$0x1]
        %v4375 = vsel %vm756, %v4370, 0.0
        %4376 = vadd.xlane.f32.xlu0 %v4375
        %v4377 = vpop.xlane.xlu0 %4376
        %v4378 = vmul.f32 %v4377, %v2373
        %v4379 = vsub.f32 %v4370, %v4378
        %v4380 = vmul.f32 %v4379, %v4379
        %v4381 = vsel %vm756, %v4380, 0.0
        %4382 = vadd.xlane.f32.xlu0 %v4381
        %v4383 = vpop.xlane.xlu0 %4382
        %v4384 = vmul.f32 %v4383, %v2373
        %v4385 = vadd.f32 %v4384, 1e-05
        %v4386 = vrsqrt.pop %v4385
        %v4387 = vmul.f32 %v4379, %v4386
        %v4389 = vlaneseq
        %v4390 = vshrl.u32 %v4389, 7
        %v4391 = vsub.s32 0, %v4390
        %v4392 = vrot.slane %v4372, %v4391
        %v4394 = vmul.f32 %v4387, %v4392
        %v4396 = vlaneseq
        %v4397 = vshrl.u32 %v4396, 7
        %v4398 = vsub.s32 0, %v4397
        %v4399 = vrot.slane %v4374, %v4398
        %v4401 = vadd.f32 %v4394, %v4399
        %4402 = vst [vmem:[%s579] sm:$0xf] %v4401
        %s4403 = sand.u32 %s428, 1
        %s4404 = scalar_lea.sflag [#allocation3], %s4403
        %s4405 = sand.u32 %s428, 1
        %s4406 = smul.addr %s4405, 4
        %s4407 = scalar_lea.vmem [#allocation2], %s4406
        // Predicated region
        $region93: #{encoder_transformer_forward.1} parent=91 // pred_check
          %p4408 = pneg %p438
        $region94: #{encoder_transformer_forward.1} parent=91 // pred_check_branch
          %4410 = sbr.rel (%p4408) target = $region96
        $region95: #{encoder_transformer_forward.1} parent=91 // pred_region
          %s4412 = ssub.s32 64, 64
          %4413 = vsyncadd %s4404, %s4412
          %s4414 = smul.addr %s32, 64
          %s4415 = scalar_lea.hbm %s18, %s4414
          %s4417 = sshll.u32 %s4407, 4
          %s4418 = int_to_ptr.vmem [resolvable:$true] %s4417
          %4420 = dma.vmem_to_hbm [thread:$0]  %s4418, 64, %s4415, %s4404
        $region96: #{encoder_transformer_forward.1} parent=91 // pred_fallthru
          _
      $region92: #{encoder_transformer_forward.1} parent=5 // pred_fallthru
        _
      %p4421 = scmp.le.s32.totalorder 2, %s27
      // Predicated region
      $region97: #{encoder_transformer_forward.1} parent=5 // pred_check
        %p4422 = pneg %p4421
      $region98: #{encoder_transformer_forward.1} parent=5 // pred_check_branch
        %4424 = sbr.rel (%p4422) target = $region100
      $region99: #{encoder_transformer_forward.1} parent=5 // pred_region
        %s4425 = ssub.s32 %s27, 2
        // Predicated region
        $region101: #{encoder_transformer_forward.1} parent=99 // pred_check
          %p4426 = pneg %p444
        $region102: #{encoder_transformer_forward.1} parent=99 // pred_check_branch
          %4428 = sbr.rel (%p4426) target = $region104
        $region103: #{encoder_transformer_forward.1} parent=99 // pred_region
          %s4429 = sand.u32 %s429, 1
          %s4430 = scalar_lea.sflag [#allocation3], %s4429
          %s4431 = sand.u32 %s429, 1
          %s4432 = smul.addr %s4431, 4
          %s4433 = scalar_lea.vmem [#allocation2], %s4432
          %4434 = dma.done %s4430, 64
        $region104: #{encoder_transformer_forward.1} parent=99 // pred_fallthru
          _
      $region100: #{encoder_transformer_forward.1} parent=5 // pred_fallthru
        _
    $region6: #{encoder_transformer_forward.1} parent=1 // loop_footer
      %s31 = sadd.s32 1, %s27
    $region7: #{encoder_transformer_forward.1} parent=1 // loop_footer_branch
      %26 = sbr.rel target = $region3
    $region8: #{encoder_transformer_forward.1} parent=1 // loop_exit
      _
    %4435 = vsyncpa [#allocation3], 1
    %s4436 = scalar_lea.sflag [#allocation3], 1
    %4437 = vsyncpa %s4436, 1

</llo_original>
